<compile_context>
chip_gen: v6e
topology: v6e:2x2x1
jax: 0.10.0
libtpu: 0.0.40
codegen_flags: <defaults>
</compile_context>

<pallas_src>
import functools

import jax
import jax.numpy as jnp
from jax.experimental import pallas as pl
from jax.experimental.pallas import tpu as pltpu


def _pad_to(n, m=128):
    return ((n + m - 1) // m) * m


# ----------------------------------------------------------------------------- kernel
def _rvae_kernel(
    x_ref, eps_ref,
    w_enc_ref, b_enc_ref,
    w_lat_ref, b_lat_ref,
    w3_ref, b3_ref,
    w_dec_ref, b_dec_ref,
    out_ref, kl_ref,
    *, latent_real,
):
    S, TB, Ip = x_ref.shape
    Lp = eps_ref.shape[1]
    Hp = w_lat_ref.shape[0]
    Ip_dec = w_dec_ref.shape[1] // 4        # decoder hidden (== padded input_size)
    f32 = jnp.float32

    # Hoist weight/bias loads out of the unrolled time loops.
    w_enc = w_enc_ref[...]
    b_enc = b_enc_ref[...]
    w_dec = w_dec_ref[...]
    b_dec = b_dec_ref[...]

    def lstm_step(x_t, h, c, w_cat, b_cat, gp):
        # One fused MXU dispatch per step: [x_t | h] @ [[W_ih^T],[W_hh^T]]
        xh = jnp.concatenate([x_t, h], axis=-1)
        gates = jnp.dot(xh, w_cat, preferred_element_type=f32) + b_cat
        i_g = jax.nn.sigmoid(gates[:, 0 * gp:1 * gp])
        f_g = jax.nn.sigmoid(gates[:, 1 * gp:2 * gp])
        g_g = jnp.tanh(gates[:, 2 * gp:3 * gp])
        o_g = jax.nn.sigmoid(gates[:, 3 * gp:4 * gp])
        c_new = f_g * c + i_g * g_g
        h_new = o_g * jnp.tanh(c_new)
        return h_new, c_new

    # ---- encoder LSTM (input_size -> hidden_size), zero initial state ----
    h = jnp.zeros((TB, Hp), f32)
    c = jnp.zeros((TB, Hp), f32)
    for t in range(S):                      # static, unrolled (S is small)
        h, c = lstm_step(x_ref[t], h, c, w_enc, b_enc, Hp)

    # ---- fused latent heads: [mu | sigma] in one matmul ----
    lat = jnp.dot(h, w_lat_ref[...], preferred_element_type=f32) + b_lat_ref[...]
    mu = lat[:, :Lp]
    sigma = lat[:, Lp:2 * Lp]

    # ---- reparameterize ----
    z = mu + sigma * eps_ref[...]

    # ---- masked KL terms (padded latent lanes excluded); wrapper does 0.5*sum ----
    lane = jax.lax.broadcasted_iota(jnp.int32, (TB, Lp), 1)
    valid = lane < latent_real
    sig2 = sigma * sigma
    safe_sig2 = jnp.where(valid, sig2, 1.0)
    kl_ref[...] = jnp.where(valid, sig2 + mu * mu - jnp.log(safe_sig2) - 1.0, 0.0)

    # ---- decode: fc3 + relu, decoder LSTM (hidden_size -> input_size), sigmoid ----
    h3 = jnp.dot(z, w3_ref[...], preferred_element_type=f32) + b3_ref[...]
    h3 = jnp.maximum(h3, 0.0)               # [TB, S*Hp], timestep t in lanes [t*Hp, t*Hp+Hp)

    hd = jnp.zeros((TB, Ip_dec), f32)
    cd = jnp.zeros((TB, Ip_dec), f32)
    for t in range(S):
        x_t = h3[:, t * Hp:(t + 1) * Hp]
        hd, cd = lstm_step(x_t, hd, cd, w_dec, b_dec, Ip_dec)
        out_ref[t] = jax.nn.sigmoid(hd)


# ----------------------------------------------------------------------------- wrapper
@functools.partial(jax.jit, static_argnames=("batch_tile",))
def recurrent_vae_forward(x, eps, kp, batch_tile=None):
    """x: [B, S, input_size] f32, eps: [B, latent_size] f32, kp: packed padded params."""
    B, S, I = x.shape
    L = eps.shape[1]
    Ip, Lp = _pad_to(I), _pad_to(L)
    Hp = kp["w_lat"].shape[0]
    assert kp["w3"].shape[1] == S * Hp

    if batch_tile is None:
        batch_tile = B
    assert B % batch_tile == 0
    nb = B // batch_tile

    # Lane-dense, zero-padded, time-major input; padded eps lanes are harmless (sigma=0).
    x_tm = jnp.zeros((S, B, Ip), jnp.float32).at[:, :, :I].set(jnp.transpose(x, (1, 0, 2)))
    eps_p = jnp.zeros((B, Lp), jnp.float32).at[:, :L].set(eps)

    kernel = functools.partial(_rvae_kernel, latent_real=L)
    const = lambda i: (0, 0)                 # weights/biases: VMEM-resident across the grid

    out_tm, kl_terms = pl.pallas_call(
        kernel,
        grid=(nb,),
        in_specs=[
            pl.BlockSpec((S, batch_tile, Ip), lambda i: (0, i, 0)),     # x (time-major)
            pl.BlockSpec((batch_tile, Lp), lambda i: (i, 0)),           # eps
            pl.BlockSpec(kp["w_enc"].shape, const),
            pl.BlockSpec(kp["b_enc"].shape, const),
            pl.BlockSpec(kp["w_lat"].shape, const),
            pl.BlockSpec(kp["b_lat"].shape, const),
            pl.BlockSpec(kp["w3"].shape, const),
            pl.BlockSpec(kp["b3"].shape, const),
            pl.BlockSpec(kp["w_dec"].shape, const),
            pl.BlockSpec(kp["b_dec"].shape, const),
        ],
        out_specs=(
            pl.BlockSpec((S, batch_tile, Ip), lambda i: (0, i, 0)),     # reconstruction
            pl.BlockSpec((batch_tile, Lp), lambda i: (i, 0)),           # KL partial terms
        ),
        out_shape=(
            jax.ShapeDtypeStruct((S, B, Ip), jnp.float32),
            jax.ShapeDtypeStruct((B, Lp), jnp.float32),
        ),
        compiler_params=pltpu.CompilerParams(dimension_semantics=("parallel",)),
    )(x_tm, eps_p, kp["w_enc"], kp["b_enc"], kp["w_lat"], kp["b_lat"],
      kp["w3"], kp["b3"], kp["w_dec"], kp["b_dec"])

    out = jnp.transpose(out_tm, (1, 0, 2))[:, :, :I]
    kl = 0.5 * jnp.sum(kl_terms)
    return out, kl


# ----------------------------------------------------------------------------- params
def init_params(key, input_size, latent_size, hidden_size, seq_len):
    """Raw PyTorch-convention parameters (weights [out, in])."""
    I, H, L, S = input_size, hidden_size, latent_size, seq_len
    ks = jax.random.split(key, 14)

    def uni(k, shape, fan):
        b = 1.0 / jnp.sqrt(fan)
        return jax.random.uniform(k, shape, jnp.float32, -b, b)

    return dict(
        # encoder LSTM (input I -> hidden H); gate order (i, f, g, o)
        w_ih_e=uni(ks[0], (4 * H, I), H), w_hh_e=uni(ks[1], (4 * H, H), H),
        b_ih_e=uni(ks[2], (4 * H,), H), b_hh_e=uni(ks[3], (4 * H,), H),
        # fc21 / fc22
        w21=uni(ks[4], (L, H), H), b21=uni(ks[5], (L,), H),
        w22=uni(ks[6], (L, H), H), b22=uni(ks[7], (L,), H),
        # fc3: Linear(L, H*S)
        w3=uni(ks[8], (H * S, L), L), b3=uni(ks[9], (H * S,), L),
        # decoder LSTM (input H -> hidden I)
        w_ih_d=uni(ks[10], (4 * I, H), I), w_hh_d=uni(ks[11], (4 * I, I), I),
        b_ih_d=uni(ks[12], (4 * I,), I), b_hh_d=uni(ks[13], (4 * I,), I),
    )


def pack_params(p, input_size, latent_size, hidden_size, seq_len):
    """Build lane-padded, pre-transposed, fused kernel parameters."""
    I, H, L, S = input_size, hidden_size, latent_size, seq_len
    Ip, Hp, Lp = _pad_to(I), _pad_to(H), _pad_to(L)

    def gate_w(w, gr, gp, ir, ip):          # w: [4*gr, ir] -> [ip, 4*gp] (transposed, padded)
        out = jnp.zeros((ip, 4 * gp), jnp.float32)
        for g in range(4):
            out = out.at[:ir, g * gp:g * gp + gr].set(w[g * gr:(g + 1) * gr, :].T)
        return out

    def gate_b(b, gr, gp):                  # b: [4*gr] -> [1, 4*gp]
        out = jnp.zeros((1, 4 * gp), jnp.float32)
        for g in range(4):
            out = out.at[0, g * gp:g * gp + gr].set(b[g * gr:(g + 1) * gr])
        return out

    # Encoder LSTM: fused [x | h] weight, gate blocks of width Hp.
    w_enc = jnp.concatenate(
        [gate_w(p["w_ih_e"], H, Hp, I, Ip), gate_w(p["w_hh_e"], H, Hp, H, Hp)], axis=0)
    b_enc = gate_b(p["b_ih_e"] + p["b_hh_e"], H, Hp)

    # Fused latent heads: mu block then sigma block, each Lp lanes wide.
    w_lat = jnp.zeros((Hp, 2 * Lp), jnp.float32)
    w_lat = w_lat.at[:H, :L].set(p["w21"].T).at[:H, Lp:Lp + L].set(p["w22"].T)
    b_lat = jnp.zeros((1, 2 * Lp), jnp.float32)
    b_lat = b_lat.at[0, :L].set(p["b21"]).at[0, Lp:Lp + L].set(p["b22"])

    # fc3: timestep t occupies lanes [t*Hp, t*Hp+H).
    w3 = jnp.zeros((Lp, S * Hp), jnp.float32)
    b3 = jnp.zeros((1, S * Hp), jnp.float32)
    w3t = p["w3"].T                          # [L, S*H]
    for t in range(S):
        w3 = w3.at[:L, t * Hp:t * Hp + H].set(w3t[:, t * H:(t + 1) * H])
        b3 = b3.at[0, t * Hp:t * Hp + H].set(p["b3"][t * H:(t + 1) * H])

    # Decoder LSTM: input H (padded Hp), hidden I (padded Ip); gate blocks of width Ip.
    w_dec = jnp.concatenate(
        [gate_w(p["w_ih_d"], I, Ip, H, Hp), gate_w(p["w_hh_d"], I, Ip, I, Ip)], axis=0)
    b_dec = gate_b(p["b_ih_d"] + p["b_hh_d"], I, Ip)

    return dict(w_enc=w_enc, b_enc=b_enc, w_lat=w_lat, b_lat=b_lat,
                w3=w3, b3=b3, w_dec=w_dec, b_dec=b_dec)


# ----------------------------------------------------------------------------- reference
def recurrent_vae_forward_ref(x, eps, p):
    """Pure-JAX (unpadded) reference of the intended RecurrentVAE forward."""
    B, S, I = x.shape
    H = p["w_ih_e"].shape[0] // 4

    def lstm(xs, w_ih, w_hh, b_ih, b_hh, hid):
        h = jnp.zeros((B, hid), jnp.float32)
        c = jnp.zeros((B, hid), jnp.float32)
        outs = []
        for t in range(xs.shape[1]):
            g = xs[:, t, :] @ w_ih.T + b_ih + h @ w_hh.T + b_hh
            i = jax.nn.sigmoid(g[:, :hid]); f = jax.nn.sigmoid(g[:, hid:2 * hid])
            gg = jnp.tanh(g[:, 2 * hid:3 * hid]); o = jax.nn.sigmoid(g[:, 3 * hid:])
            c = f * c + i * gg
            h = o * jnp.tanh(c)
            outs.append(h)
        return jnp.stack(outs, axis=1)

    enc = lstm(x, p["w_ih_e"], p["w_hh_e"], p["b_ih_e"], p["b_hh_e"], H)
    feat = enc[:, -1, :]
    mu = feat @ p["w21"].T + p["b21"]
    sigma = feat @ p["w22"].T + p["b22"]
    z = mu + sigma * eps
    kl = 0.5 * jnp.sum(sigma ** 2 + mu ** 2 - jnp.log(sigma ** 2) - 1.0)
    h3 = jnp.maximum(z @ p["w3"].T + p["b3"], 0.0).reshape(B, S, H)
    dec = lstm(h3, p["w_ih_d"], p["w_hh_d"], p["b_ih_d"], p["b_hh_d"], I)
    return jax.nn.sigmoid(dec), kl


# ----------------------------------------------------------------------------- demo
if __name__ == "__main__":
    input_size, latent_size, hidden_size, seq_len = 16, 8, 32, 8
    batch = 16

    key = jax.random.PRNGKey(0)
    k_x, k_eps, k_p = jax.random.split(key, 3)

    x = jax.random.normal(k_x, (batch, seq_len, input_size), jnp.float32)
    # eps corresponds to self.N.sample(...) in the PyTorch module (sampled per forward).
    eps = jax.random.normal(k_eps, (batch, latent_size), jnp.float32)

    raw = init_params(k_p, input_size, latent_size, hidden_size, seq_len)
    kp = pack_params(raw, input_size, latent_size, hidden_size, seq_len)

    out, kl = recurrent_vae_forward(x, eps, kp, batch_tile=8)
    out = jax.block_until_ready(out)
    kl = jax.block_until_ready(kl)

    out_ref, kl_ref = recurrent_vae_forward_ref(x, eps, raw)
    assert out.shape == out_ref.shape, "shape mismatch"
    assert jnp.allclose(out, out_ref, atol=1e-4, rtol=1e-4), "recon mismatch"
    assert jnp.allclose(kl, kl_ref, atol=1e-2, rtol=1e-3), "kl mismatch"

    print("KERNEL_OK")
</pallas_src>

<mosaic_0001>
module attributes {stable_mosaic.version = 11 : i64} {
  func.func @_rvae_kernel(%arg0: i32, %arg1: memref<8x8x128xf32, #tpu.memory_space<vmem>>, %arg2: memref<8x128xf32, #tpu.memory_space<vmem>>, %arg3: memref<256x512xf32, #tpu.memory_space<vmem>>, %arg4: memref<1x512xf32, #tpu.memory_space<vmem>>, %arg5: memref<128x256xf32, #tpu.memory_space<vmem>>, %arg6: memref<1x256xf32, #tpu.memory_space<vmem>>, %arg7: memref<128x1024xf32, #tpu.memory_space<vmem>>, %arg8: memref<1x1024xf32, #tpu.memory_space<vmem>>, %arg9: memref<256x512xf32, #tpu.memory_space<vmem>>, %arg10: memref<1x512xf32, #tpu.memory_space<vmem>>, %arg11: memref<8x8x128xf32, #tpu.memory_space<vmem>>, %arg12: memref<8x128xf32, #tpu.memory_space<vmem>>) attributes {dimension_semantics = [#tpu.dimension_semantics<parallel>], iteration_bounds = array<i64: 2>, scalar_prefetch = 0 : i64, scratch_operands = 0 : i64, tpu.core_type = #tpu.core_type<tc>, window_params = [{transform_indices = @transform_0, window_bounds = array<i64: 8, 8, 128>}, {transform_indices = @transform_1, window_bounds = array<i64: 8, 128>}, {pipeline_mode = #tpu.pipeline_mode<synchronous>, transform_indices = @transform_2, window_bounds = array<i64: 256, 512>}, {pipeline_mode = #tpu.pipeline_mode<synchronous>, transform_indices = @transform_3, window_bounds = array<i64: 1, 512>}, {pipeline_mode = #tpu.pipeline_mode<synchronous>, transform_indices = @transform_4, window_bounds = array<i64: 128, 256>}, {pipeline_mode = #tpu.pipeline_mode<synchronous>, transform_indices = @transform_5, window_bounds = array<i64: 1, 256>}, {pipeline_mode = #tpu.pipeline_mode<synchronous>, transform_indices = @transform_6, window_bounds = array<i64: 128, 1024>}, {pipeline_mode = #tpu.pipeline_mode<synchronous>, transform_indices = @transform_7, window_bounds = array<i64: 1, 1024>}, {pipeline_mode = #tpu.pipeline_mode<synchronous>, transform_indices = @transform_8, window_bounds = array<i64: 256, 512>}, {pipeline_mode = #tpu.pipeline_mode<synchronous>, transform_indices = @transform_9, window_bounds = array<i64: 1, 512>}, {transform_indices = @transform_10, window_bounds = array<i64: 8, 8, 128>}, {transform_indices = @transform_11, window_bounds = array<i64: 8, 128>}]} {
    %c0 = arith.constant 0 : index
    %c0_0 = arith.constant 0 : index
    %0 = vector.load %arg3[%c0, %c0_0] : memref<256x512xf32, #tpu.memory_space<vmem>>, vector<256x512xf32>
    %c0_1 = arith.constant 0 : index
    %c0_2 = arith.constant 0 : index
    %1 = vector.load %arg4[%c0_1, %c0_2] : memref<1x512xf32, #tpu.memory_space<vmem>>, vector<1x512xf32>
    %c0_3 = arith.constant 0 : index
    %c0_4 = arith.constant 0 : index
    %2 = vector.load %arg9[%c0_3, %c0_4] : memref<256x512xf32, #tpu.memory_space<vmem>>, vector<256x512xf32>
    %c0_5 = arith.constant 0 : index
    %c0_6 = arith.constant 0 : index
    %3 = vector.load %arg10[%c0_5, %c0_6] : memref<1x512xf32, #tpu.memory_space<vmem>>, vector<1x512xf32>
    %cst = arith.constant 0.000000e+00 : f32
    %4 = vector.broadcast %cst : f32 to vector<8x128xf32>
    %cst_7 = arith.constant 0.000000e+00 : f32
    %5 = vector.broadcast %cst_7 : f32 to vector<8x128xf32>
    %c0_8 = arith.constant 0 : index
    %c0_9 = arith.constant 0 : index
    %c0_10 = arith.constant 0 : index
    %6 = vector.load %arg1[%c0_8, %c0_9, %c0_10] : memref<8x8x128xf32, #tpu.memory_space<vmem>>, vector<1x8x128xf32>
    %7 = vector.shape_cast %6 : vector<1x8x128xf32> to vector<8x128xf32>
    %8 = tpu.concatenate %7, %4 in 1 : vector<8x128xf32>, vector<8x128xf32> -> vector<8x256xf32>
    %cst_11 = arith.constant dense<0.000000e+00> : vector<8x512xf32>
    %9 = tpu.matmul %8, %0, %cst_11 {dimension_numbers = #tpu.dot_dimension_numbers<[1], [0], [0], [1], [0, 0, 1, 1], [], []>} : vector<8x256xf32>, vector<256x512xf32>, vector<8x512xf32> -> vector<8x512xf32>
    %10 = vector.broadcast %1 : vector<1x512xf32> to vector<8x512xf32>
    %11 = arith.addf %9, %10 : vector<8x512xf32>
    %12 = vector.extract_strided_slice %11 {offsets = [0, 0], sizes = [8, 128], strides = [1, 1]} : vector<8x512xf32> to vector<8x128xf32>
    %13 = arith.negf %12 : vector<8x128xf32>
    %14 = math.exp %13 : vector<8x128xf32>
    %cst_12 = arith.constant 1.000000e+00 : f32
    %15 = vector.broadcast %cst_12 : f32 to vector<8x128xf32>
    %16 = arith.addf %15, %14 : vector<8x128xf32>
    %17 = arith.divf %15, %16 : vector<8x128xf32>
    %18 = vector.extract_strided_slice %11 {offsets = [0, 128], sizes = [8, 128], strides = [1, 1]} : vector<8x512xf32> to vector<8x128xf32>
    %19 = arith.negf %18 : vector<8x128xf32>
    %20 = math.exp %19 : vector<8x128xf32>
    %cst_13 = arith.constant 1.000000e+00 : f32
    %21 = vector.broadcast %cst_13 : f32 to vector<8x128xf32>
    %22 = arith.addf %21, %20 : vector<8x128xf32>
    %23 = arith.divf %21, %22 : vector<8x128xf32>
    %24 = vector.extract_strided_slice %11 {offsets = [0, 256], sizes = [8, 128], strides = [1, 1]} : vector<8x512xf32> to vector<8x128xf32>
    %25 = math.tanh %24 : vector<8x128xf32>
    %26 = vector.extract_strided_slice %11 {offsets = [0, 384], sizes = [8, 128], strides = [1, 1]} : vector<8x512xf32> to vector<8x128xf32>
    %27 = arith.negf %26 : vector<8x128xf32>
    %28 = math.exp %27 : vector<8x128xf32>
    %cst_14 = arith.constant 1.000000e+00 : f32
    %29 = vector.broadcast %cst_14 : f32 to vector<8x128xf32>
    %30 = arith.addf %29, %28 : vector<8x128xf32>
    %31 = arith.divf %29, %30 : vector<8x128xf32>
    %32 = arith.mulf %23, %5 : vector<8x128xf32>
    %33 = arith.mulf %17, %25 : vector<8x128xf32>
    %34 = arith.addf %32, %33 : vector<8x128xf32>
    %35 = math.tanh %34 : vector<8x128xf32>
    %36 = arith.mulf %31, %35 : vector<8x128xf32>
    %c1 = arith.constant 1 : index
    %c0_15 = arith.constant 0 : index
    %c0_16 = arith.constant 0 : index
    %37 = vector.load %arg1[%c1, %c0_15, %c0_16] : memref<8x8x128xf32, #tpu.memory_space<vmem>>, vector<1x8x128xf32>
    %38 = vector.shape_cast %37 : vector<1x8x128xf32> to vector<8x128xf32>
    %39 = tpu.concatenate %38, %36 in 1 : vector<8x128xf32>, vector<8x128xf32> -> vector<8x256xf32>
    %cst_17 = arith.constant dense<0.000000e+00> : vector<8x512xf32>
    %40 = tpu.matmul %39, %0, %cst_17 {dimension_numbers = #tpu.dot_dimension_numbers<[1], [0], [0], [1], [0, 0, 1, 1], [], []>} : vector<8x256xf32>, vector<256x512xf32>, vector<8x512xf32> -> vector<8x512xf32>
    %41 = vector.broadcast %1 : vector<1x512xf32> to vector<8x512xf32>
    %42 = arith.addf %40, %41 : vector<8x512xf32>
    %43 = vector.extract_strided_slice %42 {offsets = [0, 0], sizes = [8, 128], strides = [1, 1]} : vector<8x512xf32> to vector<8x128xf32>
    %44 = arith.negf %43 : vector<8x128xf32>
    %45 = math.exp %44 : vector<8x128xf32>
    %cst_18 = arith.constant 1.000000e+00 : f32
    %46 = vector.broadcast %cst_18 : f32 to vector<8x128xf32>
    %47 = arith.addf %46, %45 : vector<8x128xf32>
    %48 = arith.divf %46, %47 : vector<8x128xf32>
    %49 = vector.extract_strided_slice %42 {offsets = [0, 128], sizes = [8, 128], strides = [1, 1]} : vector<8x512xf32> to vector<8x128xf32>
    %50 = arith.negf %49 : vector<8x128xf32>
    %51 = math.exp %50 : vector<8x128xf32>
    %cst_19 = arith.constant 1.000000e+00 : f32
    %52 = vector.broadcast %cst_19 : f32 to vector<8x128xf32>
    %53 = arith.addf %52, %51 : vector<8x128xf32>
    %54 = arith.divf %52, %53 : vector<8x128xf32>
    %55 = vector.extract_strided_slice %42 {offsets = [0, 256], sizes = [8, 128], strides = [1, 1]} : vector<8x512xf32> to vector<8x128xf32>
    %56 = math.tanh %55 : vector<8x128xf32>
    %57 = vector.extract_strided_slice %42 {offsets = [0, 384], sizes = [8, 128], strides = [1, 1]} : vector<8x512xf32> to vector<8x128xf32>
    %58 = arith.negf %57 : vector<8x128xf32>
    %59 = math.exp %58 : vector<8x128xf32>
    %cst_20 = arith.constant 1.000000e+00 : f32
    %60 = vector.broadcast %cst_20 : f32 to vector<8x128xf32>
    %61 = arith.addf %60, %59 : vector<8x128xf32>
    %62 = arith.divf %60, %61 : vector<8x128xf32>
    %63 = arith.mulf %54, %34 : vector<8x128xf32>
    %64 = arith.mulf %48, %56 : vector<8x128xf32>
    %65 = arith.addf %63, %64 : vector<8x128xf32>
    %66 = math.tanh %65 : vector<8x128xf32>
    %67 = arith.mulf %62, %66 : vector<8x128xf32>
    %c2 = arith.constant 2 : index
    %c0_21 = arith.constant 0 : index
    %c0_22 = arith.constant 0 : index
    %68 = vector.load %arg1[%c2, %c0_21, %c0_22] : memref<8x8x128xf32, #tpu.memory_space<vmem>>, vector<1x8x128xf32>
    %69 = vector.shape_cast %68 : vector<1x8x128xf32> to vector<8x128xf32>
    %70 = tpu.concatenate %69, %67 in 1 : vector<8x128xf32>, vector<8x128xf32> -> vector<8x256xf32>
    %cst_23 = arith.constant dense<0.000000e+00> : vector<8x512xf32>
    %71 = tpu.matmul %70, %0, %cst_23 {dimension_numbers = #tpu.dot_dimension_numbers<[1], [0], [0], [1], [0, 0, 1, 1], [], []>} : vector<8x256xf32>, vector<256x512xf32>, vector<8x512xf32> -> vector<8x512xf32>
    %72 = vector.broadcast %1 : vector<1x512xf32> to vector<8x512xf32>
    %73 = arith.addf %71, %72 : vector<8x512xf32>
    %74 = vector.extract_strided_slice %73 {offsets = [0, 0], sizes = [8, 128], strides = [1, 1]} : vector<8x512xf32> to vector<8x128xf32>
    %75 = arith.negf %74 : vector<8x128xf32>
    %76 = math.exp %75 : vector<8x128xf32>
    %cst_24 = arith.constant 1.000000e+00 : f32
    %77 = vector.broadcast %cst_24 : f32 to vector<8x128xf32>
    %78 = arith.addf %77, %76 : vector<8x128xf32>
    %79 = arith.divf %77, %78 : vector<8x128xf32>
    %80 = vector.extract_strided_slice %73 {offsets = [0, 128], sizes = [8, 128], strides = [1, 1]} : vector<8x512xf32> to vector<8x128xf32>
    %81 = arith.negf %80 : vector<8x128xf32>
    %82 = math.exp %81 : vector<8x128xf32>
    %cst_25 = arith.constant 1.000000e+00 : f32
    %83 = vector.broadcast %cst_25 : f32 to vector<8x128xf32>
    %84 = arith.addf %83, %82 : vector<8x128xf32>
    %85 = arith.divf %83, %84 : vector<8x128xf32>
    %86 = vector.extract_strided_slice %73 {offsets = [0, 256], sizes = [8, 128], strides = [1, 1]} : vector<8x512xf32> to vector<8x128xf32>
    %87 = math.tanh %86 : vector<8x128xf32>
    %88 = vector.extract_strided_slice %73 {offsets = [0, 384], sizes = [8, 128], strides = [1, 1]} : vector<8x512xf32> to vector<8x128xf32>
    %89 = arith.negf %88 : vector<8x128xf32>
    %90 = math.exp %89 : vector<8x128xf32>
    %cst_26 = arith.constant 1.000000e+00 : f32
    %91 = vector.broadcast %cst_26 : f32 to vector<8x128xf32>
    %92 = arith.addf %91, %90 : vector<8x128xf32>
    %93 = arith.divf %91, %92 : vector<8x128xf32>
    %94 = arith.mulf %85, %65 : vector<8x128xf32>
    %95 = arith.mulf %79, %87 : vector<8x128xf32>
    %96 = arith.addf %94, %95 : vector<8x128xf32>
    %97 = math.tanh %96 : vector<8x128xf32>
    %98 = arith.mulf %93, %97 : vector<8x128xf32>
    %c3 = arith.constant 3 : index
    %c0_27 = arith.constant 0 : index
    %c0_28 = arith.constant 0 : index
    %99 = vector.load %arg1[%c3, %c0_27, %c0_28] : memref<8x8x128xf32, #tpu.memory_space<vmem>>, vector<1x8x128xf32>
    %100 = vector.shape_cast %99 : vector<1x8x128xf32> to vector<8x128xf32>
    %101 = tpu.concatenate %100, %98 in 1 : vector<8x128xf32>, vector<8x128xf32> -> vector<8x256xf32>
    %cst_29 = arith.constant dense<0.000000e+00> : vector<8x512xf32>
    %102 = tpu.matmul %101, %0, %cst_29 {dimension_numbers = #tpu.dot_dimension_numbers<[1], [0], [0], [1], [0, 0, 1, 1], [], []>} : vector<8x256xf32>, vector<256x512xf32>, vector<8x512xf32> -> vector<8x512xf32>
    %103 = vector.broadcast %1 : vector<1x512xf32> to vector<8x512xf32>
    %104 = arith.addf %102, %103 : vector<8x512xf32>
    %105 = vector.extract_strided_slice %104 {offsets = [0, 0], sizes = [8, 128], strides = [1, 1]} : vector<8x512xf32> to vector<8x128xf32>
    %106 = arith.negf %105 : vector<8x128xf32>
    %107 = math.exp %106 : vector<8x128xf32>
    %cst_30 = arith.constant 1.000000e+00 : f32
    %108 = vector.broadcast %cst_30 : f32 to vector<8x128xf32>
    %109 = arith.addf %108, %107 : vector<8x128xf32>
    %110 = arith.divf %108, %109 : vector<8x128xf32>
    %111 = vector.extract_strided_slice %104 {offsets = [0, 128], sizes = [8, 128], strides = [1, 1]} : vector<8x512xf32> to vector<8x128xf32>
    %112 = arith.negf %111 : vector<8x128xf32>
    %113 = math.exp %112 : vector<8x128xf32>
    %cst_31 = arith.constant 1.000000e+00 : f32
    %114 = vector.broadcast %cst_31 : f32 to vector<8x128xf32>
    %115 = arith.addf %114, %113 : vector<8x128xf32>
    %116 = arith.divf %114, %115 : vector<8x128xf32>
    %117 = vector.extract_strided_slice %104 {offsets = [0, 256], sizes = [8, 128], strides = [1, 1]} : vector<8x512xf32> to vector<8x128xf32>
    %118 = math.tanh %117 : vector<8x128xf32>
    %119 = vector.extract_strided_slice %104 {offsets = [0, 384], sizes = [8, 128], strides = [1, 1]} : vector<8x512xf32> to vector<8x128xf32>
    %120 = arith.negf %119 : vector<8x128xf32>
    %121 = math.exp %120 : vector<8x128xf32>
    %cst_32 = arith.constant 1.000000e+00 : f32
    %122 = vector.broadcast %cst_32 : f32 to vector<8x128xf32>
    %123 = arith.addf %122, %121 : vector<8x128xf32>
    %124 = arith.divf %122, %123 : vector<8x128xf32>
    %125 = arith.mulf %116, %96 : vector<8x128xf32>
    %126 = arith.mulf %110, %118 : vector<8x128xf32>
    %127 = arith.addf %125, %126 : vector<8x128xf32>
    %128 = math.tanh %127 : vector<8x128xf32>
    %129 = arith.mulf %124, %128 : vector<8x128xf32>
    %c4 = arith.constant 4 : index
    %c0_33 = arith.constant 0 : index
    %c0_34 = arith.constant 0 : index
    %130 = vector.load %arg1[%c4, %c0_33, %c0_34] : memref<8x8x128xf32, #tpu.memory_space<vmem>>, vector<1x8x128xf32>
    %131 = vector.shape_cast %130 : vector<1x8x128xf32> to vector<8x128xf32>
    %132 = tpu.concatenate %131, %129 in 1 : vector<8x128xf32>, vector<8x128xf32> -> vector<8x256xf32>
    %cst_35 = arith.constant dense<0.000000e+00> : vector<8x512xf32>
    %133 = tpu.matmul %132, %0, %cst_35 {dimension_numbers = #tpu.dot_dimension_numbers<[1], [0], [0], [1], [0, 0, 1, 1], [], []>} : vector<8x256xf32>, vector<256x512xf32>, vector<8x512xf32> -> vector<8x512xf32>
    %134 = vector.broadcast %1 : vector<1x512xf32> to vector<8x512xf32>
    %135 = arith.addf %133, %134 : vector<8x512xf32>
    %136 = vector.extract_strided_slice %135 {offsets = [0, 0], sizes = [8, 128], strides = [1, 1]} : vector<8x512xf32> to vector<8x128xf32>
    %137 = arith.negf %136 : vector<8x128xf32>
    %138 = math.exp %137 : vector<8x128xf32>
    %cst_36 = arith.constant 1.000000e+00 : f32
    %139 = vector.broadcast %cst_36 : f32 to vector<8x128xf32>
    %140 = arith.addf %139, %138 : vector<8x128xf32>
    %141 = arith.divf %139, %140 : vector<8x128xf32>
    %142 = vector.extract_strided_slice %135 {offsets = [0, 128], sizes = [8, 128], strides = [1, 1]} : vector<8x512xf32> to vector<8x128xf32>
    %143 = arith.negf %142 : vector<8x128xf32>
    %144 = math.exp %143 : vector<8x128xf32>
    %cst_37 = arith.constant 1.000000e+00 : f32
    %145 = vector.broadcast %cst_37 : f32 to vector<8x128xf32>
    %146 = arith.addf %145, %144 : vector<8x128xf32>
    %147 = arith.divf %145, %146 : vector<8x128xf32>
    %148 = vector.extract_strided_slice %135 {offsets = [0, 256], sizes = [8, 128], strides = [1, 1]} : vector<8x512xf32> to vector<8x128xf32>
    %149 = math.tanh %148 : vector<8x128xf32>
    %150 = vector.extract_strided_slice %135 {offsets = [0, 384], sizes = [8, 128], strides = [1, 1]} : vector<8x512xf32> to vector<8x128xf32>
    %151 = arith.negf %150 : vector<8x128xf32>
    %152 = math.exp %151 : vector<8x128xf32>
    %cst_38 = arith.constant 1.000000e+00 : f32
    %153 = vector.broadcast %cst_38 : f32 to vector<8x128xf32>
    %154 = arith.addf %153, %152 : vector<8x128xf32>
    %155 = arith.divf %153, %154 : vector<8x128xf32>
    %156 = arith.mulf %147, %127 : vector<8x128xf32>
    %157 = arith.mulf %141, %149 : vector<8x128xf32>
    %158 = arith.addf %156, %157 : vector<8x128xf32>
    %159 = math.tanh %158 : vector<8x128xf32>
    %160 = arith.mulf %155, %159 : vector<8x128xf32>
    %c5 = arith.constant 5 : index
    %c0_39 = arith.constant 0 : index
    %c0_40 = arith.constant 0 : index
    %161 = vector.load %arg1[%c5, %c0_39, %c0_40] : memref<8x8x128xf32, #tpu.memory_space<vmem>>, vector<1x8x128xf32>
    %162 = vector.shape_cast %161 : vector<1x8x128xf32> to vector<8x128xf32>
    %163 = tpu.concatenate %162, %160 in 1 : vector<8x128xf32>, vector<8x128xf32> -> vector<8x256xf32>
    %cst_41 = arith.constant dense<0.000000e+00> : vector<8x512xf32>
    %164 = tpu.matmul %163, %0, %cst_41 {dimension_numbers = #tpu.dot_dimension_numbers<[1], [0], [0], [1], [0, 0, 1, 1], [], []>} : vector<8x256xf32>, vector<256x512xf32>, vector<8x512xf32> -> vector<8x512xf32>
    %165 = vector.broadcast %1 : vector<1x512xf32> to vector<8x512xf32>
    %166 = arith.addf %164, %165 : vector<8x512xf32>
    %167 = vector.extract_strided_slice %166 {offsets = [0, 0], sizes = [8, 128], strides = [1, 1]} : vector<8x512xf32> to vector<8x128xf32>
    %168 = arith.negf %167 : vector<8x128xf32>
    %169 = math.exp %168 : vector<8x128xf32>
    %cst_42 = arith.constant 1.000000e+00 : f32
    %170 = vector.broadcast %cst_42 : f32 to vector<8x128xf32>
    %171 = arith.addf %170, %169 : vector<8x128xf32>
    %172 = arith.divf %170, %171 : vector<8x128xf32>
    %173 = vector.extract_strided_slice %166 {offsets = [0, 128], sizes = [8, 128], strides = [1, 1]} : vector<8x512xf32> to vector<8x128xf32>
    %174 = arith.negf %173 : vector<8x128xf32>
    %175 = math.exp %174 : vector<8x128xf32>
    %cst_43 = arith.constant 1.000000e+00 : f32
    %176 = vector.broadcast %cst_43 : f32 to vector<8x128xf32>
    %177 = arith.addf %176, %175 : vector<8x128xf32>
    %178 = arith.divf %176, %177 : vector<8x128xf32>
    %179 = vector.extract_strided_slice %166 {offsets = [0, 256], sizes = [8, 128], strides = [1, 1]} : vector<8x512xf32> to vector<8x128xf32>
    %180 = math.tanh %179 : vector<8x128xf32>
    %181 = vector.extract_strided_slice %166 {offsets = [0, 384], sizes = [8, 128], strides = [1, 1]} : vector<8x512xf32> to vector<8x128xf32>
    %182 = arith.negf %181 : vector<8x128xf32>
    %183 = math.exp %182 : vector<8x128xf32>
    %cst_44 = arith.constant 1.000000e+00 : f32
    %184 = vector.broadcast %cst_44 : f32 to vector<8x128xf32>
    %185 = arith.addf %184, %183 : vector<8x128xf32>
    %186 = arith.divf %184, %185 : vector<8x128xf32>
    %187 = arith.mulf %178, %158 : vector<8x128xf32>
    %188 = arith.mulf %172, %180 : vector<8x128xf32>
    %189 = arith.addf %187, %188 : vector<8x128xf32>
    %190 = math.tanh %189 : vector<8x128xf32>
    %191 = arith.mulf %186, %190 : vector<8x128xf32>
    %c6 = arith.constant 6 : index
    %c0_45 = arith.constant 0 : index
    %c0_46 = arith.constant 0 : index
    %192 = vector.load %arg1[%c6, %c0_45, %c0_46] : memref<8x8x128xf32, #tpu.memory_space<vmem>>, vector<1x8x128xf32>
    %193 = vector.shape_cast %192 : vector<1x8x128xf32> to vector<8x128xf32>
    %194 = tpu.concatenate %193, %191 in 1 : vector<8x128xf32>, vector<8x128xf32> -> vector<8x256xf32>
    %cst_47 = arith.constant dense<0.000000e+00> : vector<8x512xf32>
    %195 = tpu.matmul %194, %0, %cst_47 {dimension_numbers = #tpu.dot_dimension_numbers<[1], [0], [0], [1], [0, 0, 1, 1], [], []>} : vector<8x256xf32>, vector<256x512xf32>, vector<8x512xf32> -> vector<8x512xf32>
    %196 = vector.broadcast %1 : vector<1x512xf32> to vector<8x512xf32>
    %197 = arith.addf %195, %196 : vector<8x512xf32>
    %198 = vector.extract_strided_slice %197 {offsets = [0, 0], sizes = [8, 128], strides = [1, 1]} : vector<8x512xf32> to vector<8x128xf32>
    %199 = arith.negf %198 : vector<8x128xf32>
    %200 = math.exp %199 : vector<8x128xf32>
    %cst_48 = arith.constant 1.000000e+00 : f32
    %201 = vector.broadcast %cst_48 : f32 to vector<8x128xf32>
    %202 = arith.addf %201, %200 : vector<8x128xf32>
    %203 = arith.divf %201, %202 : vector<8x128xf32>
    %204 = vector.extract_strided_slice %197 {offsets = [0, 128], sizes = [8, 128], strides = [1, 1]} : vector<8x512xf32> to vector<8x128xf32>
    %205 = arith.negf %204 : vector<8x128xf32>
    %206 = math.exp %205 : vector<8x128xf32>
    %cst_49 = arith.constant 1.000000e+00 : f32
    %207 = vector.broadcast %cst_49 : f32 to vector<8x128xf32>
    %208 = arith.addf %207, %206 : vector<8x128xf32>
    %209 = arith.divf %207, %208 : vector<8x128xf32>
    %210 = vector.extract_strided_slice %197 {offsets = [0, 256], sizes = [8, 128], strides = [1, 1]} : vector<8x512xf32> to vector<8x128xf32>
    %211 = math.tanh %210 : vector<8x128xf32>
    %212 = vector.extract_strided_slice %197 {offsets = [0, 384], sizes = [8, 128], strides = [1, 1]} : vector<8x512xf32> to vector<8x128xf32>
    %213 = arith.negf %212 : vector<8x128xf32>
    %214 = math.exp %213 : vector<8x128xf32>
    %cst_50 = arith.constant 1.000000e+00 : f32
    %215 = vector.broadcast %cst_50 : f32 to vector<8x128xf32>
    %216 = arith.addf %215, %214 : vector<8x128xf32>
    %217 = arith.divf %215, %216 : vector<8x128xf32>
    %218 = arith.mulf %209, %189 : vector<8x128xf32>
    %219 = arith.mulf %203, %211 : vector<8x128xf32>
    %220 = arith.addf %218, %219 : vector<8x128xf32>
    %221 = math.tanh %220 : vector<8x128xf32>
    %222 = arith.mulf %217, %221 : vector<8x128xf32>
    %c7 = arith.constant 7 : index
    %c0_51 = arith.constant 0 : index
    %c0_52 = arith.constant 0 : index
    %223 = vector.load %arg1[%c7, %c0_51, %c0_52] : memref<8x8x128xf32, #tpu.memory_space<vmem>>, vector<1x8x128xf32>
    %224 = vector.shape_cast %223 : vector<1x8x128xf32> to vector<8x128xf32>
    %225 = tpu.concatenate %224, %222 in 1 : vector<8x128xf32>, vector<8x128xf32> -> vector<8x256xf32>
    %cst_53 = arith.constant dense<0.000000e+00> : vector<8x512xf32>
    %226 = tpu.matmul %225, %0, %cst_53 {dimension_numbers = #tpu.dot_dimension_numbers<[1], [0], [0], [1], [0, 0, 1, 1], [], []>} : vector<8x256xf32>, vector<256x512xf32>, vector<8x512xf32> -> vector<8x512xf32>
    %227 = vector.broadcast %1 : vector<1x512xf32> to vector<8x512xf32>
    %228 = arith.addf %226, %227 : vector<8x512xf32>
    %229 = vector.extract_strided_slice %228 {offsets = [0, 0], sizes = [8, 128], strides = [1, 1]} : vector<8x512xf32> to vector<8x128xf32>
    %230 = arith.negf %229 : vector<8x128xf32>
    %231 = math.exp %230 : vector<8x128xf32>
    %cst_54 = arith.constant 1.000000e+00 : f32
    %232 = vector.broadcast %cst_54 : f32 to vector<8x128xf32>
    %233 = arith.addf %232, %231 : vector<8x128xf32>
    %234 = arith.divf %232, %233 : vector<8x128xf32>
    %235 = vector.extract_strided_slice %228 {offsets = [0, 128], sizes = [8, 128], strides = [1, 1]} : vector<8x512xf32> to vector<8x128xf32>
    %236 = arith.negf %235 : vector<8x128xf32>
    %237 = math.exp %236 : vector<8x128xf32>
    %cst_55 = arith.constant 1.000000e+00 : f32
    %238 = vector.broadcast %cst_55 : f32 to vector<8x128xf32>
    %239 = arith.addf %238, %237 : vector<8x128xf32>
    %240 = arith.divf %238, %239 : vector<8x128xf32>
    %241 = vector.extract_strided_slice %228 {offsets = [0, 256], sizes = [8, 128], strides = [1, 1]} : vector<8x512xf32> to vector<8x128xf32>
    %242 = math.tanh %241 : vector<8x128xf32>
    %243 = vector.extract_strided_slice %228 {offsets = [0, 384], sizes = [8, 128], strides = [1, 1]} : vector<8x512xf32> to vector<8x128xf32>
    %244 = arith.negf %243 : vector<8x128xf32>
    %245 = math.exp %244 : vector<8x128xf32>
    %cst_56 = arith.constant 1.000000e+00 : f32
    %246 = vector.broadcast %cst_56 : f32 to vector<8x128xf32>
    %247 = arith.addf %246, %245 : vector<8x128xf32>
    %248 = arith.divf %246, %247 : vector<8x128xf32>
    %249 = arith.mulf %240, %220 : vector<8x128xf32>
    %250 = arith.mulf %234, %242 : vector<8x128xf32>
    %251 = arith.addf %249, %250 : vector<8x128xf32>
    %252 = math.tanh %251 : vector<8x128xf32>
    %253 = arith.mulf %248, %252 : vector<8x128xf32>
    %c0_57 = arith.constant 0 : index
    %c0_58 = arith.constant 0 : index
    %254 = vector.load %arg5[%c0_57, %c0_58] : memref<128x256xf32, #tpu.memory_space<vmem>>, vector<128x256xf32>
    %cst_59 = arith.constant dense<0.000000e+00> : vector<8x256xf32>
    %255 = tpu.matmul %253, %254, %cst_59 {dimension_numbers = #tpu.dot_dimension_numbers<[1], [0], [0], [1], [0, 0, 1, 1], [], []>} : vector<8x128xf32>, vector<128x256xf32>, vector<8x256xf32> -> vector<8x256xf32>
    %c0_60 = arith.constant 0 : index
    %c0_61 = arith.constant 0 : index
    %256 = vector.load %arg6[%c0_60, %c0_61] : memref<1x256xf32, #tpu.memory_space<vmem>>, vector<1x256xf32>
    %257 = vector.broadcast %256 : vector<1x256xf32> to vector<8x256xf32>
    %258 = arith.addf %255, %257 : vector<8x256xf32>
    %259 = vector.extract_strided_slice %258 {offsets = [0, 0], sizes = [8, 128], strides = [1, 1]} : vector<8x256xf32> to vector<8x128xf32>
    %260 = vector.extract_strided_slice %258 {offsets = [0, 128], sizes = [8, 128], strides = [1, 1]} : vector<8x256xf32> to vector<8x128xf32>
    %c0_62 = arith.constant 0 : index
    %c0_63 = arith.constant 0 : index
    %261 = vector.load %arg2[%c0_62, %c0_63] : memref<8x128xf32, #tpu.memory_space<vmem>>, vector<8x128xf32>
    %262 = arith.mulf %260, %261 : vector<8x128xf32>
    %263 = arith.addf %259, %262 : vector<8x128xf32>
    %264 = tpu.iota {dimensions = array<i32: 1>} : vector<8x128xi32>
    %c8_i32 = arith.constant 8 : i32
    %265 = vector.broadcast %c8_i32 : i32 to vector<8x128xi32>
    %266 = arith.cmpi slt, %264, %265 : vector<8x128xi32>
    %267 = arith.mulf %260, %260 : vector<8x128xf32>
    %cst_64 = arith.constant 1.000000e+00 : f32
    %268 = vector.broadcast %cst_64 : f32 to vector<8x128xf32>
    %269 = arith.select %266, %267, %268 : vector<8x128xi1>, vector<8x128xf32>
    %270 = arith.mulf %259, %259 : vector<8x128xf32>
    %271 = arith.addf %267, %270 : vector<8x128xf32>
    %272 = math.log %269 : vector<8x128xf32>
    %273 = arith.subf %271, %272 : vector<8x128xf32>
    %cst_65 = arith.constant 1.000000e+00 : f32
    %274 = vector.broadcast %cst_65 : f32 to vector<8x128xf32>
    %275 = arith.subf %273, %274 : vector<8x128xf32>
    %cst_66 = arith.constant 0.000000e+00 : f32
    %276 = vector.broadcast %cst_66 : f32 to vector<8x128xf32>
    %277 = arith.select %266, %275, %276 : vector<8x128xi1>, vector<8x128xf32>
    %c0_67 = arith.constant 0 : index
    %c0_68 = arith.constant 0 : index
    %278 = vector.load %arg12[%c0_67, %c0_68] : memref<8x128xf32, #tpu.memory_space<vmem>>, vector<8x128xf32>
    tpu.vector_store %arg12[%c0_67, %c0_68], %277 {strides = array<i32>} : memref<8x128xf32, #tpu.memory_space<vmem>>, vector<8x128xf32>,
    %c0_69 = arith.constant 0 : index
    %c0_70 = arith.constant 0 : index
    %279 = vector.load %arg7[%c0_69, %c0_70] : memref<128x1024xf32, #tpu.memory_space<vmem>>, vector<128x1024xf32>
    %cst_71 = arith.constant dense<0.000000e+00> : vector<8x1024xf32>
    %280 = tpu.matmul %263, %279, %cst_71 {dimension_numbers = #tpu.dot_dimension_numbers<[1], [0], [0], [1], [0, 0, 1, 1], [], []>} : vector<8x128xf32>, vector<128x1024xf32>, vector<8x1024xf32> -> vector<8x1024xf32>
    %c0_72 = arith.constant 0 : index
    %c0_73 = arith.constant 0 : index
    %281 = vector.load %arg8[%c0_72, %c0_73] : memref<1x1024xf32, #tpu.memory_space<vmem>>, vector<1x1024xf32>
    %282 = vector.broadcast %281 : vector<1x1024xf32> to vector<8x1024xf32>
    %283 = arith.addf %280, %282 : vector<8x1024xf32>
    %cst_74 = arith.constant 0.000000e+00 : f32
    %284 = vector.broadcast %cst_74 : f32 to vector<8x1024xf32>
    %285 = arith.maximumf %283, %284 : vector<8x1024xf32>
    %cst_75 = arith.constant 0.000000e+00 : f32
    %286 = vector.broadcast %cst_75 : f32 to vector<8x128xf32>
    %cst_76 = arith.constant 0.000000e+00 : f32
    %287 = vector.broadcast %cst_76 : f32 to vector<8x128xf32>
    %288 = vector.extract_strided_slice %285 {offsets = [0, 0], sizes = [8, 128], strides = [1, 1]} : vector<8x1024xf32> to vector<8x128xf32>
    %289 = tpu.concatenate %288, %286 in 1 : vector<8x128xf32>, vector<8x128xf32> -> vector<8x256xf32>
    %cst_77 = arith.constant dense<0.000000e+00> : vector<8x512xf32>
    %290 = tpu.matmul %289, %2, %cst_77 {dimension_numbers = #tpu.dot_dimension_numbers<[1], [0], [0], [1], [0, 0, 1, 1], [], []>} : vector<8x256xf32>, vector<256x512xf32>, vector<8x512xf32> -> vector<8x512xf32>
    %291 = vector.broadcast %3 : vector<1x512xf32> to vector<8x512xf32>
    %292 = arith.addf %290, %291 : vector<8x512xf32>
    %293 = vector.extract_strided_slice %292 {offsets = [0, 0], sizes = [8, 128], strides = [1, 1]} : vector<8x512xf32> to vector<8x128xf32>
    %294 = arith.negf %293 : vector<8x128xf32>
    %295 = math.exp %294 : vector<8x128xf32>
    %cst_78 = arith.constant 1.000000e+00 : f32
    %296 = vector.broadcast %cst_78 : f32 to vector<8x128xf32>
    %297 = arith.addf %296, %295 : vector<8x128xf32>
    %298 = arith.divf %296, %297 : vector<8x128xf32>
    %299 = vector.extract_strided_slice %292 {offsets = [0, 128], sizes = [8, 128], strides = [1, 1]} : vector<8x512xf32> to vector<8x128xf32>
    %300 = arith.negf %299 : vector<8x128xf32>
    %301 = math.exp %300 : vector<8x128xf32>
    %cst_79 = arith.constant 1.000000e+00 : f32
    %302 = vector.broadcast %cst_79 : f32 to vector<8x128xf32>
    %303 = arith.addf %302, %301 : vector<8x128xf32>
    %304 = arith.divf %302, %303 : vector<8x128xf32>
    %305 = vector.extract_strided_slice %292 {offsets = [0, 256], sizes = [8, 128], strides = [1, 1]} : vector<8x512xf32> to vector<8x128xf32>
    %306 = math.tanh %305 : vector<8x128xf32>
    %307 = vector.extract_strided_slice %292 {offsets = [0, 384], sizes = [8, 128], strides = [1, 1]} : vector<8x512xf32> to vector<8x128xf32>
    %308 = arith.negf %307 : vector<8x128xf32>
    %309 = math.exp %308 : vector<8x128xf32>
    %cst_80 = arith.constant 1.000000e+00 : f32
    %310 = vector.broadcast %cst_80 : f32 to vector<8x128xf32>
    %311 = arith.addf %310, %309 : vector<8x128xf32>
    %312 = arith.divf %310, %311 : vector<8x128xf32>
    %313 = arith.mulf %304, %287 : vector<8x128xf32>
    %314 = arith.mulf %298, %306 : vector<8x128xf32>
    %315 = arith.addf %313, %314 : vector<8x128xf32>
    %316 = math.tanh %315 : vector<8x128xf32>
    %317 = arith.mulf %312, %316 : vector<8x128xf32>
    %318 = arith.negf %317 : vector<8x128xf32>
    %319 = math.exp %318 : vector<8x128xf32>
    %cst_81 = arith.constant 1.000000e+00 : f32
    %320 = vector.broadcast %cst_81 : f32 to vector<8x128xf32>
    %321 = arith.addf %320, %319 : vector<8x128xf32>
    %322 = arith.divf %320, %321 : vector<8x128xf32>
    %c0_82 = arith.constant 0 : index
    %c0_83 = arith.constant 0 : index
    %c0_84 = arith.constant 0 : index
    %323 = vector.load %arg11[%c0_82, %c0_83, %c0_84] : memref<8x8x128xf32, #tpu.memory_space<vmem>>, vector<1x8x128xf32>
    %324 = vector.shape_cast %323 : vector<1x8x128xf32> to vector<8x128xf32>
    %325 = vector.shape_cast %322 : vector<8x128xf32> to vector<1x8x128xf32>
    tpu.vector_store %arg11[%c0_82, %c0_83, %c0_84], %325 {strides = array<i32>} : memref<8x8x128xf32, #tpu.memory_space<vmem>>, vector<1x8x128xf32>,
    %326 = vector.extract_strided_slice %285 {offsets = [0, 128], sizes = [8, 128], strides = [1, 1]} : vector<8x1024xf32> to vector<8x128xf32>
    %327 = tpu.concatenate %326, %317 in 1 : vector<8x128xf32>, vector<8x128xf32> -> vector<8x256xf32>
    %cst_85 = arith.constant dense<0.000000e+00> : vector<8x512xf32>
    %328 = tpu.matmul %327, %2, %cst_85 {dimension_numbers = #tpu.dot_dimension_numbers<[1], [0], [0], [1], [0, 0, 1, 1], [], []>} : vector<8x256xf32>, vector<256x512xf32>, vector<8x512xf32> -> vector<8x512xf32>
    %329 = vector.broadcast %3 : vector<1x512xf32> to vector<8x512xf32>
    %330 = arith.addf %328, %329 : vector<8x512xf32>
    %331 = vector.extract_strided_slice %330 {offsets = [0, 0], sizes = [8, 128], strides = [1, 1]} : vector<8x512xf32> to vector<8x128xf32>
    %332 = arith.negf %331 : vector<8x128xf32>
    %333 = math.exp %332 : vector<8x128xf32>
    %cst_86 = arith.constant 1.000000e+00 : f32
    %334 = vector.broadcast %cst_86 : f32 to vector<8x128xf32>
    %335 = arith.addf %334, %333 : vector<8x128xf32>
    %336 = arith.divf %334, %335 : vector<8x128xf32>
    %337 = vector.extract_strided_slice %330 {offsets = [0, 128], sizes = [8, 128], strides = [1, 1]} : vector<8x512xf32> to vector<8x128xf32>
    %338 = arith.negf %337 : vector<8x128xf32>
    %339 = math.exp %338 : vector<8x128xf32>
    %cst_87 = arith.constant 1.000000e+00 : f32
    %340 = vector.broadcast %cst_87 : f32 to vector<8x128xf32>
    %341 = arith.addf %340, %339 : vector<8x128xf32>
    %342 = arith.divf %340, %341 : vector<8x128xf32>
    %343 = vector.extract_strided_slice %330 {offsets = [0, 256], sizes = [8, 128], strides = [1, 1]} : vector<8x512xf32> to vector<8x128xf32>
    %344 = math.tanh %343 : vector<8x128xf32>
    %345 = vector.extract_strided_slice %330 {offsets = [0, 384], sizes = [8, 128], strides = [1, 1]} : vector<8x512xf32> to vector<8x128xf32>
    %346 = arith.negf %345 : vector<8x128xf32>
    %347 = math.exp %346 : vector<8x128xf32>
    %cst_88 = arith.constant 1.000000e+00 : f32
    %348 = vector.broadcast %cst_88 : f32 to vector<8x128xf32>
    %349 = arith.addf %348, %347 : vector<8x128xf32>
    %350 = arith.divf %348, %349 : vector<8x128xf32>
    %351 = arith.mulf %342, %315 : vector<8x128xf32>
    %352 = arith.mulf %336, %344 : vector<8x128xf32>
    %353 = arith.addf %351, %352 : vector<8x128xf32>
    %354 = math.tanh %353 : vector<8x128xf32>
    %355 = arith.mulf %350, %354 : vector<8x128xf32>
    %356 = arith.negf %355 : vector<8x128xf32>
    %357 = math.exp %356 : vector<8x128xf32>
    %cst_89 = arith.constant 1.000000e+00 : f32
    %358 = vector.broadcast %cst_89 : f32 to vector<8x128xf32>
    %359 = arith.addf %358, %357 : vector<8x128xf32>
    %360 = arith.divf %358, %359 : vector<8x128xf32>
    %c1_90 = arith.constant 1 : index
    %c0_91 = arith.constant 0 : index
    %c0_92 = arith.constant 0 : index
    %361 = vector.load %arg11[%c1_90, %c0_91, %c0_92] : memref<8x8x128xf32, #tpu.memory_space<vmem>>, vector<1x8x128xf32>
    %362 = vector.shape_cast %361 : vector<1x8x128xf32> to vector<8x128xf32>
    %363 = vector.shape_cast %360 : vector<8x128xf32> to vector<1x8x128xf32>
    tpu.vector_store %arg11[%c1_90, %c0_91, %c0_92], %363 {strides = array<i32>} : memref<8x8x128xf32, #tpu.memory_space<vmem>>, vector<1x8x128xf32>,
    %364 = vector.extract_strided_slice %285 {offsets = [0, 256], sizes = [8, 128], strides = [1, 1]} : vector<8x1024xf32> to vector<8x128xf32>
    %365 = tpu.concatenate %364, %355 in 1 : vector<8x128xf32>, vector<8x128xf32> -> vector<8x256xf32>
    %cst_93 = arith.constant dense<0.000000e+00> : vector<8x512xf32>
    %366 = tpu.matmul %365, %2, %cst_93 {dimension_numbers = #tpu.dot_dimension_numbers<[1], [0], [0], [1], [0, 0, 1, 1], [], []>} : vector<8x256xf32>, vector<256x512xf32>, vector<8x512xf32> -> vector<8x512xf32>
    %367 = vector.broadcast %3 : vector<1x512xf32> to vector<8x512xf32>
    %368 = arith.addf %366, %367 : vector<8x512xf32>
    %369 = vector.extract_strided_slice %368 {offsets = [0, 0], sizes = [8, 128], strides = [1, 1]} : vector<8x512xf32> to vector<8x128xf32>
    %370 = arith.negf %369 : vector<8x128xf32>
    %371 = math.exp %370 : vector<8x128xf32>
    %cst_94 = arith.constant 1.000000e+00 : f32
    %372 = vector.broadcast %cst_94 : f32 to vector<8x128xf32>
    %373 = arith.addf %372, %371 : vector<8x128xf32>
    %374 = arith.divf %372, %373 : vector<8x128xf32>
    %375 = vector.extract_strided_slice %368 {offsets = [0, 128], sizes = [8, 128], strides = [1, 1]} : vector<8x512xf32> to vector<8x128xf32>
    %376 = arith.negf %375 : vector<8x128xf32>
    %377 = math.exp %376 : vector<8x128xf32>
    %cst_95 = arith.constant 1.000000e+00 : f32
    %378 = vector.broadcast %cst_95 : f32 to vector<8x128xf32>
    %379 = arith.addf %378, %377 : vector<8x128xf32>
    %380 = arith.divf %378, %379 : vector<8x128xf32>
    %381 = vector.extract_strided_slice %368 {offsets = [0, 256], sizes = [8, 128], strides = [1, 1]} : vector<8x512xf32> to vector<8x128xf32>
    %382 = math.tanh %381 : vector<8x128xf32>
    %383 = vector.extract_strided_slice %368 {offsets = [0, 384], sizes = [8, 128], strides = [1, 1]} : vector<8x512xf32> to vector<8x128xf32>
    %384 = arith.negf %383 : vector<8x128xf32>
    %385 = math.exp %384 : vector<8x128xf32>
    %cst_96 = arith.constant 1.000000e+00 : f32
    %386 = vector.broadcast %cst_96 : f32 to vector<8x128xf32>
    %387 = arith.addf %386, %385 : vector<8x128xf32>
    %388 = arith.divf %386, %387 : vector<8x128xf32>
    %389 = arith.mulf %380, %353 : vector<8x128xf32>
    %390 = arith.mulf %374, %382 : vector<8x128xf32>
    %391 = arith.addf %389, %390 : vector<8x128xf32>
    %392 = math.tanh %391 : vector<8x128xf32>
    %393 = arith.mulf %388, %392 : vector<8x128xf32>
    %394 = arith.negf %393 : vector<8x128xf32>
    %395 = math.exp %394 : vector<8x128xf32>
    %cst_97 = arith.constant 1.000000e+00 : f32
    %396 = vector.broadcast %cst_97 : f32 to vector<8x128xf32>
    %397 = arith.addf %396, %395 : vector<8x128xf32>
    %398 = arith.divf %396, %397 : vector<8x128xf32>
    %c2_98 = arith.constant 2 : index
    %c0_99 = arith.constant 0 : index
    %c0_100 = arith.constant 0 : index
    %399 = vector.load %arg11[%c2_98, %c0_99, %c0_100] : memref<8x8x128xf32, #tpu.memory_space<vmem>>, vector<1x8x128xf32>
    %400 = vector.shape_cast %399 : vector<1x8x128xf32> to vector<8x128xf32>
    %401 = vector.shape_cast %398 : vector<8x128xf32> to vector<1x8x128xf32>
    tpu.vector_store %arg11[%c2_98, %c0_99, %c0_100], %401 {strides = array<i32>} : memref<8x8x128xf32, #tpu.memory_space<vmem>>, vector<1x8x128xf32>,
    %402 = vector.extract_strided_slice %285 {offsets = [0, 384], sizes = [8, 128], strides = [1, 1]} : vector<8x1024xf32> to vector<8x128xf32>
    %403 = tpu.concatenate %402, %393 in 1 : vector<8x128xf32>, vector<8x128xf32> -> vector<8x256xf32>
    %cst_101 = arith.constant dense<0.000000e+00> : vector<8x512xf32>
    %404 = tpu.matmul %403, %2, %cst_101 {dimension_numbers = #tpu.dot_dimension_numbers<[1], [0], [0], [1], [0, 0, 1, 1], [], []>} : vector<8x256xf32>, vector<256x512xf32>, vector<8x512xf32> -> vector<8x512xf32>
    %405 = vector.broadcast %3 : vector<1x512xf32> to vector<8x512xf32>
    %406 = arith.addf %404, %405 : vector<8x512xf32>
    %407 = vector.extract_strided_slice %406 {offsets = [0, 0], sizes = [8, 128], strides = [1, 1]} : vector<8x512xf32> to vector<8x128xf32>
    %408 = arith.negf %407 : vector<8x128xf32>
    %409 = math.exp %408 : vector<8x128xf32>
    %cst_102 = arith.constant 1.000000e+00 : f32
    %410 = vector.broadcast %cst_102 : f32 to vector<8x128xf32>
    %411 = arith.addf %410, %409 : vector<8x128xf32>
    %412 = arith.divf %410, %411 : vector<8x128xf32>
    %413 = vector.extract_strided_slice %406 {offsets = [0, 128], sizes = [8, 128], strides = [1, 1]} : vector<8x512xf32> to vector<8x128xf32>
    %414 = arith.negf %413 : vector<8x128xf32>
    %415 = math.exp %414 : vector<8x128xf32>
    %cst_103 = arith.constant 1.000000e+00 : f32
    %416 = vector.broadcast %cst_103 : f32 to vector<8x128xf32>
    %417 = arith.addf %416, %415 : vector<8x128xf32>
    %418 = arith.divf %416, %417 : vector<8x128xf32>
    %419 = vector.extract_strided_slice %406 {offsets = [0, 256], sizes = [8, 128], strides = [1, 1]} : vector<8x512xf32> to vector<8x128xf32>
    %420 = math.tanh %419 : vector<8x128xf32>
    %421 = vector.extract_strided_slice %406 {offsets = [0, 384], sizes = [8, 128], strides = [1, 1]} : vector<8x512xf32> to vector<8x128xf32>
    %422 = arith.negf %421 : vector<8x128xf32>
    %423 = math.exp %422 : vector<8x128xf32>
    %cst_104 = arith.constant 1.000000e+00 : f32
    %424 = vector.broadcast %cst_104 : f32 to vector<8x128xf32>
    %425 = arith.addf %424, %423 : vector<8x128xf32>
    %426 = arith.divf %424, %425 : vector<8x128xf32>
    %427 = arith.mulf %418, %391 : vector<8x128xf32>
    %428 = arith.mulf %412, %420 : vector<8x128xf32>
    %429 = arith.addf %427, %428 : vector<8x128xf32>
    %430 = math.tanh %429 : vector<8x128xf32>
    %431 = arith.mulf %426, %430 : vector<8x128xf32>
    %432 = arith.negf %431 : vector<8x128xf32>
    %433 = math.exp %432 : vector<8x128xf32>
    %cst_105 = arith.constant 1.000000e+00 : f32
    %434 = vector.broadcast %cst_105 : f32 to vector<8x128xf32>
    %435 = arith.addf %434, %433 : vector<8x128xf32>
    %436 = arith.divf %434, %435 : vector<8x128xf32>
    %c3_106 = arith.constant 3 : index
    %c0_107 = arith.constant 0 : index
    %c0_108 = arith.constant 0 : index
    %437 = vector.load %arg11[%c3_106, %c0_107, %c0_108] : memref<8x8x128xf32, #tpu.memory_space<vmem>>, vector<1x8x128xf32>
    %438 = vector.shape_cast %437 : vector<1x8x128xf32> to vector<8x128xf32>
    %439 = vector.shape_cast %436 : vector<8x128xf32> to vector<1x8x128xf32>
    tpu.vector_store %arg11[%c3_106, %c0_107, %c0_108], %439 {strides = array<i32>} : memref<8x8x128xf32, #tpu.memory_space<vmem>>, vector<1x8x128xf32>,
    %440 = vector.extract_strided_slice %285 {offsets = [0, 512], sizes = [8, 128], strides = [1, 1]} : vector<8x1024xf32> to vector<8x128xf32>
    %441 = tpu.concatenate %440, %431 in 1 : vector<8x128xf32>, vector<8x128xf32> -> vector<8x256xf32>
    %cst_109 = arith.constant dense<0.000000e+00> : vector<8x512xf32>
    %442 = tpu.matmul %441, %2, %cst_109 {dimension_numbers = #tpu.dot_dimension_numbers<[1], [0], [0], [1], [0, 0, 1, 1], [], []>} : vector<8x256xf32>, vector<256x512xf32>, vector<8x512xf32> -> vector<8x512xf32>
    %443 = vector.broadcast %3 : vector<1x512xf32> to vector<8x512xf32>
    %444 = arith.addf %442, %443 : vector<8x512xf32>
    %445 = vector.extract_strided_slice %444 {offsets = [0, 0], sizes = [8, 128], strides = [1, 1]} : vector<8x512xf32> to vector<8x128xf32>
    %446 = arith.negf %445 : vector<8x128xf32>
    %447 = math.exp %446 : vector<8x128xf32>
    %cst_110 = arith.constant 1.000000e+00 : f32
    %448 = vector.broadcast %cst_110 : f32 to vector<8x128xf32>
    %449 = arith.addf %448, %447 : vector<8x128xf32>
    %450 = arith.divf %448, %449 : vector<8x128xf32>
    %451 = vector.extract_strided_slice %444 {offsets = [0, 128], sizes = [8, 128], strides = [1, 1]} : vector<8x512xf32> to vector<8x128xf32>
    %452 = arith.negf %451 : vector<8x128xf32>
    %453 = math.exp %452 : vector<8x128xf32>
    %cst_111 = arith.constant 1.000000e+00 : f32
    %454 = vector.broadcast %cst_111 : f32 to vector<8x128xf32>
    %455 = arith.addf %454, %453 : vector<8x128xf32>
    %456 = arith.divf %454, %455 : vector<8x128xf32>
    %457 = vector.extract_strided_slice %444 {offsets = [0, 256], sizes = [8, 128], strides = [1, 1]} : vector<8x512xf32> to vector<8x128xf32>
    %458 = math.tanh %457 : vector<8x128xf32>
    %459 = vector.extract_strided_slice %444 {offsets = [0, 384], sizes = [8, 128], strides = [1, 1]} : vector<8x512xf32> to vector<8x128xf32>
    %460 = arith.negf %459 : vector<8x128xf32>
    %461 = math.exp %460 : vector<8x128xf32>
    %cst_112 = arith.constant 1.000000e+00 : f32
    %462 = vector.broadcast %cst_112 : f32 to vector<8x128xf32>
    %463 = arith.addf %462, %461 : vector<8x128xf32>
    %464 = arith.divf %462, %463 : vector<8x128xf32>
    %465 = arith.mulf %456, %429 : vector<8x128xf32>
    %466 = arith.mulf %450, %458 : vector<8x128xf32>
    %467 = arith.addf %465, %466 : vector<8x128xf32>
    %468 = math.tanh %467 : vector<8x128xf32>
    %469 = arith.mulf %464, %468 : vector<8x128xf32>
    %470 = arith.negf %469 : vector<8x128xf32>
    %471 = math.exp %470 : vector<8x128xf32>
    %cst_113 = arith.constant 1.000000e+00 : f32
    %472 = vector.broadcast %cst_113 : f32 to vector<8x128xf32>
    %473 = arith.addf %472, %471 : vector<8x128xf32>
    %474 = arith.divf %472, %473 : vector<8x128xf32>
    %c4_114 = arith.constant 4 : index
    %c0_115 = arith.constant 0 : index
    %c0_116 = arith.constant 0 : index
    %475 = vector.load %arg11[%c4_114, %c0_115, %c0_116] : memref<8x8x128xf32, #tpu.memory_space<vmem>>, vector<1x8x128xf32>
    %476 = vector.shape_cast %475 : vector<1x8x128xf32> to vector<8x128xf32>
    %477 = vector.shape_cast %474 : vector<8x128xf32> to vector<1x8x128xf32>
    tpu.vector_store %arg11[%c4_114, %c0_115, %c0_116], %477 {strides = array<i32>} : memref<8x8x128xf32, #tpu.memory_space<vmem>>, vector<1x8x128xf32>,
    %478 = vector.extract_strided_slice %285 {offsets = [0, 640], sizes = [8, 128], strides = [1, 1]} : vector<8x1024xf32> to vector<8x128xf32>
    %479 = tpu.concatenate %478, %469 in 1 : vector<8x128xf32>, vector<8x128xf32> -> vector<8x256xf32>
    %cst_117 = arith.constant dense<0.000000e+00> : vector<8x512xf32>
    %480 = tpu.matmul %479, %2, %cst_117 {dimension_numbers = #tpu.dot_dimension_numbers<[1], [0], [0], [1], [0, 0, 1, 1], [], []>} : vector<8x256xf32>, vector<256x512xf32>, vector<8x512xf32> -> vector<8x512xf32>
    %481 = vector.broadcast %3 : vector<1x512xf32> to vector<8x512xf32>
    %482 = arith.addf %480, %481 : vector<8x512xf32>
    %483 = vector.extract_strided_slice %482 {offsets = [0, 0], sizes = [8, 128], strides = [1, 1]} : vector<8x512xf32> to vector<8x128xf32>
    %484 = arith.negf %483 : vector<8x128xf32>
    %485 = math.exp %484 : vector<8x128xf32>
    %cst_118 = arith.constant 1.000000e+00 : f32
    %486 = vector.broadcast %cst_118 : f32 to vector<8x128xf32>
    %487 = arith.addf %486, %485 : vector<8x128xf32>
    %488 = arith.divf %486, %487 : vector<8x128xf32>
    %489 = vector.extract_strided_slice %482 {offsets = [0, 128], sizes = [8, 128], strides = [1, 1]} : vector<8x512xf32> to vector<8x128xf32>
    %490 = arith.negf %489 : vector<8x128xf32>
    %491 = math.exp %490 : vector<8x128xf32>
    %cst_119 = arith.constant 1.000000e+00 : f32
    %492 = vector.broadcast %cst_119 : f32 to vector<8x128xf32>
    %493 = arith.addf %492, %491 : vector<8x128xf32>
    %494 = arith.divf %492, %493 : vector<8x128xf32>
    %495 = vector.extract_strided_slice %482 {offsets = [0, 256], sizes = [8, 128], strides = [1, 1]} : vector<8x512xf32> to vector<8x128xf32>
    %496 = math.tanh %495 : vector<8x128xf32>
    %497 = vector.extract_strided_slice %482 {offsets = [0, 384], sizes = [8, 128], strides = [1, 1]} : vector<8x512xf32> to vector<8x128xf32>
    %498 = arith.negf %497 : vector<8x128xf32>
    %499 = math.exp %498 : vector<8x128xf32>
    %cst_120 = arith.constant 1.000000e+00 : f32
    %500 = vector.broadcast %cst_120 : f32 to vector<8x128xf32>
    %501 = arith.addf %500, %499 : vector<8x128xf32>
    %502 = arith.divf %500, %501 : vector<8x128xf32>
    %503 = arith.mulf %494, %467 : vector<8x128xf32>
    %504 = arith.mulf %488, %496 : vector<8x128xf32>
    %505 = arith.addf %503, %504 : vector<8x128xf32>
    %506 = math.tanh %505 : vector<8x128xf32>
    %507 = arith.mulf %502, %506 : vector<8x128xf32>
    %508 = arith.negf %507 : vector<8x128xf32>
    %509 = math.exp %508 : vector<8x128xf32>
    %cst_121 = arith.constant 1.000000e+00 : f32
    %510 = vector.broadcast %cst_121 : f32 to vector<8x128xf32>
    %511 = arith.addf %510, %509 : vector<8x128xf32>
    %512 = arith.divf %510, %511 : vector<8x128xf32>
    %c5_122 = arith.constant 5 : index
    %c0_123 = arith.constant 0 : index
    %c0_124 = arith.constant 0 : index
    %513 = vector.load %arg11[%c5_122, %c0_123, %c0_124] : memref<8x8x128xf32, #tpu.memory_space<vmem>>, vector<1x8x128xf32>
    %514 = vector.shape_cast %513 : vector<1x8x128xf32> to vector<8x128xf32>
    %515 = vector.shape_cast %512 : vector<8x128xf32> to vector<1x8x128xf32>
    tpu.vector_store %arg11[%c5_122, %c0_123, %c0_124], %515 {strides = array<i32>} : memref<8x8x128xf32, #tpu.memory_space<vmem>>, vector<1x8x128xf32>,
    %516 = vector.extract_strided_slice %285 {offsets = [0, 768], sizes = [8, 128], strides = [1, 1]} : vector<8x1024xf32> to vector<8x128xf32>
    %517 = tpu.concatenate %516, %507 in 1 : vector<8x128xf32>, vector<8x128xf32> -> vector<8x256xf32>
    %cst_125 = arith.constant dense<0.000000e+00> : vector<8x512xf32>
    %518 = tpu.matmul %517, %2, %cst_125 {dimension_numbers = #tpu.dot_dimension_numbers<[1], [0], [0], [1], [0, 0, 1, 1], [], []>} : vector<8x256xf32>, vector<256x512xf32>, vector<8x512xf32> -> vector<8x512xf32>
    %519 = vector.broadcast %3 : vector<1x512xf32> to vector<8x512xf32>
    %520 = arith.addf %518, %519 : vector<8x512xf32>
    %521 = vector.extract_strided_slice %520 {offsets = [0, 0], sizes = [8, 128], strides = [1, 1]} : vector<8x512xf32> to vector<8x128xf32>
    %522 = arith.negf %521 : vector<8x128xf32>
    %523 = math.exp %522 : vector<8x128xf32>
    %cst_126 = arith.constant 1.000000e+00 : f32
    %524 = vector.broadcast %cst_126 : f32 to vector<8x128xf32>
    %525 = arith.addf %524, %523 : vector<8x128xf32>
    %526 = arith.divf %524, %525 : vector<8x128xf32>
    %527 = vector.extract_strided_slice %520 {offsets = [0, 128], sizes = [8, 128], strides = [1, 1]} : vector<8x512xf32> to vector<8x128xf32>
    %528 = arith.negf %527 : vector<8x128xf32>
    %529 = math.exp %528 : vector<8x128xf32>
    %cst_127 = arith.constant 1.000000e+00 : f32
    %530 = vector.broadcast %cst_127 : f32 to vector<8x128xf32>
    %531 = arith.addf %530, %529 : vector<8x128xf32>
    %532 = arith.divf %530, %531 : vector<8x128xf32>
    %533 = vector.extract_strided_slice %520 {offsets = [0, 256], sizes = [8, 128], strides = [1, 1]} : vector<8x512xf32> to vector<8x128xf32>
    %534 = math.tanh %533 : vector<8x128xf32>
    %535 = vector.extract_strided_slice %520 {offsets = [0, 384], sizes = [8, 128], strides = [1, 1]} : vector<8x512xf32> to vector<8x128xf32>
    %536 = arith.negf %535 : vector<8x128xf32>
    %537 = math.exp %536 : vector<8x128xf32>
    %cst_128 = arith.constant 1.000000e+00 : f32
    %538 = vector.broadcast %cst_128 : f32 to vector<8x128xf32>
    %539 = arith.addf %538, %537 : vector<8x128xf32>
    %540 = arith.divf %538, %539 : vector<8x128xf32>
    %541 = arith.mulf %532, %505 : vector<8x128xf32>
    %542 = arith.mulf %526, %534 : vector<8x128xf32>
    %543 = arith.addf %541, %542 : vector<8x128xf32>
    %544 = math.tanh %543 : vector<8x128xf32>
    %545 = arith.mulf %540, %544 : vector<8x128xf32>
    %546 = arith.negf %545 : vector<8x128xf32>
    %547 = math.exp %546 : vector<8x128xf32>
    %cst_129 = arith.constant 1.000000e+00 : f32
    %548 = vector.broadcast %cst_129 : f32 to vector<8x128xf32>
    %549 = arith.addf %548, %547 : vector<8x128xf32>
    %550 = arith.divf %548, %549 : vector<8x128xf32>
    %c6_130 = arith.constant 6 : index
    %c0_131 = arith.constant 0 : index
    %c0_132 = arith.constant 0 : index
    %551 = vector.load %arg11[%c6_130, %c0_131, %c0_132] : memref<8x8x128xf32, #tpu.memory_space<vmem>>, vector<1x8x128xf32>
    %552 = vector.shape_cast %551 : vector<1x8x128xf32> to vector<8x128xf32>
    %553 = vector.shape_cast %550 : vector<8x128xf32> to vector<1x8x128xf32>
    tpu.vector_store %arg11[%c6_130, %c0_131, %c0_132], %553 {strides = array<i32>} : memref<8x8x128xf32, #tpu.memory_space<vmem>>, vector<1x8x128xf32>,
    %554 = vector.extract_strided_slice %285 {offsets = [0, 896], sizes = [8, 128], strides = [1, 1]} : vector<8x1024xf32> to vector<8x128xf32>
    %555 = tpu.concatenate %554, %545 in 1 : vector<8x128xf32>, vector<8x128xf32> -> vector<8x256xf32>
    %cst_133 = arith.constant dense<0.000000e+00> : vector<8x512xf32>
    %556 = tpu.matmul %555, %2, %cst_133 {dimension_numbers = #tpu.dot_dimension_numbers<[1], [0], [0], [1], [0, 0, 1, 1], [], []>} : vector<8x256xf32>, vector<256x512xf32>, vector<8x512xf32> -> vector<8x512xf32>
    %557 = vector.broadcast %3 : vector<1x512xf32> to vector<8x512xf32>
    %558 = arith.addf %556, %557 : vector<8x512xf32>
    %559 = vector.extract_strided_slice %558 {offsets = [0, 0], sizes = [8, 128], strides = [1, 1]} : vector<8x512xf32> to vector<8x128xf32>
    %560 = arith.negf %559 : vector<8x128xf32>
    %561 = math.exp %560 : vector<8x128xf32>
    %cst_134 = arith.constant 1.000000e+00 : f32
    %562 = vector.broadcast %cst_134 : f32 to vector<8x128xf32>
    %563 = arith.addf %562, %561 : vector<8x128xf32>
    %564 = arith.divf %562, %563 : vector<8x128xf32>
    %565 = vector.extract_strided_slice %558 {offsets = [0, 128], sizes = [8, 128], strides = [1, 1]} : vector<8x512xf32> to vector<8x128xf32>
    %566 = arith.negf %565 : vector<8x128xf32>
    %567 = math.exp %566 : vector<8x128xf32>
    %cst_135 = arith.constant 1.000000e+00 : f32
    %568 = vector.broadcast %cst_135 : f32 to vector<8x128xf32>
    %569 = arith.addf %568, %567 : vector<8x128xf32>
    %570 = arith.divf %568, %569 : vector<8x128xf32>
    %571 = vector.extract_strided_slice %558 {offsets = [0, 256], sizes = [8, 128], strides = [1, 1]} : vector<8x512xf32> to vector<8x128xf32>
    %572 = math.tanh %571 : vector<8x128xf32>
    %573 = vector.extract_strided_slice %558 {offsets = [0, 384], sizes = [8, 128], strides = [1, 1]} : vector<8x512xf32> to vector<8x128xf32>
    %574 = arith.negf %573 : vector<8x128xf32>
    %575 = math.exp %574 : vector<8x128xf32>
    %cst_136 = arith.constant 1.000000e+00 : f32
    %576 = vector.broadcast %cst_136 : f32 to vector<8x128xf32>
    %577 = arith.addf %576, %575 : vector<8x128xf32>
    %578 = arith.divf %576, %577 : vector<8x128xf32>
    %579 = arith.mulf %570, %543 : vector<8x128xf32>
    %580 = arith.mulf %564, %572 : vector<8x128xf32>
    %581 = arith.addf %579, %580 : vector<8x128xf32>
    %582 = math.tanh %581 : vector<8x128xf32>
    %583 = arith.mulf %578, %582 : vector<8x128xf32>
    %584 = arith.negf %583 : vector<8x128xf32>
    %585 = math.exp %584 : vector<8x128xf32>
    %cst_137 = arith.constant 1.000000e+00 : f32
    %586 = vector.broadcast %cst_137 : f32 to vector<8x128xf32>
    %587 = arith.addf %586, %585 : vector<8x128xf32>
    %588 = arith.divf %586, %587 : vector<8x128xf32>
    %c7_138 = arith.constant 7 : index
    %c0_139 = arith.constant 0 : index
    %c0_140 = arith.constant 0 : index
    %589 = vector.load %arg11[%c7_138, %c0_139, %c0_140] : memref<8x8x128xf32, #tpu.memory_space<vmem>>, vector<1x8x128xf32>
    %590 = vector.shape_cast %589 : vector<1x8x128xf32> to vector<8x128xf32>
    %591 = vector.shape_cast %588 : vector<8x128xf32> to vector<1x8x128xf32>
    tpu.vector_store %arg11[%c7_138, %c0_139, %c0_140], %591 {strides = array<i32>} : memref<8x8x128xf32, #tpu.memory_space<vmem>>, vector<1x8x128xf32>,
    return
  }
  func.func @transform_0(%arg0: i32) -> (i32, i32, i32) {
    %c0_i32 = arith.constant 0 : i32
    %c0_i32_0 = arith.constant 0 : i32
    %c0_i32_1 = arith.constant 0 : i32
    return %c0_i32, %arg0, %c0_i32_0 : i32, i32, i32
  }
  func.func @transform_1(%arg0: i32) -> (i32, i32) {
    %c0_i32 = arith.constant 0 : i32
    %c0_i32_0 = arith.constant 0 : i32
    return %arg0, %c0_i32 : i32, i32
  }
  func.func @transform_2(%arg0: i32) -> (i32, i32) {
    %c0_i32 = arith.constant 0 : i32
    %c0_i32_0 = arith.constant 0 : i32
    %c0_i32_1 = arith.constant 0 : i32
    return %c0_i32, %c0_i32_0 : i32, i32
  }
  func.func @transform_3(%arg0: i32) -> (i32, i32) {
    %c0_i32 = arith.constant 0 : i32
    %c0_i32_0 = arith.constant 0 : i32
    %c0_i32_1 = arith.constant 0 : i32
    return %c0_i32, %c0_i32_0 : i32, i32
  }
  func.func @transform_4(%arg0: i32) -> (i32, i32) {
    %c0_i32 = arith.constant 0 : i32
    %c0_i32_0 = arith.constant 0 : i32
    %c0_i32_1 = arith.constant 0 : i32
    return %c0_i32, %c0_i32_0 : i32, i32
  }
  func.func @transform_5(%arg0: i32) -> (i32, i32) {
    %c0_i32 = arith.constant 0 : i32
    %c0_i32_0 = arith.constant 0 : i32
    %c0_i32_1 = arith.constant 0 : i32
    return %c0_i32, %c0_i32_0 : i32, i32
  }
  func.func @transform_6(%arg0: i32) -> (i32, i32) {
    %c0_i32 = arith.constant 0 : i32
    %c0_i32_0 = arith.constant 0 : i32
    %c0_i32_1 = arith.constant 0 : i32
    return %c0_i32, %c0_i32_0 : i32, i32
  }
  func.func @transform_7(%arg0: i32) -> (i32, i32) {
    %c0_i32 = arith.constant 0 : i32
    %c0_i32_0 = arith.constant 0 : i32
    %c0_i32_1 = arith.constant 0 : i32
    return %c0_i32, %c0_i32_0 : i32, i32
  }
  func.func @transform_8(%arg0: i32) -> (i32, i32) {
    %c0_i32 = arith.constant 0 : i32
    %c0_i32_0 = arith.constant 0 : i32
    %c0_i32_1 = arith.constant 0 : i32
    return %c0_i32, %c0_i32_0 : i32, i32
  }
  func.func @transform_9(%arg0: i32) -> (i32, i32) {
    %c0_i32 = arith.constant 0 : i32
    %c0_i32_0 = arith.constant 0 : i32
    %c0_i32_1 = arith.constant 0 : i32
    return %c0_i32, %c0_i32_0 : i32, i32
  }
  func.func @transform_10(%arg0: i32) -> (i32, i32, i32) {
    %c0_i32 = arith.constant 0 : i32
    %c0_i32_0 = arith.constant 0 : i32
    %c0_i32_1 = arith.constant 0 : i32
    return %c0_i32, %arg0, %c0_i32_0 : i32, i32, i32
  }
  func.func @transform_11(%arg0: i32) -> (i32, i32) {
    %c0_i32 = arith.constant 0 : i32
    %c0_i32_0 = arith.constant 0 : i32
    return %arg0, %c0_i32 : i32, i32
  }
}

</mosaic_0001>

<llo_original>
// kernel: recurrent_vae_forward.1
$region0: #{recurrent_vae_forward.1}
  #allocation0 [shape = 'u32[]', space=smem, size = 0x4, offset = 0x4, fixed_abs, tag = 'smem constant byte address 0x4 - core index']
  #allocation1 [shape = 'u32[144,128]{1,0:T(1,128)}', space=vmem, size = 0x12000, scoped, tag = 'internal scratch']
  %s0 = inlined_call_operand.vmem [shape: f32[8,16,128], index: 0, kind: input, shape index: {}]
  %s1 = inlined_call_operand.vmem [shape: f32[16,128], index: 1, kind: input, shape index: {}]
  %s2 = inlined_call_operand.hbm [shape: f32[256,512], index: 2, kind: input, shape index: {}]
  %s3 = inlined_call_operand.vmem [shape: f32[1,512], index: 3, kind: input, shape index: {}]
  %s4 = inlined_call_operand.vmem [shape: f32[128,256], index: 4, kind: input, shape index: {}]
  %s5 = inlined_call_operand.vmem [shape: f32[1,256], index: 5, kind: input, shape index: {}]
  %s6 = inlined_call_operand.hbm [shape: f32[128,1024], index: 6, kind: input, shape index: {}]
  %s7 = inlined_call_operand.vmem [shape: f32[1,1024], index: 7, kind: input, shape index: {}]
  %s8 = inlined_call_operand.hbm [shape: f32[256,512], index: 8, kind: input, shape index: {}]
  %s9 = inlined_call_operand.vmem [shape: f32[1,512], index: 9, kind: input, shape index: {}]
  %s10 = inlined_call_operand.vmem [shape: f32[8,16,128], index: 10, kind: output, shape index: {0}]
  %s11 = inlined_call_operand.vmem [shape: f32[16,128], index: 11, kind: output, shape index: {1}]
  %12 = xla_tuple %s10, %s11
  %s13 = sld [smem:[#allocation0]]
  $region165: #{recurrent_vae_forward.1} parent=0
    _
  %s15 = ssub.s32 1, %s13
  %s16 = scalar_select 0, %s15, %s13
  $region1: #{recurrent_vae_forward.1} parent=0
    #allocation2 [shape = 'u8[65536]{0}', space=vmem, size = 0x10000, scoped, tag = 'input window, operand 0']
    #allocation3 [shape = 'u8[524288]{0}', space=vmem, size = 0x80000, scoped, tag = 'input window, operand 2, single buffered']
    #allocation4 [shape = 's32[2]{0}', space=sflag, size = 0x8, scoped, tag = 'scoped memory for recurrent_vae_forward.1']
    #allocation5 [shape = 'u8[524288]{0}', space=vmem, size = 0x80000, scoped, tag = 'input window, operand 6, single buffered']
    #allocation6 [shape = 's32[1]{0}', space=sflag, size = 0x4, scoped, tag = 'scoped memory for recurrent_vae_forward.1']
    #allocation7 [shape = 'u8[524288]{0}', space=vmem, size = 0x80000, scoped, tag = 'input window, operand 8, single buffered']
    #allocation8 [shape = 'u8[65536]{0}', space=vmem, size = 0x10000, scoped, tag = 'output window, operand 0']
    %17 = vsyncpa [#allocation4], 0
    %18 = vsyncpa [#allocation6], 0
    loop: start=0, step=1, limit=4
    $region2: #{recurrent_vae_forward.1} parent=1 // loop_pre_header
      _
    $region3: #{recurrent_vae_forward.1} parent=1 // loop_header
      %s20 = sphi 0, %s24
      %p21 = scmp.ge.s32.totalorder %s20, 4
      %s30 = sphi 0, %s32
      %s33 = sphi 0, %s30
      %s34 = sphi 0, %s33
      %s50 = sphi 0, %s34
      %s56 = sphi 0, %s58
      %s59 = sphi 0, %s56
      %s60 = sphi 0, %s59
      %s76 = sphi 0, %s60
      %s80 = sphi 0, %s80
      %s82 = sphi 0, %s80
      %s83 = sphi 0, %s82
      %s97 = sphi 0, %s83
      %s101 = sphi 0, %s101
      %s103 = sphi 0, %s101
      %s104 = sphi 0, %s103
      %s118 = sphi 0, %s104
      %s122 = sphi 0, %s122
      %s124 = sphi 0, %s122
      %s125 = sphi 0, %s124
      %s139 = sphi 0, %s125
      %s143 = sphi 0, %s143
      %s145 = sphi 0, %s143
      %s146 = sphi 0, %s145
      %s160 = sphi 0, %s146
      %s164 = sphi 0, %s164
      %s166 = sphi 0, %s164
      %s167 = sphi 0, %s166
      %s181 = sphi 0, %s167
      %s185 = sphi 0, %s185
      %s187 = sphi 0, %s185
      %s188 = sphi 0, %s187
      %s202 = sphi 0, %s188
      %s206 = sphi 0, %s206
      %s208 = sphi 0, %s206
      %s209 = sphi 0, %s208
      %s223 = sphi 0, %s209
      %s227 = sphi 0, %s227
      %s229 = sphi 0, %s227
      %s230 = sphi 0, %s229
      %s244 = sphi 0, %s230
      %s250 = sphi 0, %s252
      %s253 = sphi 0, %s250
      %s254 = sphi 0, %s253
      %s270 = sphi 0, %s254
      %s276 = sphi 0, %s278
      %s279 = sphi 0, %s276
      %s280 = sphi 0, %s279
      %s296 = sphi 0, %s280
    $region4: #{recurrent_vae_forward.1} parent=1 // loop_header_branch
      %23 = sbr.rel (%p21) target = $region8
    $region5: #{recurrent_vae_forward.1} parent=1 // loop_body
      %s25 = ssub.s32 %s20, 1
      %s26 = ssub.s32 %s20, 2
      %s27 = sadd.s32 %s20, 1
      %s28 = ssub.s32 %s20, %s27
      %p29 = scmp.eq.s32.totalorder %s28, 0
      %s31 = sadd.s32 %s30, 1
      %s32 = scalar_select %p29, %s30, %s31
      %p35 = pneg %p29
      %p36 = scmp.eq.s32.totalorder %s20, 1
      %p37 = por %p35, %p36
      %p38 = scmp.ne.s32.totalorder %s30, %s33
      %p39 = scmp.eq.s32.totalorder %s20, 0
      %p40 = por %p38, %p39
      %p41 = scmp.ne.s32.totalorder %s30, %s33
      %p42 = scmp.eq.s32.totalorder %s25, 1
      %p43 = por %p41, %p42
      %p44 = scmp.ne.s32.totalorder %s33, %s34
      %p45 = scmp.eq.s32.totalorder %s25, 0
      %p46 = por %p44, %p45
      %p47 = scmp.ne.s32.totalorder %s33, %s34
      %p48 = scmp.eq.s32.totalorder %s26, 1
      %p49 = por %p47, %p48
      %p51 = scmp.ne.s32.totalorder %s34, %s50
      %p52 = scmp.eq.s32.totalorder %s26, 0
      %p53 = por %p51, %p52
      %s54 = ssub.s32 %s20, %s27
      %p55 = scmp.eq.s32.totalorder %s54, 0
      %s57 = sadd.s32 %s56, 1
      %s58 = scalar_select %p55, %s56, %s57
      %p61 = pneg %p55
      %p62 = scmp.eq.s32.totalorder %s20, 1
      %p63 = por %p61, %p62
      %p64 = scmp.ne.s32.totalorder %s56, %s59
      %p65 = scmp.eq.s32.totalorder %s20, 0
      %p66 = por %p64, %p65
      %p67 = scmp.ne.s32.totalorder %s56, %s59
      %p68 = scmp.eq.s32.totalorder %s25, 1
      %p69 = por %p67, %p68
      %p70 = scmp.ne.s32.totalorder %s59, %s60
      %p71 = scmp.eq.s32.totalorder %s25, 0
      %p72 = por %p70, %p71
      %p73 = scmp.ne.s32.totalorder %s59, %s60
      %p74 = scmp.eq.s32.totalorder %s26, 1
      %p75 = por %p73, %p74
      %p77 = scmp.ne.s32.totalorder %s60, %s76
      %p78 = scmp.eq.s32.totalorder %s26, 0
      %p79 = por %p77, %p78
      %s81 = sadd.s32 %s80, 1
      %p84 = scmp.eq.s32.totalorder %s20, 1
      %p85 = scmp.ne.s32.totalorder %s80, %s82
      %p86 = scmp.eq.s32.totalorder %s20, 0
      %p87 = por %p85, %p86
      %p88 = scmp.ne.s32.totalorder %s80, %s82
      %p89 = scmp.eq.s32.totalorder %s25, 1
      %p90 = por %p88, %p89
      %p91 = scmp.ne.s32.totalorder %s82, %s83
      %p92 = scmp.eq.s32.totalorder %s25, 0
      %p93 = por %p91, %p92
      %p94 = scmp.ne.s32.totalorder %s82, %s83
      %p95 = scmp.eq.s32.totalorder %s26, 1
      %p96 = por %p94, %p95
      %p98 = scmp.ne.s32.totalorder %s83, %s97
      %p99 = scmp.eq.s32.totalorder %s26, 0
      %p100 = por %p98, %p99
      %s102 = sadd.s32 %s101, 1
      %p105 = scmp.eq.s32.totalorder %s20, 1
      %p106 = scmp.ne.s32.totalorder %s101, %s103
      %p107 = scmp.eq.s32.totalorder %s20, 0
      %p108 = por %p106, %p107
      %p109 = scmp.ne.s32.totalorder %s101, %s103
      %p110 = scmp.eq.s32.totalorder %s25, 1
      %p111 = por %p109, %p110
      %p112 = scmp.ne.s32.totalorder %s103, %s104
      %p113 = scmp.eq.s32.totalorder %s25, 0
      %p114 = por %p112, %p113
      %p115 = scmp.ne.s32.totalorder %s103, %s104
      %p116 = scmp.eq.s32.totalorder %s26, 1
      %p117 = por %p115, %p116
      %p119 = scmp.ne.s32.totalorder %s104, %s118
      %p120 = scmp.eq.s32.totalorder %s26, 0
      %p121 = por %p119, %p120
      %s123 = sadd.s32 %s122, 1
      %p126 = scmp.eq.s32.totalorder %s20, 1
      %p127 = scmp.ne.s32.totalorder %s122, %s124
      %p128 = scmp.eq.s32.totalorder %s20, 0
      %p129 = por %p127, %p128
      %p130 = scmp.ne.s32.totalorder %s122, %s124
      %p131 = scmp.eq.s32.totalorder %s25, 1
      %p132 = por %p130, %p131
      %p133 = scmp.ne.s32.totalorder %s124, %s125
      %p134 = scmp.eq.s32.totalorder %s25, 0
      %p135 = por %p133, %p134
      %p136 = scmp.ne.s32.totalorder %s124, %s125
      %p137 = scmp.eq.s32.totalorder %s26, 1
      %p138 = por %p136, %p137
      %p140 = scmp.ne.s32.totalorder %s125, %s139
      %p141 = scmp.eq.s32.totalorder %s26, 0
      %p142 = por %p140, %p141
      %s144 = sadd.s32 %s143, 1
      %p147 = scmp.eq.s32.totalorder %s20, 1
      %p148 = scmp.ne.s32.totalorder %s143, %s145
      %p149 = scmp.eq.s32.totalorder %s20, 0
      %p150 = por %p148, %p149
      %p151 = scmp.ne.s32.totalorder %s143, %s145
      %p152 = scmp.eq.s32.totalorder %s25, 1
      %p153 = por %p151, %p152
      %p154 = scmp.ne.s32.totalorder %s145, %s146
      %p155 = scmp.eq.s32.totalorder %s25, 0
      %p156 = por %p154, %p155
      %p157 = scmp.ne.s32.totalorder %s145, %s146
      %p158 = scmp.eq.s32.totalorder %s26, 1
      %p159 = por %p157, %p158
      %p161 = scmp.ne.s32.totalorder %s146, %s160
      %p162 = scmp.eq.s32.totalorder %s26, 0
      %p163 = por %p161, %p162
      %s165 = sadd.s32 %s164, 1
      %p168 = scmp.eq.s32.totalorder %s20, 1
      %p169 = scmp.ne.s32.totalorder %s164, %s166
      %p170 = scmp.eq.s32.totalorder %s20, 0
      %p171 = por %p169, %p170
      %p172 = scmp.ne.s32.totalorder %s164, %s166
      %p173 = scmp.eq.s32.totalorder %s25, 1
      %p174 = por %p172, %p173
      %p175 = scmp.ne.s32.totalorder %s166, %s167
      %p176 = scmp.eq.s32.totalorder %s25, 0
      %p177 = por %p175, %p176
      %p178 = scmp.ne.s32.totalorder %s166, %s167
      %p179 = scmp.eq.s32.totalorder %s26, 1
      %p180 = por %p178, %p179
      %p182 = scmp.ne.s32.totalorder %s167, %s181
      %p183 = scmp.eq.s32.totalorder %s26, 0
      %p184 = por %p182, %p183
      %s186 = sadd.s32 %s185, 1
      %p189 = scmp.eq.s32.totalorder %s20, 1
      %p190 = scmp.ne.s32.totalorder %s185, %s187
      %p191 = scmp.eq.s32.totalorder %s20, 0
      %p192 = por %p190, %p191
      %p193 = scmp.ne.s32.totalorder %s185, %s187
      %p194 = scmp.eq.s32.totalorder %s25, 1
      %p195 = por %p193, %p194
      %p196 = scmp.ne.s32.totalorder %s187, %s188
      %p197 = scmp.eq.s32.totalorder %s25, 0
      %p198 = por %p196, %p197
      %p199 = scmp.ne.s32.totalorder %s187, %s188
      %p200 = scmp.eq.s32.totalorder %s26, 1
      %p201 = por %p199, %p200
      %p203 = scmp.ne.s32.totalorder %s188, %s202
      %p204 = scmp.eq.s32.totalorder %s26, 0
      %p205 = por %p203, %p204
      %s207 = sadd.s32 %s206, 1
      %p210 = scmp.eq.s32.totalorder %s20, 1
      %p211 = scmp.ne.s32.totalorder %s206, %s208
      %p212 = scmp.eq.s32.totalorder %s20, 0
      %p213 = por %p211, %p212
      %p214 = scmp.ne.s32.totalorder %s206, %s208
      %p215 = scmp.eq.s32.totalorder %s25, 1
      %p216 = por %p214, %p215
      %p217 = scmp.ne.s32.totalorder %s208, %s209
      %p218 = scmp.eq.s32.totalorder %s25, 0
      %p219 = por %p217, %p218
      %p220 = scmp.ne.s32.totalorder %s208, %s209
      %p221 = scmp.eq.s32.totalorder %s26, 1
      %p222 = por %p220, %p221
      %p224 = scmp.ne.s32.totalorder %s209, %s223
      %p225 = scmp.eq.s32.totalorder %s26, 0
      %p226 = por %p224, %p225
      %s228 = sadd.s32 %s227, 1
      %p231 = scmp.eq.s32.totalorder %s20, 1
      %p232 = scmp.ne.s32.totalorder %s227, %s229
      %p233 = scmp.eq.s32.totalorder %s20, 0
      %p234 = por %p232, %p233
      %p235 = scmp.ne.s32.totalorder %s227, %s229
      %p236 = scmp.eq.s32.totalorder %s25, 1
      %p237 = por %p235, %p236
      %p238 = scmp.ne.s32.totalorder %s229, %s230
      %p239 = scmp.eq.s32.totalorder %s25, 0
      %p240 = por %p238, %p239
      %p241 = scmp.ne.s32.totalorder %s229, %s230
      %p242 = scmp.eq.s32.totalorder %s26, 1
      %p243 = por %p241, %p242
      %p245 = scmp.ne.s32.totalorder %s230, %s244
      %p246 = scmp.eq.s32.totalorder %s26, 0
      %p247 = por %p245, %p246
      %s248 = ssub.s32 %s20, %s27
      %p249 = scmp.eq.s32.totalorder %s248, 0
      %s251 = sadd.s32 %s250, 1
      %s252 = scalar_select %p249, %s250, %s251
      %p255 = pneg %p249
      %p256 = scmp.eq.s32.totalorder %s20, 1
      %p257 = por %p255, %p256
      %p258 = scmp.ne.s32.totalorder %s250, %s253
      %p259 = scmp.eq.s32.totalorder %s20, 0
      %p260 = por %p258, %p259
      %p261 = scmp.ne.s32.totalorder %s250, %s253
      %p262 = scmp.eq.s32.totalorder %s25, 1
      %p263 = por %p261, %p262
      %p264 = scmp.ne.s32.totalorder %s253, %s254
      %p265 = scmp.eq.s32.totalorder %s25, 0
      %p266 = por %p264, %p265
      %p267 = scmp.ne.s32.totalorder %s253, %s254
      %p268 = scmp.eq.s32.totalorder %s26, 1
      %p269 = por %p267, %p268
      %p271 = scmp.ne.s32.totalorder %s254, %s270
      %p272 = scmp.eq.s32.totalorder %s26, 0
      %p273 = por %p271, %p272
      %s274 = ssub.s32 %s20, %s27
      %p275 = scmp.eq.s32.totalorder %s274, 0
      %s277 = sadd.s32 %s276, 1
      %s278 = scalar_select %p275, %s276, %s277
      %p281 = pneg %p275
      %p282 = scmp.eq.s32.totalorder %s20, 1
      %p283 = por %p281, %p282
      %p284 = scmp.ne.s32.totalorder %s276, %s279
      %p285 = scmp.eq.s32.totalorder %s20, 0
      %p286 = por %p284, %p285
      %p287 = scmp.ne.s32.totalorder %s276, %s279
      %p288 = scmp.eq.s32.totalorder %s25, 1
      %p289 = por %p287, %p288
      %p290 = scmp.ne.s32.totalorder %s279, %s280
      %p291 = scmp.eq.s32.totalorder %s25, 0
      %p292 = por %p290, %p291
      %p293 = scmp.ne.s32.totalorder %s279, %s280
      %p294 = scmp.eq.s32.totalorder %s26, 1
      %p295 = por %p293, %p294
      %p297 = scmp.ne.s32.totalorder %s280, %s296
      %p298 = scmp.eq.s32.totalorder %s26, 0
      %p299 = por %p297, %p298
      %p300 = scmp.le.s32.totalorder 1, %s20
      %p301 = scmp.lt.s32.totalorder %s20, 3
      %p302 = pnand %p300, %p301
      %p303 = pneg %p302
      // Predicated region
      $region9: #{recurrent_vae_forward.1} parent=5 // pred_check
        _
      $region10: #{recurrent_vae_forward.1} parent=5 // pred_check_branch
        %305 = sbr.rel (%p302) target = $region12
      $region11: #{recurrent_vae_forward.1} parent=5 // pred_region
        %s306 = ssub.s32 %s20, 1
        // Predicated region
        $region13: #{recurrent_vae_forward.1} parent=11 // pred_check
          %p307 = pneg %p93
        $region14: #{recurrent_vae_forward.1} parent=11 // pred_check_branch
          %309 = sbr.rel (%p307) target = $region16
        $region15: #{recurrent_vae_forward.1} parent=11 // pred_region
          %s311 = ssub.s32 16384, 16384
          %312 = vsyncadd [#allocation4], %s311
          %s313 = sshll.u32 [#allocation3], 4
          %s314 = int_to_ptr.vmem [resolvable:$true] %s313
          %319 = dma.hbm_to_vmem [thread:$0]  %s2, 16384, %s314, [#allocation4], 512, 512, 32
        $region16: #{recurrent_vae_forward.1} parent=11 // pred_fallthru
          _
        // Predicated region
        $region17: #{recurrent_vae_forward.1} parent=11 // pred_check
          %p320 = pneg %p114
        $region18: #{recurrent_vae_forward.1} parent=11 // pred_check_branch
          %322 = sbr.rel (%p320) target = $region20
        $region19: #{recurrent_vae_forward.1} parent=11 // pred_region
          _
        $region20: #{recurrent_vae_forward.1} parent=11 // pred_fallthru
          _
        // Predicated region
        $region21: #{recurrent_vae_forward.1} parent=11 // pred_check
          %p323 = pneg %p135
        $region22: #{recurrent_vae_forward.1} parent=11 // pred_check_branch
          %325 = sbr.rel (%p323) target = $region24
        $region23: #{recurrent_vae_forward.1} parent=11 // pred_region
          _
        $region24: #{recurrent_vae_forward.1} parent=11 // pred_fallthru
          _
        // Predicated region
        $region25: #{recurrent_vae_forward.1} parent=11 // pred_check
          %p326 = pneg %p156
        $region26: #{recurrent_vae_forward.1} parent=11 // pred_check_branch
          %328 = sbr.rel (%p326) target = $region28
        $region27: #{recurrent_vae_forward.1} parent=11 // pred_region
          _
        $region28: #{recurrent_vae_forward.1} parent=11 // pred_fallthru
          _
        // Predicated region
        $region29: #{recurrent_vae_forward.1} parent=11 // pred_check
          %p329 = pneg %p177
        $region30: #{recurrent_vae_forward.1} parent=11 // pred_check_branch
          %331 = sbr.rel (%p329) target = $region32
        $region31: #{recurrent_vae_forward.1} parent=11 // pred_region
          %s333 = ssub.s32 16384, 16384
          %334 = vsyncadd [#allocation6], %s333
          %s335 = sshll.u32 [#allocation5], 4
          %s336 = int_to_ptr.vmem [resolvable:$true] %s335
          %341 = dma.hbm_to_vmem [thread:$0]  %s6, 16384, %s336, [#allocation6], 1024, 1024, 64
        $region32: #{recurrent_vae_forward.1} parent=11 // pred_fallthru
          _
        // Predicated region
        $region33: #{recurrent_vae_forward.1} parent=11 // pred_check
          %p342 = pneg %p198
        $region34: #{recurrent_vae_forward.1} parent=11 // pred_check_branch
          %344 = sbr.rel (%p342) target = $region36
        $region35: #{recurrent_vae_forward.1} parent=11 // pred_region
          _
        $region36: #{recurrent_vae_forward.1} parent=11 // pred_fallthru
          _
        // Predicated region
        $region37: #{recurrent_vae_forward.1} parent=11 // pred_check
          %p345 = pneg %p219
        $region38: #{recurrent_vae_forward.1} parent=11 // pred_check_branch
          %347 = sbr.rel (%p345) target = $region40
        $region39: #{recurrent_vae_forward.1} parent=11 // pred_region
          %s349 = ssub.s32 16384, 16384
          %350 = vsyncadd [#allocation6], %s349
          %s351 = sshll.u32 [#allocation7], 4
          %s352 = int_to_ptr.vmem [resolvable:$true] %s351
          %357 = dma.hbm_to_vmem [thread:$0]  %s8, 16384, %s352, [#allocation6], 512, 512, 32
        $region40: #{recurrent_vae_forward.1} parent=11 // pred_fallthru
          _
        // Predicated region
        $region41: #{recurrent_vae_forward.1} parent=11 // pred_check
          %p358 = pneg %p240
        $region42: #{recurrent_vae_forward.1} parent=11 // pred_check_branch
          %360 = sbr.rel (%p358) target = $region44
        $region43: #{recurrent_vae_forward.1} parent=11 // pred_region
          _
        $region44: #{recurrent_vae_forward.1} parent=11 // pred_fallthru
          _
      $region12: #{recurrent_vae_forward.1} parent=5 // pred_fallthru
        _
      %p361 = scmp.lt.s32.totalorder %s20, 2
      // Predicated region
      $region45: #{recurrent_vae_forward.1} parent=5 // pred_check
        %p362 = pneg %p361
      $region46: #{recurrent_vae_forward.1} parent=5 // pred_check_branch
        %364 = sbr.rel (%p362) target = $region48
      $region47: #{recurrent_vae_forward.1} parent=5 // pred_region
        // Predicated region
        $region49: #{recurrent_vae_forward.1} parent=47 // pred_check
          %p365 = pneg %p40
        $region50: #{recurrent_vae_forward.1} parent=47 // pred_check_branch
          %367 = sbr.rel (%p365) target = $region52
        $region51: #{recurrent_vae_forward.1} parent=47 // pred_region
          %s368 = sand.u32 %s30, 1
          %s369 = sand.u32 %s30, 1
          %s370 = smul.addr %s369, 64
          %s371 = scalar_lea.vmem [#allocation2], %s370
          %s372 = smul.addr %s20, 8
          %s373 = scalar_lea.vmem %s0, %s372
          // Predicated region
          $region53: #{recurrent_vae_forward.1} parent=51 // pred_check
            _
          $region54: #{recurrent_vae_forward.1} parent=51 // pred_check_branch
            %375 = sbr.rel (0) target = $region56
          $region55: #{recurrent_vae_forward.1} parent=51 // pred_region
            // Predicated region
            $region57: #{recurrent_vae_forward.1} parent=55 // pred_check
              _
            $region58: #{recurrent_vae_forward.1} parent=55 // pred_check_branch
              %377 = sbr.rel (0) target = $region60
            $region59: #{recurrent_vae_forward.1} parent=55 // pred_region
              // Predicated region
              $region72: #{recurrent_vae_forward.1} parent=59 // pred_check
                _
              $region73: #{recurrent_vae_forward.1} parent=59 // pred_check_branch
                %407 = sbr.rel (0) target = $region75
              $region74: #{recurrent_vae_forward.1} parent=59 // pred_region
                loop: start=0, step=1, limit=1
                $region76: #{recurrent_vae_forward.1} parent=74 // loop_pre_header
                  _
                $region77: #{recurrent_vae_forward.1} parent=74 // loop_header
                  %s409 = sphi 0, %s413
                  %p410 = scmp.ge.s32.totalorder %s409, 1
                  %s414 = sphi %s373, %s373
                  %s415 = sphi %s371, %s371
                $region78: #{recurrent_vae_forward.1} parent=74 // loop_header_branch
                  %412 = sbr.rel (%p410) target = $region82
                $region79: #{recurrent_vae_forward.1} parent=74 // loop_body
                  %v416 = vld [vmem:[%s414] sm:$0xff]
                  %417 = vst [vmem:[%s415] sm:$0xff] %v416
                  %v418 = vld [vmem:[%s414 + $0x10] sm:$0xff]
                  %419 = vst [vmem:[%s415 + $0x8] sm:$0xff] %v418
                  %v420 = vld [vmem:[%s414 + $0x20] sm:$0xff]
                  %421 = vst [vmem:[%s415 + $0x10] sm:$0xff] %v420
                  %v422 = vld [vmem:[%s414 + $0x30] sm:$0xff]
                  %423 = vst [vmem:[%s415 + $0x18] sm:$0xff] %v422
                  %v424 = vld [vmem:[%s414 + $0x40] sm:$0xff]
                  %425 = vst [vmem:[%s415 + $0x20] sm:$0xff] %v424
                  %v426 = vld [vmem:[%s414 + $0x50] sm:$0xff]
                  %427 = vst [vmem:[%s415 + $0x28] sm:$0xff] %v426
                  %v428 = vld [vmem:[%s414 + $0x60] sm:$0xff]
                  %429 = vst [vmem:[%s415 + $0x30] sm:$0xff] %v428
                  %v430 = vld [vmem:[%s414 + $0x70] sm:$0xff]
                  %431 = vst [vmem:[%s415 + $0x38] sm:$0xff] %v430
                $region80: #{recurrent_vae_forward.1} parent=74 // loop_footer
                  %s413 = sadd.s32 1, %s409
                $region81: #{recurrent_vae_forward.1} parent=74 // loop_footer_branch
                  %408 = sbr.rel target = $region77
                $region82: #{recurrent_vae_forward.1} parent=74 // loop_exit
                  _
              $region75: #{recurrent_vae_forward.1} parent=59 // pred_fallthru
                _
              // Predicated region
              $region83: #{recurrent_vae_forward.1} parent=59 // pred_check
                _
              $region84: #{recurrent_vae_forward.1} parent=59 // pred_check_branch
                %433 = sbr.rel target = $region86
              $region85: #{recurrent_vae_forward.1} parent=59 // pred_region
                _
              $region86: #{recurrent_vae_forward.1} parent=59 // pred_fallthru
                _
            $region60: #{recurrent_vae_forward.1} parent=55 // pred_fallthru
              _
            // Predicated region
            $region61: #{recurrent_vae_forward.1} parent=55 // pred_check
              _
            $region62: #{recurrent_vae_forward.1} parent=55 // pred_check_branch
              %379 = sbr.rel target = $region64
            $region63: #{recurrent_vae_forward.1} parent=55 // pred_region
              %s381 = ssub.s32 256, 1
              loop: start=0, step=1, limit=1
              $region65: #{recurrent_vae_forward.1} parent=63 // loop_pre_header
                _
              $region66: #{recurrent_vae_forward.1} parent=63 // loop_header
                %s383 = sphi 0, %s387
                %p384 = scmp.ge.s32.totalorder %s383, 1
                %s388 = sphi %s373, %s373
                %s389 = sphi %s371, %s371
              $region67: #{recurrent_vae_forward.1} parent=63 // loop_header_branch
                %386 = sbr.rel (%p384) target = $region71
              $region68: #{recurrent_vae_forward.1} parent=63 // loop_body
                %v390 = vld [vmem:[%s388] sm:%s381]
                %391 = vst [vmem:[%s389] sm:%s381] %v390
                %v392 = vld [vmem:[%s388 + $0x10] sm:%s381]
                %393 = vst [vmem:[%s389 + $0x8] sm:%s381] %v392
                %v394 = vld [vmem:[%s388 + $0x20] sm:%s381]
                %395 = vst [vmem:[%s389 + $0x10] sm:%s381] %v394
                %v396 = vld [vmem:[%s388 + $0x30] sm:%s381]
                %397 = vst [vmem:[%s389 + $0x18] sm:%s381] %v396
                %v398 = vld [vmem:[%s388 + $0x40] sm:%s381]
                %399 = vst [vmem:[%s389 + $0x20] sm:%s381] %v398
                %v400 = vld [vmem:[%s388 + $0x50] sm:%s381]
                %401 = vst [vmem:[%s389 + $0x28] sm:%s381] %v400
                %v402 = vld [vmem:[%s388 + $0x60] sm:%s381]
                %403 = vst [vmem:[%s389 + $0x30] sm:%s381] %v402
                %v404 = vld [vmem:[%s388 + $0x70] sm:%s381]
                %405 = vst [vmem:[%s389 + $0x38] sm:%s381] %v404
              $region69: #{recurrent_vae_forward.1} parent=63 // loop_footer
                %s387 = sadd.s32 1, %s383
              $region70: #{recurrent_vae_forward.1} parent=63 // loop_footer_branch
                %382 = sbr.rel target = $region66
              $region71: #{recurrent_vae_forward.1} parent=63 // loop_exit
                _
            $region64: #{recurrent_vae_forward.1} parent=55 // pred_fallthru
              _
          $region56: #{recurrent_vae_forward.1} parent=51 // pred_fallthru
            _
          %434 = vnop
        $region52: #{recurrent_vae_forward.1} parent=47 // pred_fallthru
          _
        // Predicated region
        $region87: #{recurrent_vae_forward.1} parent=47 // pred_check
          %p435 = pneg %p66
        $region88: #{recurrent_vae_forward.1} parent=47 // pred_check_branch
          %437 = sbr.rel (%p435) target = $region90
        $region89: #{recurrent_vae_forward.1} parent=47 // pred_region
          %p438 = scmp.lt.s32.totalorder %s20, 1
          %s439 = scalar_select %p438, %s20, 1
          %s440 = smul.addr %s439, 8
          %s441 = scalar_lea.vmem %s1, %s440
        $region90: #{recurrent_vae_forward.1} parent=47 // pred_fallthru
          _
      $region48: #{recurrent_vae_forward.1} parent=5 // pred_fallthru
        _
      %p442 = scmp.le.s32.totalorder 1, %s20
      %p443 = scmp.lt.s32.totalorder %s20, 3
      %p444 = pnand %p442, %p443
      %p445 = pneg %p444
      // Predicated region
      $region91: #{recurrent_vae_forward.1} parent=5 // pred_check
        _
      $region92: #{recurrent_vae_forward.1} parent=5 // pred_check_branch
        %447 = sbr.rel (%p444) target = $region94
      $region93: #{recurrent_vae_forward.1} parent=5 // pred_region
        %s448 = ssub.s32 %s20, 1
        %s449 = sand.u32 %s33, 1
        %s450 = sand.u32 %s33, 1
        %s451 = smul.addr %s450, 64
        %s452 = scalar_lea.vmem [#allocation2], %s451
        // Predicated region
        $region95: #{recurrent_vae_forward.1} parent=93 // pred_check
          %p453 = pneg %p46
        $region96: #{recurrent_vae_forward.1} parent=93 // pred_check_branch
          %455 = sbr.rel (%p453) target = $region98
        $region97: #{recurrent_vae_forward.1} parent=93 // pred_region
          _
        $region98: #{recurrent_vae_forward.1} parent=93 // pred_fallthru
          _
        // Predicated region
        $region99: #{recurrent_vae_forward.1} parent=93 // pred_check
          %p456 = pneg %p93
        $region100: #{recurrent_vae_forward.1} parent=93 // pred_check_branch
          %458 = sbr.rel (%p456) target = $region102
        $region101: #{recurrent_vae_forward.1} parent=93 // pred_region
          %459 = dma.done [#allocation4], 16384
        $region102: #{recurrent_vae_forward.1} parent=93 // pred_fallthru
          _
        // Predicated region
        $region103: #{recurrent_vae_forward.1} parent=93 // pred_check
          %p460 = pneg %p177
        $region104: #{recurrent_vae_forward.1} parent=93 // pred_check_branch
          %462 = sbr.rel (%p460) target = $region106
        $region105: #{recurrent_vae_forward.1} parent=93 // pred_region
          %463 = dma.done [#allocation6], 16384
        $region106: #{recurrent_vae_forward.1} parent=93 // pred_fallthru
          _
        // Predicated region
        $region107: #{recurrent_vae_forward.1} parent=93 // pred_check
          %p464 = pneg %p219
        $region108: #{recurrent_vae_forward.1} parent=93 // pred_check_branch
          %466 = sbr.rel (%p464) target = $region110
        $region109: #{recurrent_vae_forward.1} parent=93 // pred_region
          %467 = dma.done [#allocation6], 16384
        $region110: #{recurrent_vae_forward.1} parent=93 // pred_fallthru
          _
        %s468 = sand.u32 %s33, 1
        %s469 = sand.u32 %s33, 1
        %s470 = smul.addr %s469, 64
        %s471 = scalar_lea.vmem [#allocation2], %s470
        %p472 = pneg %p46
        %p473 = pneg %p43
        %p474 = scmp.lt.s32.totalorder %s25, 1
        %s475 = scalar_select %p474, %s25, 1
        %s476 = smul.addr %s475, 8
        %s477 = scalar_lea.vmem %s1, %s476
        %p478 = pneg %p72
        %p479 = pneg %p69
        %p480 = pneg %p93
        %p481 = pneg %p90
        %p482 = pneg %p114
        %p483 = pneg %p111
        %p484 = pneg %p135
        %p485 = pneg %p132
        %p486 = pneg %p156
        %p487 = pneg %p153
        %p488 = pneg %p177
        %p489 = pneg %p174
        %p490 = pneg %p198
        %p491 = pneg %p195
        %p492 = pneg %p219
        %p493 = pneg %p216
        %p494 = pneg %p240
        %p495 = pneg %p237
        %p496 = pneg %p266
        %p497 = pneg %p263
        %s498 = sand.u32 %s253, 1
        %s499 = sand.u32 %s253, 1
        %s500 = smul.addr %s499, 64
        %s501 = scalar_lea.vmem [#allocation8], %s500
        %p502 = pneg %p292
        %p503 = pneg %p289
        %p504 = scmp.lt.s32.totalorder %s25, 1
        %s505 = scalar_select %p504, %s25, 1
        %s506 = smul.addr %s505, 8
        %s507 = scalar_lea.vmem %s11, %s506
        %p508 = scmp.lt.s32.totalorder %s25, 1
        %s509 = scalar_select %p508, %s25, 1
        %s510 = smul.addr %s509, 8
        %s511 = scalar_lea.vmem %s1, %s510
        %p512 = scmp.lt.s32.totalorder %s25, 1
        %s513 = scalar_select %p512, %s25, 1
        %s514 = smul.addr %s513, 8
        %s515 = scalar_lea.vmem %s11, %s514
        %v516 = vld [vmem:[#allocation3] sm:$0xff]
        %v517 = vld [vmem:[#allocation3 + $0x8] sm:$0xff]
        %v518 = vld [vmem:[#allocation3 + $0x10] sm:$0xff]
        %v519 = vld [vmem:[#allocation3 + $0x18] sm:$0xff]
        %v520 = vld [vmem:[#allocation3 + $0x20] sm:$0xff]
        %v521 = vld [vmem:[#allocation3 + $0x28] sm:$0xff]
        %v522 = vld [vmem:[#allocation3 + $0x30] sm:$0xff]
        %v523 = vld [vmem:[#allocation3 + $0x38] sm:$0xff]
        %v524 = vld [vmem:[#allocation3 + $0x40] sm:$0xff]
        %v525 = vld [vmem:[#allocation3 + $0x48] sm:$0xff]
        %v526 = vld [vmem:[#allocation3 + $0x50] sm:$0xff]
        %v527 = vld [vmem:[#allocation3 + $0x58] sm:$0xff]
        %v528 = vld [vmem:[#allocation3 + $0x60] sm:$0xff]
        %v529 = vld [vmem:[#allocation3 + $0x68] sm:$0xff]
        %v530 = vld [vmem:[#allocation3 + $0x70] sm:$0xff]
        %v531 = vld [vmem:[#allocation3 + $0x78] sm:$0xff]
        %v532 = vld [vmem:[#allocation3 + $0x80] sm:$0xff]
        %v533 = vld [vmem:[#allocation3 + $0x88] sm:$0xff]
        %v534 = vld [vmem:[#allocation3 + $0x90] sm:$0xff]
        %v535 = vld [vmem:[#allocation3 + $0x98] sm:$0xff]
        %v536 = vld [vmem:[#allocation3 + $0xa0] sm:$0xff]
        %v537 = vld [vmem:[#allocation3 + $0xa8] sm:$0xff]
        %v538 = vld [vmem:[#allocation3 + $0xb0] sm:$0xff]
        %v539 = vld [vmem:[#allocation3 + $0xb8] sm:$0xff]
        %v540 = vld [vmem:[#allocation3 + $0xc0] sm:$0xff]
        %v541 = vld [vmem:[#allocation3 + $0xc8] sm:$0xff]
        %v542 = vld [vmem:[#allocation3 + $0xd0] sm:$0xff]
        %v543 = vld [vmem:[#allocation3 + $0xd8] sm:$0xff]
        %v544 = vld [vmem:[#allocation3 + $0xe0] sm:$0xff]
        %v545 = vld [vmem:[#allocation3 + $0xe8] sm:$0xff]
        %v546 = vld [vmem:[#allocation3 + $0xf0] sm:$0xff]
        %v547 = vld [vmem:[#allocation3 + $0xf8] sm:$0xff]
        %v548 = vld [vmem:[#allocation3 + $0x100] sm:$0xff]
        %v549 = vld [vmem:[#allocation3 + $0x108] sm:$0xff]
        %v550 = vld [vmem:[#allocation3 + $0x110] sm:$0xff]
        %v551 = vld [vmem:[#allocation3 + $0x118] sm:$0xff]
        %v552 = vld [vmem:[#allocation3 + $0x120] sm:$0xff]
        %v553 = vld [vmem:[#allocation3 + $0x128] sm:$0xff]
        %v554 = vld [vmem:[#allocation3 + $0x130] sm:$0xff]
        %v555 = vld [vmem:[#allocation3 + $0x138] sm:$0xff]
        %v556 = vld [vmem:[#allocation3 + $0x140] sm:$0xff]
        %v557 = vld [vmem:[#allocation3 + $0x148] sm:$0xff]
        %v558 = vld [vmem:[#allocation3 + $0x150] sm:$0xff]
        %v559 = vld [vmem:[#allocation3 + $0x158] sm:$0xff]
        %v560 = vld [vmem:[#allocation3 + $0x160] sm:$0xff]
        %v561 = vld [vmem:[#allocation3 + $0x168] sm:$0xff]
        %v562 = vld [vmem:[#allocation3 + $0x170] sm:$0xff]
        %v563 = vld [vmem:[#allocation3 + $0x178] sm:$0xff]
        %v564 = vld [vmem:[#allocation3 + $0x180] sm:$0xff]
        %v565 = vld [vmem:[#allocation3 + $0x188] sm:$0xff]
        %v566 = vld [vmem:[#allocation3 + $0x190] sm:$0xff]
        %v567 = vld [vmem:[#allocation3 + $0x198] sm:$0xff]
        %v568 = vld [vmem:[#allocation3 + $0x1a0] sm:$0xff]
        %v569 = vld [vmem:[#allocation3 + $0x1a8] sm:$0xff]
        %v570 = vld [vmem:[#allocation3 + $0x1b0] sm:$0xff]
        %v571 = vld [vmem:[#allocation3 + $0x1b8] sm:$0xff]
        %v572 = vld [vmem:[#allocation3 + $0x1c0] sm:$0xff]
        %v573 = vld [vmem:[#allocation3 + $0x1c8] sm:$0xff]
        %v574 = vld [vmem:[#allocation3 + $0x1d0] sm:$0xff]
        %v575 = vld [vmem:[#allocation3 + $0x1d8] sm:$0xff]
        %v576 = vld [vmem:[#allocation3 + $0x1e0] sm:$0xff]
        %v577 = vld [vmem:[#allocation3 + $0x1e8] sm:$0xff]
        %v578 = vld [vmem:[#allocation3 + $0x1f0] sm:$0xff]
        %v579 = vld [vmem:[#allocation3 + $0x1f8] sm:$0xff]
        %v580 = vld [vmem:[#allocation3 + $0x200] sm:$0xff]
        %v581 = vld [vmem:[#allocation3 + $0x208] sm:$0xff]
        %v582 = vld [vmem:[#allocation3 + $0x210] sm:$0xff]
        %v583 = vld [vmem:[#allocation3 + $0x218] sm:$0xff]
        %v584 = vld [vmem:[#allocation3 + $0x220] sm:$0xff]
        %v585 = vld [vmem:[#allocation3 + $0x228] sm:$0xff]
        %v586 = vld [vmem:[#allocation3 + $0x230] sm:$0xff]
        %v587 = vld [vmem:[#allocation3 + $0x238] sm:$0xff]
        %v588 = vld [vmem:[#allocation3 + $0x240] sm:$0xff]
        %v589 = vld [vmem:[#allocation3 + $0x248] sm:$0xff]
        %v590 = vld [vmem:[#allocation3 + $0x250] sm:$0xff]
        %v591 = vld [vmem:[#allocation3 + $0x258] sm:$0xff]
        %v592 = vld [vmem:[#allocation3 + $0x260] sm:$0xff]
        %v593 = vld [vmem:[#allocation3 + $0x268] sm:$0xff]
        %v594 = vld [vmem:[#allocation3 + $0x270] sm:$0xff]
        %v595 = vld [vmem:[#allocation3 + $0x278] sm:$0xff]
        %v596 = vld [vmem:[#allocation3 + $0x280] sm:$0xff]
        %v597 = vld [vmem:[#allocation3 + $0x288] sm:$0xff]
        %v598 = vld [vmem:[#allocation3 + $0x290] sm:$0xff]
        %v599 = vld [vmem:[#allocation3 + $0x298] sm:$0xff]
        %v600 = vld [vmem:[#allocation3 + $0x2a0] sm:$0xff]
        %v601 = vld [vmem:[#allocation3 + $0x2a8] sm:$0xff]
        %v602 = vld [vmem:[#allocation3 + $0x2b0] sm:$0xff]
        %v603 = vld [vmem:[#allocation3 + $0x2b8] sm:$0xff]
        %v604 = vld [vmem:[#allocation3 + $0x2c0] sm:$0xff]
        %v605 = vld [vmem:[#allocation3 + $0x2c8] sm:$0xff]
        %v606 = vld [vmem:[#allocation3 + $0x2d0] sm:$0xff]
        %v607 = vld [vmem:[#allocation3 + $0x2d8] sm:$0xff]
        %v608 = vld [vmem:[#allocation3 + $0x2e0] sm:$0xff]
        %v609 = vld [vmem:[#allocation3 + $0x2e8] sm:$0xff]
        %v610 = vld [vmem:[#allocation3 + $0x2f0] sm:$0xff]
        %v611 = vld [vmem:[#allocation3 + $0x2f8] sm:$0xff]
        %v612 = vld [vmem:[#allocation3 + $0x300] sm:$0xff]
        %v613 = vld [vmem:[#allocation3 + $0x308] sm:$0xff]
        %v614 = vld [vmem:[#allocation3 + $0x310] sm:$0xff]
        %v615 = vld [vmem:[#allocation3 + $0x318] sm:$0xff]
        %v616 = vld [vmem:[#allocation3 + $0x320] sm:$0xff]
        %v617 = vld [vmem:[#allocation3 + $0x328] sm:$0xff]
        %v618 = vld [vmem:[#allocation3 + $0x330] sm:$0xff]
        %v619 = vld [vmem:[#allocation3 + $0x338] sm:$0xff]
        %v620 = vld [vmem:[#allocation3 + $0x340] sm:$0xff]
        %v621 = vld [vmem:[#allocation3 + $0x348] sm:$0xff]
        %v622 = vld [vmem:[#allocation3 + $0x350] sm:$0xff]
        %v623 = vld [vmem:[#allocation3 + $0x358] sm:$0xff]
        %v624 = vld [vmem:[#allocation3 + $0x360] sm:$0xff]
        %v625 = vld [vmem:[#allocation3 + $0x368] sm:$0xff]
        %v626 = vld [vmem:[#allocation3 + $0x370] sm:$0xff]
        %v627 = vld [vmem:[#allocation3 + $0x378] sm:$0xff]
        %v628 = vld [vmem:[#allocation3 + $0x380] sm:$0xff]
        %v629 = vld [vmem:[#allocation3 + $0x388] sm:$0xff]
        %v630 = vld [vmem:[#allocation3 + $0x390] sm:$0xff]
        %v631 = vld [vmem:[#allocation3 + $0x398] sm:$0xff]
        %v632 = vld [vmem:[#allocation3 + $0x3a0] sm:$0xff]
        %v633 = vld [vmem:[#allocation3 + $0x3a8] sm:$0xff]
        %v634 = vld [vmem:[#allocation3 + $0x3b0] sm:$0xff]
        %v635 = vld [vmem:[#allocation3 + $0x3b8] sm:$0xff]
        %v636 = vld [vmem:[#allocation3 + $0x3c0] sm:$0xff]
        %v637 = vld [vmem:[#allocation3 + $0x3c8] sm:$0xff]
        %v638 = vld [vmem:[#allocation3 + $0x3d0] sm:$0xff]
        %v639 = vld [vmem:[#allocation3 + $0x3d8] sm:$0xff]
        %v640 = vld [vmem:[#allocation3 + $0x3e0] sm:$0xff]
        %v641 = vld [vmem:[#allocation3 + $0x3e8] sm:$0xff]
        %v642 = vld [vmem:[#allocation3 + $0x3f0] sm:$0xff]
        %v643 = vld [vmem:[#allocation3 + $0x3f8] sm:$0xff]
        %v644 = vld [vmem:[%s3] sm:$0xf]
        %v645 = vld [vmem:[#allocation7] sm:$0xff]
        %v646 = vld [vmem:[#allocation7 + $0x8] sm:$0xff]
        %v647 = vld [vmem:[#allocation7 + $0x10] sm:$0xff]
        %v648 = vld [vmem:[#allocation7 + $0x18] sm:$0xff]
        %v649 = vld [vmem:[#allocation7 + $0x20] sm:$0xff]
        %v650 = vld [vmem:[#allocation7 + $0x28] sm:$0xff]
        %v651 = vld [vmem:[#allocation7 + $0x30] sm:$0xff]
        %v652 = vld [vmem:[#allocation7 + $0x38] sm:$0xff]
        %v653 = vld [vmem:[#allocation7 + $0x40] sm:$0xff]
        %v654 = vld [vmem:[#allocation7 + $0x48] sm:$0xff]
        %v655 = vld [vmem:[#allocation7 + $0x50] sm:$0xff]
        %v656 = vld [vmem:[#allocation7 + $0x58] sm:$0xff]
        %v657 = vld [vmem:[#allocation7 + $0x60] sm:$0xff]
        %v658 = vld [vmem:[#allocation7 + $0x68] sm:$0xff]
        %v659 = vld [vmem:[#allocation7 + $0x70] sm:$0xff]
        %v660 = vld [vmem:[#allocation7 + $0x78] sm:$0xff]
        %v661 = vld [vmem:[#allocation7 + $0x80] sm:$0xff]
        %v662 = vld [vmem:[#allocation7 + $0x88] sm:$0xff]
        %v663 = vld [vmem:[#allocation7 + $0x90] sm:$0xff]
        %v664 = vld [vmem:[#allocation7 + $0x98] sm:$0xff]
        %v665 = vld [vmem:[#allocation7 + $0xa0] sm:$0xff]
        %v666 = vld [vmem:[#allocation7 + $0xa8] sm:$0xff]
        %v667 = vld [vmem:[#allocation7 + $0xb0] sm:$0xff]
        %v668 = vld [vmem:[#allocation7 + $0xb8] sm:$0xff]
        %v669 = vld [vmem:[#allocation7 + $0xc0] sm:$0xff]
        %v670 = vld [vmem:[#allocation7 + $0xc8] sm:$0xff]
        %v671 = vld [vmem:[#allocation7 + $0xd0] sm:$0xff]
        %v672 = vld [vmem:[#allocation7 + $0xd8] sm:$0xff]
        %v673 = vld [vmem:[#allocation7 + $0xe0] sm:$0xff]
        %v674 = vld [vmem:[#allocation7 + $0xe8] sm:$0xff]
        %v675 = vld [vmem:[#allocation7 + $0xf0] sm:$0xff]
        %v676 = vld [vmem:[#allocation7 + $0xf8] sm:$0xff]
        %v677 = vld [vmem:[#allocation7 + $0x100] sm:$0xff]
        %v678 = vld [vmem:[#allocation7 + $0x108] sm:$0xff]
        %v679 = vld [vmem:[#allocation7 + $0x110] sm:$0xff]
        %v680 = vld [vmem:[#allocation7 + $0x118] sm:$0xff]
        %v681 = vld [vmem:[#allocation7 + $0x120] sm:$0xff]
        %v682 = vld [vmem:[#allocation7 + $0x128] sm:$0xff]
        %v683 = vld [vmem:[#allocation7 + $0x130] sm:$0xff]
        %v684 = vld [vmem:[#allocation7 + $0x138] sm:$0xff]
        %v685 = vld [vmem:[#allocation7 + $0x140] sm:$0xff]
        %v686 = vld [vmem:[#allocation7 + $0x148] sm:$0xff]
        %v687 = vld [vmem:[#allocation7 + $0x150] sm:$0xff]
        %v688 = vld [vmem:[#allocation7 + $0x158] sm:$0xff]
        %v689 = vld [vmem:[#allocation7 + $0x160] sm:$0xff]
        %v690 = vld [vmem:[#allocation7 + $0x168] sm:$0xff]
        %v691 = vld [vmem:[#allocation7 + $0x170] sm:$0xff]
        %v692 = vld [vmem:[#allocation7 + $0x178] sm:$0xff]
        %v693 = vld [vmem:[#allocation7 + $0x180] sm:$0xff]
        %v694 = vld [vmem:[#allocation7 + $0x188] sm:$0xff]
        %v695 = vld [vmem:[#allocation7 + $0x190] sm:$0xff]
        %v696 = vld [vmem:[#allocation7 + $0x198] sm:$0xff]
        %v697 = vld [vmem:[#allocation7 + $0x1a0] sm:$0xff]
        %v698 = vld [vmem:[#allocation7 + $0x1a8] sm:$0xff]
        %v699 = vld [vmem:[#allocation7 + $0x1b0] sm:$0xff]
        %v700 = vld [vmem:[#allocation7 + $0x1b8] sm:$0xff]
        %v701 = vld [vmem:[#allocation7 + $0x1c0] sm:$0xff]
        %v702 = vld [vmem:[#allocation7 + $0x1c8] sm:$0xff]
        %v703 = vld [vmem:[#allocation7 + $0x1d0] sm:$0xff]
        %v704 = vld [vmem:[#allocation7 + $0x1d8] sm:$0xff]
        %v705 = vld [vmem:[#allocation7 + $0x1e0] sm:$0xff]
        %v706 = vld [vmem:[#allocation7 + $0x1e8] sm:$0xff]
        %v707 = vld [vmem:[#allocation7 + $0x1f0] sm:$0xff]
        %v708 = vld [vmem:[#allocation7 + $0x1f8] sm:$0xff]
        %v709 = vld [vmem:[#allocation7 + $0x200] sm:$0xff]
        %v710 = vld [vmem:[#allocation7 + $0x208] sm:$0xff]
        %v711 = vld [vmem:[#allocation7 + $0x210] sm:$0xff]
        %v712 = vld [vmem:[#allocation7 + $0x218] sm:$0xff]
        %v713 = vld [vmem:[#allocation7 + $0x220] sm:$0xff]
        %v714 = vld [vmem:[#allocation7 + $0x228] sm:$0xff]
        %v715 = vld [vmem:[#allocation7 + $0x230] sm:$0xff]
        %v716 = vld [vmem:[#allocation7 + $0x238] sm:$0xff]
        %v717 = vld [vmem:[#allocation7 + $0x240] sm:$0xff]
        %v718 = vld [vmem:[#allocation7 + $0x248] sm:$0xff]
        %v719 = vld [vmem:[#allocation7 + $0x250] sm:$0xff]
        %v720 = vld [vmem:[#allocation7 + $0x258] sm:$0xff]
        %v721 = vld [vmem:[#allocation7 + $0x260] sm:$0xff]
        %v722 = vld [vmem:[#allocation7 + $0x268] sm:$0xff]
        %v723 = vld [vmem:[#allocation7 + $0x270] sm:$0xff]
        %v724 = vld [vmem:[#allocation7 + $0x278] sm:$0xff]
        %v725 = vld [vmem:[#allocation7 + $0x280] sm:$0xff]
        %v726 = vld [vmem:[#allocation7 + $0x288] sm:$0xff]
        %v727 = vld [vmem:[#allocation7 + $0x290] sm:$0xff]
        %v728 = vld [vmem:[#allocation7 + $0x298] sm:$0xff]
        %v729 = vld [vmem:[#allocation7 + $0x2a0] sm:$0xff]
        %v730 = vld [vmem:[#allocation7 + $0x2a8] sm:$0xff]
        %v731 = vld [vmem:[#allocation7 + $0x2b0] sm:$0xff]
        %v732 = vld [vmem:[#allocation7 + $0x2b8] sm:$0xff]
        %v733 = vld [vmem:[#allocation7 + $0x2c0] sm:$0xff]
        %v734 = vld [vmem:[#allocation7 + $0x2c8] sm:$0xff]
        %v735 = vld [vmem:[#allocation7 + $0x2d0] sm:$0xff]
        %v736 = vld [vmem:[#allocation7 + $0x2d8] sm:$0xff]
        %v737 = vld [vmem:[#allocation7 + $0x2e0] sm:$0xff]
        %v738 = vld [vmem:[#allocation7 + $0x2e8] sm:$0xff]
        %v739 = vld [vmem:[#allocation7 + $0x2f0] sm:$0xff]
        %v740 = vld [vmem:[#allocation7 + $0x2f8] sm:$0xff]
        %v741 = vld [vmem:[#allocation7 + $0x300] sm:$0xff]
        %v742 = vld [vmem:[#allocation7 + $0x308] sm:$0xff]
        %v743 = vld [vmem:[#allocation7 + $0x310] sm:$0xff]
        %v744 = vld [vmem:[#allocation7 + $0x318] sm:$0xff]
        %v745 = vld [vmem:[#allocation7 + $0x320] sm:$0xff]
        %v746 = vld [vmem:[#allocation7 + $0x328] sm:$0xff]
        %v747 = vld [vmem:[#allocation7 + $0x330] sm:$0xff]
        %v748 = vld [vmem:[#allocation7 + $0x338] sm:$0xff]
        %v749 = vld [vmem:[#allocation7 + $0x340] sm:$0xff]
        %v750 = vld [vmem:[#allocation7 + $0x348] sm:$0xff]
        %v751 = vld [vmem:[#allocation7 + $0x350] sm:$0xff]
        %v752 = vld [vmem:[#allocation7 + $0x358] sm:$0xff]
        %v753 = vld [vmem:[#allocation7 + $0x360] sm:$0xff]
        %v754 = vld [vmem:[#allocation7 + $0x368] sm:$0xff]
        %v755 = vld [vmem:[#allocation7 + $0x370] sm:$0xff]
        %v756 = vld [vmem:[#allocation7 + $0x378] sm:$0xff]
        %v757 = vld [vmem:[#allocation7 + $0x380] sm:$0xff]
        %v758 = vld [vmem:[#allocation7 + $0x388] sm:$0xff]
        %v759 = vld [vmem:[#allocation7 + $0x390] sm:$0xff]
        %v760 = vld [vmem:[#allocation7 + $0x398] sm:$0xff]
        %v761 = vld [vmem:[#allocation7 + $0x3a0] sm:$0xff]
        %v762 = vld [vmem:[#allocation7 + $0x3a8] sm:$0xff]
        %v763 = vld [vmem:[#allocation7 + $0x3b0] sm:$0xff]
        %v764 = vld [vmem:[#allocation7 + $0x3b8] sm:$0xff]
        %v765 = vld [vmem:[#allocation7 + $0x3c0] sm:$0xff]
        %v766 = vld [vmem:[#allocation7 + $0x3c8] sm:$0xff]
        %v767 = vld [vmem:[#allocation7 + $0x3d0] sm:$0xff]
        %v768 = vld [vmem:[#allocation7 + $0x3d8] sm:$0xff]
        %v769 = vld [vmem:[#allocation7 + $0x3e0] sm:$0xff]
        %v770 = vld [vmem:[#allocation7 + $0x3e8] sm:$0xff]
        %v771 = vld [vmem:[#allocation7 + $0x3f0] sm:$0xff]
        %v772 = vld [vmem:[#allocation7 + $0x3f8] sm:$0xff]
        %v773 = vld [vmem:[%s9] sm:$0xf]
        %v774 = vld [vmem:[%s452] sm:$0xff]
        %v776 = vlaneseq
        %v777 = vshrl.u32 %v776, 7
        %v778 = vsub.s32 0, %v777
        %v779 = vrot.slane %v644, %v778
        %v780 = vlaneseq
        %v781 = vshrl.u32 %v780, 7
        %v782 = vsub.s32 1, %v781
        %v783 = vrot.slane %v644, %v782
        %v784 = vlaneseq
        %v785 = vshrl.u32 %v784, 7
        %v786 = vsub.s32 2, %v785
        %v787 = vrot.slane %v644, %v786
        %v788 = vlaneseq
        %v789 = vshrl.u32 %v788, 7
        %v790 = vsub.s32 3, %v789
        %v791 = vrot.slane %v644, %v790
        %796 = vmatprep.subr.mxu0 %v577
        %797 = vmatpush1.msra.mxu0 %v576
        %798 = vmatprep.subr.mxu0 %v573
        %799 = vmatpush1.msra.mxu0 %v572
        %800 = vmatprep.subr.mxu0 %v569
        %801 = vmatpush1.msra.mxu0 %v568
        %802 = vmatprep.subr.mxu0 %v565
        %803 = vmatpush1.msra.mxu0 %v564
        %804 = vmatprep.subr.mxu0 %v561
        %805 = vmatpush1.msra.mxu0 %v560
        %806 = vmatprep.subr.mxu0 %v557
        %807 = vmatpush1.msra.mxu0 %v556
        %808 = vmatprep.subr.mxu0 %v553
        %809 = vmatpush1.msra.mxu0 %v552
        %810 = vmatprep.subr.mxu0 %v549
        %811 = vmatpush1.msra.mxu0 %v548
        %812 = vmatprep.subr.mxu0 %v545
        %813 = vmatpush1.msra.mxu0 %v544
        %814 = vmatprep.subr.mxu0 %v541
        %815 = vmatpush1.msra.mxu0 %v540
        %816 = vmatprep.subr.mxu0 %v537
        %817 = vmatpush1.msra.mxu0 %v536
        %818 = vmatprep.subr.mxu0 %v533
        %819 = vmatpush1.msra.mxu0 %v532
        %820 = vmatprep.subr.mxu0 %v529
        %821 = vmatpush1.msra.mxu0 %v528
        %822 = vmatprep.subr.mxu0 %v525
        %823 = vmatpush1.msra.mxu0 %v524
        %824 = vmatprep.subr.mxu0 %v521
        %825 = vmatpush1.msra.mxu0 %v520
        %826 = vmatprep.subr.mxu0 %v517
        %827 = vmatpush1.msra.mxu0 %v516
        %828 = vmatprep.subr.mxu0 %v641
        %829 = vmatpush2.msra.mxu0 %v640
        %830 = vmatprep.subr.mxu0 %v637
        %831 = vmatpush2.msra.mxu0 %v636
        %832 = vmatprep.subr.mxu0 %v633
        %833 = vmatpush2.msra.mxu0 %v632
        %834 = vmatprep.subr.mxu0 %v629
        %835 = vmatpush2.msra.mxu0 %v628
        %836 = vmatprep.subr.mxu0 %v625
        %837 = vmatpush2.msra.mxu0 %v624
        %838 = vmatprep.subr.mxu0 %v621
        %839 = vmatpush2.msra.mxu0 %v620
        %840 = vmatprep.subr.mxu0 %v617
        %841 = vmatpush2.msra.mxu0 %v616
        %842 = vmatprep.subr.mxu0 %v613
        %843 = vmatpush2.msra.mxu0 %v612
        %844 = vmatprep.subr.mxu0 %v609
        %845 = vmatpush2.msra.mxu0 %v608
        %846 = vmatprep.subr.mxu0 %v605
        %847 = vmatpush2.msra.mxu0 %v604
        %848 = vmatprep.subr.mxu0 %v601
        %849 = vmatpush2.msra.mxu0 %v600
        %850 = vmatprep.subr.mxu0 %v597
        %851 = vmatpush2.msra.mxu0 %v596
        %852 = vmatprep.subr.mxu0 %v593
        %853 = vmatpush2.msra.mxu0 %v592
        %854 = vmatprep.subr.mxu0 %v589
        %855 = vmatpush2.msra.mxu0 %v588
        %856 = vmatprep.subr.mxu0 %v585
        %857 = vmatpush2.msra.mxu0 %v584
        %858 = vmatprep.subr.mxu0 %v581
        %859 = vmatpush2.msra.mxu0 %v580
        %860 = vmatprep.mubr.f32.mxu0 0.0
        %861 = vmatmul.mubr.f32.gmra.mxu0 %v774
        %v862 = vpop.f32.mrf.mxu0
        %v863 = vadd.f32 %v779, %v862
        %v864 = vpop.f32.mrf.mxu0
        %v865 = vadd.f32 %v783, %v864
        %866 = vdwg.mxu0
        %867 = vmatprep.subr.mxu0 %v579
        %868 = vmatpush1.msra.mxu0 %v578
        %869 = vmatprep.subr.mxu0 %v575
        %870 = vmatpush1.msra.mxu0 %v574
        %871 = vmatprep.subr.mxu0 %v571
        %872 = vmatpush1.msra.mxu0 %v570
        %873 = vmatprep.subr.mxu0 %v567
        %874 = vmatpush1.msra.mxu0 %v566
        %875 = vmatprep.subr.mxu0 %v563
        %876 = vmatpush1.msra.mxu0 %v562
        %877 = vmatprep.subr.mxu0 %v559
        %878 = vmatpush1.msra.mxu0 %v558
        %879 = vmatprep.subr.mxu0 %v555
        %880 = vmatpush1.msra.mxu0 %v554
        %881 = vmatprep.subr.mxu0 %v551
        %882 = vmatpush1.msra.mxu0 %v550
        %883 = vmatprep.subr.mxu0 %v547
        %884 = vmatpush1.msra.mxu0 %v546
        %885 = vmatprep.subr.mxu0 %v543
        %886 = vmatpush1.msra.mxu0 %v542
        %887 = vmatprep.subr.mxu0 %v539
        %888 = vmatpush1.msra.mxu0 %v538
        %889 = vmatprep.subr.mxu0 %v535
        %890 = vmatpush1.msra.mxu0 %v534
        %891 = vmatprep.subr.mxu0 %v531
        %892 = vmatpush1.msra.mxu0 %v530
        %893 = vmatprep.subr.mxu0 %v527
        %894 = vmatpush1.msra.mxu0 %v526
        %895 = vmatprep.subr.mxu0 %v523
        %896 = vmatpush1.msra.mxu0 %v522
        %897 = vmatprep.subr.mxu0 %v519
        %898 = vmatpush1.msra.mxu0 %v518
        %899 = vmatprep.subr.mxu0 %v643
        %900 = vmatpush2.msra.mxu0 %v642
        %901 = vmatprep.subr.mxu0 %v639
        %902 = vmatpush2.msra.mxu0 %v638
        %903 = vmatprep.subr.mxu0 %v635
        %904 = vmatpush2.msra.mxu0 %v634
        %905 = vmatprep.subr.mxu0 %v631
        %906 = vmatpush2.msra.mxu0 %v630
        %907 = vmatprep.subr.mxu0 %v627
        %908 = vmatpush2.msra.mxu0 %v626
        %909 = vmatprep.subr.mxu0 %v623
        %910 = vmatpush2.msra.mxu0 %v622
        %911 = vmatprep.subr.mxu0 %v619
        %912 = vmatpush2.msra.mxu0 %v618
        %913 = vmatprep.subr.mxu0 %v615
        %914 = vmatpush2.msra.mxu0 %v614
        %915 = vmatprep.subr.mxu0 %v611
        %916 = vmatpush2.msra.mxu0 %v610
        %917 = vmatprep.subr.mxu0 %v607
        %918 = vmatpush2.msra.mxu0 %v606
        %919 = vmatprep.subr.mxu0 %v603
        %920 = vmatpush2.msra.mxu0 %v602
        %921 = vmatprep.subr.mxu0 %v599
        %922 = vmatpush2.msra.mxu0 %v598
        %923 = vmatprep.subr.mxu0 %v595
        %924 = vmatpush2.msra.mxu0 %v594
        %925 = vmatprep.subr.mxu0 %v591
        %926 = vmatpush2.msra.mxu0 %v590
        %927 = vmatprep.subr.mxu0 %v587
        %928 = vmatpush2.msra.mxu0 %v586
        %929 = vmatprep.subr.mxu0 %v583
        %930 = vmatpush2.msra.mxu0 %v582
        %931 = vmatprep.mubr.f32.mxu0 0.0
        %932 = vmatmul.mubr.f32.gmra.mxu0 %v774
        %v933 = vpop.f32.mrf.mxu0
        %v934 = vadd.f32 %v787, %v933
        %v935 = vpop.f32.mrf.mxu0
        %v936 = vadd.f32 %v791, %v935
        %937 = vdwg.mxu0
        %v938 = vxor.u32 %v863, 2147483648
        %v939 = vmul.f32 %v938, 1.442695
        %v940 = vpow.pop %v939
        %v941 = vadd.f32 %v940, 1.0
        %v942 = vrcp.pop %v941
        %v943 = vmul.f32 1.0, %v942
        %v944 = vxor.u32 %v865, 2147483648
        %v945 = vmul.f32 %v944, 1.442695
        %v946 = vpow.pop %v945
        %v947 = vadd.f32 %v946, 1.0
        %v948 = vrcp.pop %v947
        %v949 = vmul.f32 1.0, %v948
        %v950 = vtanh.pop %v934
        %v951 = vxor.u32 %v936, 2147483648
        %v952 = vmul.f32 %v951, 1.442695
        %v953 = vpow.pop %v952
        %v954 = vadd.f32 %v953, 1.0
        %v955 = vrcp.pop %v954
        %v956 = vmul.f32 1.0, %v955
        %v957 = vmul.f32 %v949, 0.0
        %v958 = vmul.f32 %v943, %v950
        %v959 = vadd.f32 %v957, %v958
        %v960 = vtanh.pop %v959
        %v961 = vmul.f32 %v956, %v960
        %s962 = scalar_lea.vmem %s452, 8 [#allocation2]
        %v963 = vld [vmem:[%s962] sm:$0xff]
        %964 = vmatprep.subr.mxu0 %v577
        %965 = vmatpush1.msra.mxu0 %v576
        %966 = vmatprep.subr.mxu0 %v573
        %967 = vmatpush1.msra.mxu0 %v572
        %968 = vmatprep.subr.mxu0 %v569
        %969 = vmatpush1.msra.mxu0 %v568
        %970 = vmatprep.subr.mxu0 %v565
        %971 = vmatpush1.msra.mxu0 %v564
        %972 = vmatprep.subr.mxu0 %v561
        %973 = vmatpush1.msra.mxu0 %v560
        %974 = vmatprep.subr.mxu0 %v557
        %975 = vmatpush1.msra.mxu0 %v556
        %976 = vmatprep.subr.mxu0 %v553
        %977 = vmatpush1.msra.mxu0 %v552
        %978 = vmatprep.subr.mxu0 %v549
        %979 = vmatpush1.msra.mxu0 %v548
        %980 = vmatprep.subr.mxu0 %v545
        %981 = vmatpush1.msra.mxu0 %v544
        %982 = vmatprep.subr.mxu0 %v541
        %983 = vmatpush1.msra.mxu0 %v540
        %984 = vmatprep.subr.mxu0 %v537
        %985 = vmatpush1.msra.mxu0 %v536
        %986 = vmatprep.subr.mxu0 %v533
        %987 = vmatpush1.msra.mxu0 %v532
        %988 = vmatprep.subr.mxu0 %v529
        %989 = vmatpush1.msra.mxu0 %v528
        %990 = vmatprep.subr.mxu0 %v525
        %991 = vmatpush1.msra.mxu0 %v524
        %992 = vmatprep.subr.mxu0 %v521
        %993 = vmatpush1.msra.mxu0 %v520
        %994 = vmatprep.subr.mxu0 %v517
        %995 = vmatpush1.msra.mxu0 %v516
        %996 = vmatprep.subr.mxu0 %v641
        %997 = vmatpush2.msra.mxu0 %v640
        %998 = vmatprep.subr.mxu0 %v637
        %999 = vmatpush2.msra.mxu0 %v636
        %1000 = vmatprep.subr.mxu0 %v633
        %1001 = vmatpush2.msra.mxu0 %v632
        %1002 = vmatprep.subr.mxu0 %v629
        %1003 = vmatpush2.msra.mxu0 %v628
        %1004 = vmatprep.subr.mxu0 %v625
        %1005 = vmatpush2.msra.mxu0 %v624
        %1006 = vmatprep.subr.mxu0 %v621
        %1007 = vmatpush2.msra.mxu0 %v620
        %1008 = vmatprep.subr.mxu0 %v617
        %1009 = vmatpush2.msra.mxu0 %v616
        %1010 = vmatprep.subr.mxu0 %v613
        %1011 = vmatpush2.msra.mxu0 %v612
        %1012 = vmatprep.subr.mxu0 %v609
        %1013 = vmatpush2.msra.mxu0 %v608
        %1014 = vmatprep.subr.mxu0 %v605
        %1015 = vmatpush2.msra.mxu0 %v604
        %1016 = vmatprep.subr.mxu0 %v601
        %1017 = vmatpush2.msra.mxu0 %v600
        %1018 = vmatprep.subr.mxu0 %v597
        %1019 = vmatpush2.msra.mxu0 %v596
        %1020 = vmatprep.subr.mxu0 %v593
        %1021 = vmatpush2.msra.mxu0 %v592
        %1022 = vmatprep.subr.mxu0 %v589
        %1023 = vmatpush2.msra.mxu0 %v588
        %1024 = vmatprep.subr.mxu0 %v585
        %1025 = vmatpush2.msra.mxu0 %v584
        %1026 = vmatprep.subr.mxu0 %v581
        %1027 = vmatpush2.msra.mxu0 %v580
        %1028 = vmatprep.mubr.f32.mxu0 %v961
        %1029 = vmatmul.mubr.f32.gmra.mxu0 %v963
        %v1030 = vpop.f32.mrf.mxu0
        %v1031 = vadd.f32 %v779, %v1030
        %v1032 = vpop.f32.mrf.mxu0
        %v1033 = vadd.f32 %v783, %v1032
        %1034 = vdwg.mxu0
        %1035 = vmatprep.subr.mxu0 %v579
        %1036 = vmatpush1.msra.mxu0 %v578
        %1037 = vmatprep.subr.mxu0 %v575
        %1038 = vmatpush1.msra.mxu0 %v574
        %1039 = vmatprep.subr.mxu0 %v571
        %1040 = vmatpush1.msra.mxu0 %v570
        %1041 = vmatprep.subr.mxu0 %v567
        %1042 = vmatpush1.msra.mxu0 %v566
        %1043 = vmatprep.subr.mxu0 %v563
        %1044 = vmatpush1.msra.mxu0 %v562
        %1045 = vmatprep.subr.mxu0 %v559
        %1046 = vmatpush1.msra.mxu0 %v558
        %1047 = vmatprep.subr.mxu0 %v555
        %1048 = vmatpush1.msra.mxu0 %v554
        %1049 = vmatprep.subr.mxu0 %v551
        %1050 = vmatpush1.msra.mxu0 %v550
        %1051 = vmatprep.subr.mxu0 %v547
        %1052 = vmatpush1.msra.mxu0 %v546
        %1053 = vmatprep.subr.mxu0 %v543
        %1054 = vmatpush1.msra.mxu0 %v542
        %1055 = vmatprep.subr.mxu0 %v539
        %1056 = vmatpush1.msra.mxu0 %v538
        %1057 = vmatprep.subr.mxu0 %v535
        %1058 = vmatpush1.msra.mxu0 %v534
        %1059 = vmatprep.subr.mxu0 %v531
        %1060 = vmatpush1.msra.mxu0 %v530
        %1061 = vmatprep.subr.mxu0 %v527
        %1062 = vmatpush1.msra.mxu0 %v526
        %1063 = vmatprep.subr.mxu0 %v523
        %1064 = vmatpush1.msra.mxu0 %v522
        %1065 = vmatprep.subr.mxu0 %v519
        %1066 = vmatpush1.msra.mxu0 %v518
        %1067 = vmatprep.subr.mxu0 %v643
        %1068 = vmatpush2.msra.mxu0 %v642
        %1069 = vmatprep.subr.mxu0 %v639
        %1070 = vmatpush2.msra.mxu0 %v638
        %1071 = vmatprep.subr.mxu0 %v635
        %1072 = vmatpush2.msra.mxu0 %v634
        %1073 = vmatprep.subr.mxu0 %v631
        %1074 = vmatpush2.msra.mxu0 %v630
        %1075 = vmatprep.subr.mxu0 %v627
        %1076 = vmatpush2.msra.mxu0 %v626
        %1077 = vmatprep.subr.mxu0 %v623
        %1078 = vmatpush2.msra.mxu0 %v622
        %1079 = vmatprep.subr.mxu0 %v619
        %1080 = vmatpush2.msra.mxu0 %v618
        %1081 = vmatprep.subr.mxu0 %v615
        %1082 = vmatpush2.msra.mxu0 %v614
        %1083 = vmatprep.subr.mxu0 %v611
        %1084 = vmatpush2.msra.mxu0 %v610
        %1085 = vmatprep.subr.mxu0 %v607
        %1086 = vmatpush2.msra.mxu0 %v606
        %1087 = vmatprep.subr.mxu0 %v603
        %1088 = vmatpush2.msra.mxu0 %v602
        %1089 = vmatprep.subr.mxu0 %v599
        %1090 = vmatpush2.msra.mxu0 %v598
        %1091 = vmatprep.subr.mxu0 %v595
        %1092 = vmatpush2.msra.mxu0 %v594
        %1093 = vmatprep.subr.mxu0 %v591
        %1094 = vmatpush2.msra.mxu0 %v590
        %1095 = vmatprep.subr.mxu0 %v587
        %1096 = vmatpush2.msra.mxu0 %v586
        %1097 = vmatprep.subr.mxu0 %v583
        %1098 = vmatpush2.msra.mxu0 %v582
        %1099 = vmatprep.mubr.f32.mxu0 %v961
        %1100 = vmatmul.mubr.f32.gmra.mxu0 %v963
        %v1101 = vpop.f32.mrf.mxu0
        %v1102 = vadd.f32 %v787, %v1101
        %v1103 = vpop.f32.mrf.mxu0
        %v1104 = vadd.f32 %v791, %v1103
        %1105 = vdwg.mxu0
        %v1106 = vxor.u32 %v1031, 2147483648
        %v1107 = vmul.f32 %v1106, 1.442695
        %v1108 = vpow.pop %v1107
        %v1109 = vadd.f32 %v1108, 1.0
        %v1110 = vrcp.pop %v1109
        %v1111 = vmul.f32 1.0, %v1110
        %v1112 = vxor.u32 %v1033, 2147483648
        %v1113 = vmul.f32 %v1112, 1.442695
        %v1114 = vpow.pop %v1113
        %v1115 = vadd.f32 %v1114, 1.0
        %v1116 = vrcp.pop %v1115
        %v1117 = vmul.f32 1.0, %v1116
        %v1118 = vtanh.pop %v1102
        %v1119 = vxor.u32 %v1104, 2147483648
        %v1120 = vmul.f32 %v1119, 1.442695
        %v1121 = vpow.pop %v1120
        %v1122 = vadd.f32 %v1121, 1.0
        %v1123 = vrcp.pop %v1122
        %v1124 = vmul.f32 1.0, %v1123
        %v1125 = vmul.f32 %v1117, %v959
        %v1126 = vmul.f32 %v1111, %v1118
        %v1127 = vadd.f32 %v1125, %v1126
        %v1128 = vtanh.pop %v1127
        %v1129 = vmul.f32 %v1124, %v1128
        %s1130 = scalar_lea.vmem %s452, 16 [#allocation2]
        %v1131 = vld [vmem:[%s1130] sm:$0xff]
        %1132 = vmatprep.subr.mxu0 %v577
        %1133 = vmatpush1.msra.mxu0 %v576
        %1134 = vmatprep.subr.mxu0 %v573
        %1135 = vmatpush1.msra.mxu0 %v572
        %1136 = vmatprep.subr.mxu0 %v569
        %1137 = vmatpush1.msra.mxu0 %v568
        %1138 = vmatprep.subr.mxu0 %v565
        %1139 = vmatpush1.msra.mxu0 %v564
        %1140 = vmatprep.subr.mxu0 %v561
        %1141 = vmatpush1.msra.mxu0 %v560
        %1142 = vmatprep.subr.mxu0 %v557
        %1143 = vmatpush1.msra.mxu0 %v556
        %1144 = vmatprep.subr.mxu0 %v553
        %1145 = vmatpush1.msra.mxu0 %v552
        %1146 = vmatprep.subr.mxu0 %v549
        %1147 = vmatpush1.msra.mxu0 %v548
        %1148 = vmatprep.subr.mxu0 %v545
        %1149 = vmatpush1.msra.mxu0 %v544
        %1150 = vmatprep.subr.mxu0 %v541
        %1151 = vmatpush1.msra.mxu0 %v540
        %1152 = vmatprep.subr.mxu0 %v537
        %1153 = vmatpush1.msra.mxu0 %v536
        %1154 = vmatprep.subr.mxu0 %v533
        %1155 = vmatpush1.msra.mxu0 %v532
        %1156 = vmatprep.subr.mxu0 %v529
        %1157 = vmatpush1.msra.mxu0 %v528
        %1158 = vmatprep.subr.mxu0 %v525
        %1159 = vmatpush1.msra.mxu0 %v524
        %1160 = vmatprep.subr.mxu0 %v521
        %1161 = vmatpush1.msra.mxu0 %v520
        %1162 = vmatprep.subr.mxu0 %v517
        %1163 = vmatpush1.msra.mxu0 %v516
        %1164 = vmatprep.subr.mxu0 %v641
        %1165 = vmatpush2.msra.mxu0 %v640
        %1166 = vmatprep.subr.mxu0 %v637
        %1167 = vmatpush2.msra.mxu0 %v636
        %1168 = vmatprep.subr.mxu0 %v633
        %1169 = vmatpush2.msra.mxu0 %v632
        %1170 = vmatprep.subr.mxu0 %v629
        %1171 = vmatpush2.msra.mxu0 %v628
        %1172 = vmatprep.subr.mxu0 %v625
        %1173 = vmatpush2.msra.mxu0 %v624
        %1174 = vmatprep.subr.mxu0 %v621
        %1175 = vmatpush2.msra.mxu0 %v620
        %1176 = vmatprep.subr.mxu0 %v617
        %1177 = vmatpush2.msra.mxu0 %v616
        %1178 = vmatprep.subr.mxu0 %v613
        %1179 = vmatpush2.msra.mxu0 %v612
        %1180 = vmatprep.subr.mxu0 %v609
        %1181 = vmatpush2.msra.mxu0 %v608
        %1182 = vmatprep.subr.mxu0 %v605
        %1183 = vmatpush2.msra.mxu0 %v604
        %1184 = vmatprep.subr.mxu0 %v601
        %1185 = vmatpush2.msra.mxu0 %v600
        %1186 = vmatprep.subr.mxu0 %v597
        %1187 = vmatpush2.msra.mxu0 %v596
        %1188 = vmatprep.subr.mxu0 %v593
        %1189 = vmatpush2.msra.mxu0 %v592
        %1190 = vmatprep.subr.mxu0 %v589
        %1191 = vmatpush2.msra.mxu0 %v588
        %1192 = vmatprep.subr.mxu0 %v585
        %1193 = vmatpush2.msra.mxu0 %v584
        %1194 = vmatprep.subr.mxu0 %v581
        %1195 = vmatpush2.msra.mxu0 %v580
        %1196 = vmatprep.mubr.f32.mxu0 %v1129
        %1197 = vmatmul.mubr.f32.gmra.mxu0 %v1131
        %v1198 = vpop.f32.mrf.mxu0
        %v1199 = vadd.f32 %v779, %v1198
        %v1200 = vpop.f32.mrf.mxu0
        %v1201 = vadd.f32 %v783, %v1200
        %1202 = vdwg.mxu0
        %1203 = vmatprep.subr.mxu0 %v579
        %1204 = vmatpush1.msra.mxu0 %v578
        %1205 = vmatprep.subr.mxu0 %v575
        %1206 = vmatpush1.msra.mxu0 %v574
        %1207 = vmatprep.subr.mxu0 %v571
        %1208 = vmatpush1.msra.mxu0 %v570
        %1209 = vmatprep.subr.mxu0 %v567
        %1210 = vmatpush1.msra.mxu0 %v566
        %1211 = vmatprep.subr.mxu0 %v563
        %1212 = vmatpush1.msra.mxu0 %v562
        %1213 = vmatprep.subr.mxu0 %v559
        %1214 = vmatpush1.msra.mxu0 %v558
        %1215 = vmatprep.subr.mxu0 %v555
        %1216 = vmatpush1.msra.mxu0 %v554
        %1217 = vmatprep.subr.mxu0 %v551
        %1218 = vmatpush1.msra.mxu0 %v550
        %1219 = vmatprep.subr.mxu0 %v547
        %1220 = vmatpush1.msra.mxu0 %v546
        %1221 = vmatprep.subr.mxu0 %v543
        %1222 = vmatpush1.msra.mxu0 %v542
        %1223 = vmatprep.subr.mxu0 %v539
        %1224 = vmatpush1.msra.mxu0 %v538
        %1225 = vmatprep.subr.mxu0 %v535
        %1226 = vmatpush1.msra.mxu0 %v534
        %1227 = vmatprep.subr.mxu0 %v531
        %1228 = vmatpush1.msra.mxu0 %v530
        %1229 = vmatprep.subr.mxu0 %v527
        %1230 = vmatpush1.msra.mxu0 %v526
        %1231 = vmatprep.subr.mxu0 %v523
        %1232 = vmatpush1.msra.mxu0 %v522
        %1233 = vmatprep.subr.mxu0 %v519
        %1234 = vmatpush1.msra.mxu0 %v518
        %1235 = vmatprep.subr.mxu0 %v643
        %1236 = vmatpush2.msra.mxu0 %v642
        %1237 = vmatprep.subr.mxu0 %v639
        %1238 = vmatpush2.msra.mxu0 %v638
        %1239 = vmatprep.subr.mxu0 %v635
        %1240 = vmatpush2.msra.mxu0 %v634
        %1241 = vmatprep.subr.mxu0 %v631
        %1242 = vmatpush2.msra.mxu0 %v630
        %1243 = vmatprep.subr.mxu0 %v627
        %1244 = vmatpush2.msra.mxu0 %v626
        %1245 = vmatprep.subr.mxu0 %v623
        %1246 = vmatpush2.msra.mxu0 %v622
        %1247 = vmatprep.subr.mxu0 %v619
        %1248 = vmatpush2.msra.mxu0 %v618
        %1249 = vmatprep.subr.mxu0 %v615
        %1250 = vmatpush2.msra.mxu0 %v614
        %1251 = vmatprep.subr.mxu0 %v611
        %1252 = vmatpush2.msra.mxu0 %v610
        %1253 = vmatprep.subr.mxu0 %v607
        %1254 = vmatpush2.msra.mxu0 %v606
        %1255 = vmatprep.subr.mxu0 %v603
        %1256 = vmatpush2.msra.mxu0 %v602
        %1257 = vmatprep.subr.mxu0 %v599
        %1258 = vmatpush2.msra.mxu0 %v598
        %1259 = vmatprep.subr.mxu0 %v595
        %1260 = vmatpush2.msra.mxu0 %v594
        %1261 = vmatprep.subr.mxu0 %v591
        %1262 = vmatpush2.msra.mxu0 %v590
        %1263 = vmatprep.subr.mxu0 %v587
        %1264 = vmatpush2.msra.mxu0 %v586
        %1265 = vmatprep.subr.mxu0 %v583
        %1266 = vmatpush2.msra.mxu0 %v582
        %1267 = vmatprep.mubr.f32.mxu0 %v1129
        %1268 = vmatmul.mubr.f32.gmra.mxu0 %v1131
        %v1269 = vpop.f32.mrf.mxu0
        %v1270 = vadd.f32 %v787, %v1269
        %v1271 = vpop.f32.mrf.mxu0
        %v1272 = vadd.f32 %v791, %v1271
        %1273 = vdwg.mxu0
        %v1274 = vxor.u32 %v1199, 2147483648
        %v1275 = vmul.f32 %v1274, 1.442695
        %v1276 = vpow.pop %v1275
        %v1277 = vadd.f32 %v1276, 1.0
        %v1278 = vrcp.pop %v1277
        %v1279 = vmul.f32 1.0, %v1278
        %v1280 = vxor.u32 %v1201, 2147483648
        %v1281 = vmul.f32 %v1280, 1.442695
        %v1282 = vpow.pop %v1281
        %v1283 = vadd.f32 %v1282, 1.0
        %v1284 = vrcp.pop %v1283
        %v1285 = vmul.f32 1.0, %v1284
        %v1286 = vtanh.pop %v1270
        %v1287 = vxor.u32 %v1272, 2147483648
        %v1288 = vmul.f32 %v1287, 1.442695
        %v1289 = vpow.pop %v1288
        %v1290 = vadd.f32 %v1289, 1.0
        %v1291 = vrcp.pop %v1290
        %v1292 = vmul.f32 1.0, %v1291
        %v1293 = vmul.f32 %v1285, %v1127
        %v1294 = vmul.f32 %v1279, %v1286
        %v1295 = vadd.f32 %v1293, %v1294
        %v1296 = vtanh.pop %v1295
        %v1297 = vmul.f32 %v1292, %v1296
        %s1298 = scalar_lea.vmem %s452, 24 [#allocation2]
        %v1299 = vld [vmem:[%s1298] sm:$0xff]
        %1300 = vmatprep.subr.mxu0 %v577
        %1301 = vmatpush1.msra.mxu0 %v576
        %1302 = vmatprep.subr.mxu0 %v573
        %1303 = vmatpush1.msra.mxu0 %v572
        %1304 = vmatprep.subr.mxu0 %v569
        %1305 = vmatpush1.msra.mxu0 %v568
        %1306 = vmatprep.subr.mxu0 %v565
        %1307 = vmatpush1.msra.mxu0 %v564
        %1308 = vmatprep.subr.mxu0 %v561
        %1309 = vmatpush1.msra.mxu0 %v560
        %1310 = vmatprep.subr.mxu0 %v557
        %1311 = vmatpush1.msra.mxu0 %v556
        %1312 = vmatprep.subr.mxu0 %v553
        %1313 = vmatpush1.msra.mxu0 %v552
        %1314 = vmatprep.subr.mxu0 %v549
        %1315 = vmatpush1.msra.mxu0 %v548
        %1316 = vmatprep.subr.mxu0 %v545
        %1317 = vmatpush1.msra.mxu0 %v544
        %1318 = vmatprep.subr.mxu0 %v541
        %1319 = vmatpush1.msra.mxu0 %v540
        %1320 = vmatprep.subr.mxu0 %v537
        %1321 = vmatpush1.msra.mxu0 %v536
        %1322 = vmatprep.subr.mxu0 %v533
        %1323 = vmatpush1.msra.mxu0 %v532
        %1324 = vmatprep.subr.mxu0 %v529
        %1325 = vmatpush1.msra.mxu0 %v528
        %1326 = vmatprep.subr.mxu0 %v525
        %1327 = vmatpush1.msra.mxu0 %v524
        %1328 = vmatprep.subr.mxu0 %v521
        %1329 = vmatpush1.msra.mxu0 %v520
        %1330 = vmatprep.subr.mxu0 %v517
        %1331 = vmatpush1.msra.mxu0 %v516
        %1332 = vmatprep.subr.mxu0 %v641
        %1333 = vmatpush2.msra.mxu0 %v640
        %1334 = vmatprep.subr.mxu0 %v637
        %1335 = vmatpush2.msra.mxu0 %v636
        %1336 = vmatprep.subr.mxu0 %v633
        %1337 = vmatpush2.msra.mxu0 %v632
        %1338 = vmatprep.subr.mxu0 %v629
        %1339 = vmatpush2.msra.mxu0 %v628
        %1340 = vmatprep.subr.mxu0 %v625
        %1341 = vmatpush2.msra.mxu0 %v624
        %1342 = vmatprep.subr.mxu0 %v621
        %1343 = vmatpush2.msra.mxu0 %v620
        %1344 = vmatprep.subr.mxu0 %v617
        %1345 = vmatpush2.msra.mxu0 %v616
        %1346 = vmatprep.subr.mxu0 %v613
        %1347 = vmatpush2.msra.mxu0 %v612
        %1348 = vmatprep.subr.mxu0 %v609
        %1349 = vmatpush2.msra.mxu0 %v608
        %1350 = vmatprep.subr.mxu0 %v605
        %1351 = vmatpush2.msra.mxu0 %v604
        %1352 = vmatprep.subr.mxu0 %v601
        %1353 = vmatpush2.msra.mxu0 %v600
        %1354 = vmatprep.subr.mxu0 %v597
        %1355 = vmatpush2.msra.mxu0 %v596
        %1356 = vmatprep.subr.mxu0 %v593
        %1357 = vmatpush2.msra.mxu0 %v592
        %1358 = vmatprep.subr.mxu0 %v589
        %1359 = vmatpush2.msra.mxu0 %v588
        %1360 = vmatprep.subr.mxu0 %v585
        %1361 = vmatpush2.msra.mxu0 %v584
        %1362 = vmatprep.subr.mxu0 %v581
        %1363 = vmatpush2.msra.mxu0 %v580
        %1364 = vmatprep.mubr.f32.mxu0 %v1297
        %1365 = vmatmul.mubr.f32.gmra.mxu0 %v1299
        %v1366 = vpop.f32.mrf.mxu0
        %v1367 = vadd.f32 %v779, %v1366
        %v1368 = vpop.f32.mrf.mxu0
        %v1369 = vadd.f32 %v783, %v1368
        %1370 = vdwg.mxu0
        %1371 = vmatprep.subr.mxu0 %v579
        %1372 = vmatpush1.msra.mxu0 %v578
        %1373 = vmatprep.subr.mxu0 %v575
        %1374 = vmatpush1.msra.mxu0 %v574
        %1375 = vmatprep.subr.mxu0 %v571
        %1376 = vmatpush1.msra.mxu0 %v570
        %1377 = vmatprep.subr.mxu0 %v567
        %1378 = vmatpush1.msra.mxu0 %v566
        %1379 = vmatprep.subr.mxu0 %v563
        %1380 = vmatpush1.msra.mxu0 %v562
        %1381 = vmatprep.subr.mxu0 %v559
        %1382 = vmatpush1.msra.mxu0 %v558
        %1383 = vmatprep.subr.mxu0 %v555
        %1384 = vmatpush1.msra.mxu0 %v554
        %1385 = vmatprep.subr.mxu0 %v551
        %1386 = vmatpush1.msra.mxu0 %v550
        %1387 = vmatprep.subr.mxu0 %v547
        %1388 = vmatpush1.msra.mxu0 %v546
        %1389 = vmatprep.subr.mxu0 %v543
        %1390 = vmatpush1.msra.mxu0 %v542
        %1391 = vmatprep.subr.mxu0 %v539
        %1392 = vmatpush1.msra.mxu0 %v538
        %1393 = vmatprep.subr.mxu0 %v535
        %1394 = vmatpush1.msra.mxu0 %v534
        %1395 = vmatprep.subr.mxu0 %v531
        %1396 = vmatpush1.msra.mxu0 %v530
        %1397 = vmatprep.subr.mxu0 %v527
        %1398 = vmatpush1.msra.mxu0 %v526
        %1399 = vmatprep.subr.mxu0 %v523
        %1400 = vmatpush1.msra.mxu0 %v522
        %1401 = vmatprep.subr.mxu0 %v519
        %1402 = vmatpush1.msra.mxu0 %v518
        %1403 = vmatprep.subr.mxu0 %v643
        %1404 = vmatpush2.msra.mxu0 %v642
        %1405 = vmatprep.subr.mxu0 %v639
        %1406 = vmatpush2.msra.mxu0 %v638
        %1407 = vmatprep.subr.mxu0 %v635
        %1408 = vmatpush2.msra.mxu0 %v634
        %1409 = vmatprep.subr.mxu0 %v631
        %1410 = vmatpush2.msra.mxu0 %v630
        %1411 = vmatprep.subr.mxu0 %v627
        %1412 = vmatpush2.msra.mxu0 %v626
        %1413 = vmatprep.subr.mxu0 %v623
        %1414 = vmatpush2.msra.mxu0 %v622
        %1415 = vmatprep.subr.mxu0 %v619
        %1416 = vmatpush2.msra.mxu0 %v618
        %1417 = vmatprep.subr.mxu0 %v615
        %1418 = vmatpush2.msra.mxu0 %v614
        %1419 = vmatprep.subr.mxu0 %v611
        %1420 = vmatpush2.msra.mxu0 %v610
        %1421 = vmatprep.subr.mxu0 %v607
        %1422 = vmatpush2.msra.mxu0 %v606
        %1423 = vmatprep.subr.mxu0 %v603
        %1424 = vmatpush2.msra.mxu0 %v602
        %1425 = vmatprep.subr.mxu0 %v599
        %1426 = vmatpush2.msra.mxu0 %v598
        %1427 = vmatprep.subr.mxu0 %v595
        %1428 = vmatpush2.msra.mxu0 %v594
        %1429 = vmatprep.subr.mxu0 %v591
        %1430 = vmatpush2.msra.mxu0 %v590
        %1431 = vmatprep.subr.mxu0 %v587
        %1432 = vmatpush2.msra.mxu0 %v586
        %1433 = vmatprep.subr.mxu0 %v583
        %1434 = vmatpush2.msra.mxu0 %v582
        %1435 = vmatprep.mubr.f32.mxu0 %v1297
        %1436 = vmatmul.mubr.f32.gmra.mxu0 %v1299
        %v1437 = vpop.f32.mrf.mxu0
        %v1438 = vadd.f32 %v787, %v1437
        %v1439 = vpop.f32.mrf.mxu0
        %v1440 = vadd.f32 %v791, %v1439
        %1441 = vdwg.mxu0
        %v1442 = vxor.u32 %v1367, 2147483648
        %v1443 = vmul.f32 %v1442, 1.442695
        %v1444 = vpow.pop %v1443
        %v1445 = vadd.f32 %v1444, 1.0
        %v1446 = vrcp.pop %v1445
        %v1447 = vmul.f32 1.0, %v1446
        %v1448 = vxor.u32 %v1369, 2147483648
        %v1449 = vmul.f32 %v1448, 1.442695
        %v1450 = vpow.pop %v1449
        %v1451 = vadd.f32 %v1450, 1.0
        %v1452 = vrcp.pop %v1451
        %v1453 = vmul.f32 1.0, %v1452
        %v1454 = vtanh.pop %v1438
        %v1455 = vxor.u32 %v1440, 2147483648
        %v1456 = vmul.f32 %v1455, 1.442695
        %v1457 = vpow.pop %v1456
        %v1458 = vadd.f32 %v1457, 1.0
        %v1459 = vrcp.pop %v1458
        %v1460 = vmul.f32 1.0, %v1459
        %v1461 = vmul.f32 %v1453, %v1295
        %v1462 = vmul.f32 %v1447, %v1454
        %v1463 = vadd.f32 %v1461, %v1462
        %v1464 = vtanh.pop %v1463
        %v1465 = vmul.f32 %v1460, %v1464
        %s1466 = scalar_lea.vmem %s452, 32 [#allocation2]
        %v1467 = vld [vmem:[%s1466] sm:$0xff]
        %1468 = vmatprep.subr.mxu0 %v577
        %1469 = vmatpush1.msra.mxu0 %v576
        %1470 = vmatprep.subr.mxu0 %v573
        %1471 = vmatpush1.msra.mxu0 %v572
        %1472 = vmatprep.subr.mxu0 %v569
        %1473 = vmatpush1.msra.mxu0 %v568
        %1474 = vmatprep.subr.mxu0 %v565
        %1475 = vmatpush1.msra.mxu0 %v564
        %1476 = vmatprep.subr.mxu0 %v561
        %1477 = vmatpush1.msra.mxu0 %v560
        %1478 = vmatprep.subr.mxu0 %v557
        %1479 = vmatpush1.msra.mxu0 %v556
        %1480 = vmatprep.subr.mxu0 %v553
        %1481 = vmatpush1.msra.mxu0 %v552
        %1482 = vmatprep.subr.mxu0 %v549
        %1483 = vmatpush1.msra.mxu0 %v548
        %1484 = vmatprep.subr.mxu0 %v545
        %1485 = vmatpush1.msra.mxu0 %v544
        %1486 = vmatprep.subr.mxu0 %v541
        %1487 = vmatpush1.msra.mxu0 %v540
        %1488 = vmatprep.subr.mxu0 %v537
        %1489 = vmatpush1.msra.mxu0 %v536
        %1490 = vmatprep.subr.mxu0 %v533
        %1491 = vmatpush1.msra.mxu0 %v532
        %1492 = vmatprep.subr.mxu0 %v529
        %1493 = vmatpush1.msra.mxu0 %v528
        %1494 = vmatprep.subr.mxu0 %v525
        %1495 = vmatpush1.msra.mxu0 %v524
        %1496 = vmatprep.subr.mxu0 %v521
        %1497 = vmatpush1.msra.mxu0 %v520
        %1498 = vmatprep.subr.mxu0 %v517
        %1499 = vmatpush1.msra.mxu0 %v516
        %1500 = vmatprep.subr.mxu0 %v641
        %1501 = vmatpush2.msra.mxu0 %v640
        %1502 = vmatprep.subr.mxu0 %v637
        %1503 = vmatpush2.msra.mxu0 %v636
        %1504 = vmatprep.subr.mxu0 %v633
        %1505 = vmatpush2.msra.mxu0 %v632
        %1506 = vmatprep.subr.mxu0 %v629
        %1507 = vmatpush2.msra.mxu0 %v628
        %1508 = vmatprep.subr.mxu0 %v625
        %1509 = vmatpush2.msra.mxu0 %v624
        %1510 = vmatprep.subr.mxu0 %v621
        %1511 = vmatpush2.msra.mxu0 %v620
        %1512 = vmatprep.subr.mxu0 %v617
        %1513 = vmatpush2.msra.mxu0 %v616
        %1514 = vmatprep.subr.mxu0 %v613
        %1515 = vmatpush2.msra.mxu0 %v612
        %1516 = vmatprep.subr.mxu0 %v609
        %1517 = vmatpush2.msra.mxu0 %v608
        %1518 = vmatprep.subr.mxu0 %v605
        %1519 = vmatpush2.msra.mxu0 %v604
        %1520 = vmatprep.subr.mxu0 %v601
        %1521 = vmatpush2.msra.mxu0 %v600
        %1522 = vmatprep.subr.mxu0 %v597
        %1523 = vmatpush2.msra.mxu0 %v596
        %1524 = vmatprep.subr.mxu0 %v593
        %1525 = vmatpush2.msra.mxu0 %v592
        %1526 = vmatprep.subr.mxu0 %v589
        %1527 = vmatpush2.msra.mxu0 %v588
        %1528 = vmatprep.subr.mxu0 %v585
        %1529 = vmatpush2.msra.mxu0 %v584
        %1530 = vmatprep.subr.mxu0 %v581
        %1531 = vmatpush2.msra.mxu0 %v580
        %1532 = vmatprep.mubr.f32.mxu0 %v1465
        %1533 = vmatmul.mubr.f32.gmra.mxu0 %v1467
        %v1534 = vpop.f32.mrf.mxu0
        %v1535 = vadd.f32 %v779, %v1534
        %v1536 = vpop.f32.mrf.mxu0
        %v1537 = vadd.f32 %v783, %v1536
        %1538 = vdwg.mxu0
        %1539 = vmatprep.subr.mxu0 %v579
        %1540 = vmatpush1.msra.mxu0 %v578
        %1541 = vmatprep.subr.mxu0 %v575
        %1542 = vmatpush1.msra.mxu0 %v574
        %1543 = vmatprep.subr.mxu0 %v571
        %1544 = vmatpush1.msra.mxu0 %v570
        %1545 = vmatprep.subr.mxu0 %v567
        %1546 = vmatpush1.msra.mxu0 %v566
        %1547 = vmatprep.subr.mxu0 %v563
        %1548 = vmatpush1.msra.mxu0 %v562
        %1549 = vmatprep.subr.mxu0 %v559
        %1550 = vmatpush1.msra.mxu0 %v558
        %1551 = vmatprep.subr.mxu0 %v555
        %1552 = vmatpush1.msra.mxu0 %v554
        %1553 = vmatprep.subr.mxu0 %v551
        %1554 = vmatpush1.msra.mxu0 %v550
        %1555 = vmatprep.subr.mxu0 %v547
        %1556 = vmatpush1.msra.mxu0 %v546
        %1557 = vmatprep.subr.mxu0 %v543
        %1558 = vmatpush1.msra.mxu0 %v542
        %1559 = vmatprep.subr.mxu0 %v539
        %1560 = vmatpush1.msra.mxu0 %v538
        %1561 = vmatprep.subr.mxu0 %v535
        %1562 = vmatpush1.msra.mxu0 %v534
        %1563 = vmatprep.subr.mxu0 %v531
        %1564 = vmatpush1.msra.mxu0 %v530
        %1565 = vmatprep.subr.mxu0 %v527
        %1566 = vmatpush1.msra.mxu0 %v526
        %1567 = vmatprep.subr.mxu0 %v523
        %1568 = vmatpush1.msra.mxu0 %v522
        %1569 = vmatprep.subr.mxu0 %v519
        %1570 = vmatpush1.msra.mxu0 %v518
        %1571 = vmatprep.subr.mxu0 %v643
        %1572 = vmatpush2.msra.mxu0 %v642
        %1573 = vmatprep.subr.mxu0 %v639
        %1574 = vmatpush2.msra.mxu0 %v638
        %1575 = vmatprep.subr.mxu0 %v635
        %1576 = vmatpush2.msra.mxu0 %v634
        %1577 = vmatprep.subr.mxu0 %v631
        %1578 = vmatpush2.msra.mxu0 %v630
        %1579 = vmatprep.subr.mxu0 %v627
        %1580 = vmatpush2.msra.mxu0 %v626
        %1581 = vmatprep.subr.mxu0 %v623
        %1582 = vmatpush2.msra.mxu0 %v622
        %1583 = vmatprep.subr.mxu0 %v619
        %1584 = vmatpush2.msra.mxu0 %v618
        %1585 = vmatprep.subr.mxu0 %v615
        %1586 = vmatpush2.msra.mxu0 %v614
        %1587 = vmatprep.subr.mxu0 %v611
        %1588 = vmatpush2.msra.mxu0 %v610
        %1589 = vmatprep.subr.mxu0 %v607
        %1590 = vmatpush2.msra.mxu0 %v606
        %1591 = vmatprep.subr.mxu0 %v603
        %1592 = vmatpush2.msra.mxu0 %v602
        %1593 = vmatprep.subr.mxu0 %v599
        %1594 = vmatpush2.msra.mxu0 %v598
        %1595 = vmatprep.subr.mxu0 %v595
        %1596 = vmatpush2.msra.mxu0 %v594
        %1597 = vmatprep.subr.mxu0 %v591
        %1598 = vmatpush2.msra.mxu0 %v590
        %1599 = vmatprep.subr.mxu0 %v587
        %1600 = vmatpush2.msra.mxu0 %v586
        %1601 = vmatprep.subr.mxu0 %v583
        %1602 = vmatpush2.msra.mxu0 %v582
        %1603 = vmatprep.mubr.f32.mxu0 %v1465
        %1604 = vmatmul.mubr.f32.gmra.mxu0 %v1467
        %v1605 = vpop.f32.mrf.mxu0
        %v1606 = vadd.f32 %v787, %v1605
        %v1607 = vpop.f32.mrf.mxu0
        %v1608 = vadd.f32 %v791, %v1607
        %1609 = vdwg.mxu0
        %v1610 = vxor.u32 %v1535, 2147483648
        %v1611 = vmul.f32 %v1610, 1.442695
        %v1612 = vpow.pop %v1611
        %v1613 = vadd.f32 %v1612, 1.0
        %v1614 = vrcp.pop %v1613
        %v1615 = vmul.f32 1.0, %v1614
        %v1616 = vxor.u32 %v1537, 2147483648
        %v1617 = vmul.f32 %v1616, 1.442695
        %v1618 = vpow.pop %v1617
        %v1619 = vadd.f32 %v1618, 1.0
        %v1620 = vrcp.pop %v1619
        %v1621 = vmul.f32 1.0, %v1620
        %v1622 = vtanh.pop %v1606
        %v1623 = vxor.u32 %v1608, 2147483648
        %v1624 = vmul.f32 %v1623, 1.442695
        %v1625 = vpow.pop %v1624
        %v1626 = vadd.f32 %v1625, 1.0
        %v1627 = vrcp.pop %v1626
        %v1628 = vmul.f32 1.0, %v1627
        %v1629 = vmul.f32 %v1621, %v1463
        %v1630 = vmul.f32 %v1615, %v1622
        %v1631 = vadd.f32 %v1629, %v1630
        %v1632 = vtanh.pop %v1631
        %v1633 = vmul.f32 %v1628, %v1632
        %s1634 = scalar_lea.vmem %s452, 40 [#allocation2]
        %v1635 = vld [vmem:[%s1634] sm:$0xff]
        %1636 = vmatprep.subr.mxu0 %v577
        %1637 = vmatpush1.msra.mxu0 %v576
        %1638 = vmatprep.subr.mxu0 %v573
        %1639 = vmatpush1.msra.mxu0 %v572
        %1640 = vmatprep.subr.mxu0 %v569
        %1641 = vmatpush1.msra.mxu0 %v568
        %1642 = vmatprep.subr.mxu0 %v565
        %1643 = vmatpush1.msra.mxu0 %v564
        %1644 = vmatprep.subr.mxu0 %v561
        %1645 = vmatpush1.msra.mxu0 %v560
        %1646 = vmatprep.subr.mxu0 %v557
        %1647 = vmatpush1.msra.mxu0 %v556
        %1648 = vmatprep.subr.mxu0 %v553
        %1649 = vmatpush1.msra.mxu0 %v552
        %1650 = vmatprep.subr.mxu0 %v549
        %1651 = vmatpush1.msra.mxu0 %v548
        %1652 = vmatprep.subr.mxu0 %v545
        %1653 = vmatpush1.msra.mxu0 %v544
        %1654 = vmatprep.subr.mxu0 %v541
        %1655 = vmatpush1.msra.mxu0 %v540
        %1656 = vmatprep.subr.mxu0 %v537
        %1657 = vmatpush1.msra.mxu0 %v536
        %1658 = vmatprep.subr.mxu0 %v533
        %1659 = vmatpush1.msra.mxu0 %v532
        %1660 = vmatprep.subr.mxu0 %v529
        %1661 = vmatpush1.msra.mxu0 %v528
        %1662 = vmatprep.subr.mxu0 %v525
        %1663 = vmatpush1.msra.mxu0 %v524
        %1664 = vmatprep.subr.mxu0 %v521
        %1665 = vmatpush1.msra.mxu0 %v520
        %1666 = vmatprep.subr.mxu0 %v517
        %1667 = vmatpush1.msra.mxu0 %v516
        %1668 = vmatprep.subr.mxu0 %v641
        %1669 = vmatpush2.msra.mxu0 %v640
        %1670 = vmatprep.subr.mxu0 %v637
        %1671 = vmatpush2.msra.mxu0 %v636
        %1672 = vmatprep.subr.mxu0 %v633
        %1673 = vmatpush2.msra.mxu0 %v632
        %1674 = vmatprep.subr.mxu0 %v629
        %1675 = vmatpush2.msra.mxu0 %v628
        %1676 = vmatprep.subr.mxu0 %v625
        %1677 = vmatpush2.msra.mxu0 %v624
        %1678 = vmatprep.subr.mxu0 %v621
        %1679 = vmatpush2.msra.mxu0 %v620
        %1680 = vmatprep.subr.mxu0 %v617
        %1681 = vmatpush2.msra.mxu0 %v616
        %1682 = vmatprep.subr.mxu0 %v613
        %1683 = vmatpush2.msra.mxu0 %v612
        %1684 = vmatprep.subr.mxu0 %v609
        %1685 = vmatpush2.msra.mxu0 %v608
        %1686 = vmatprep.subr.mxu0 %v605
        %1687 = vmatpush2.msra.mxu0 %v604
        %1688 = vmatprep.subr.mxu0 %v601
        %1689 = vmatpush2.msra.mxu0 %v600
        %1690 = vmatprep.subr.mxu0 %v597
        %1691 = vmatpush2.msra.mxu0 %v596
        %1692 = vmatprep.subr.mxu0 %v593
        %1693 = vmatpush2.msra.mxu0 %v592
        %1694 = vmatprep.subr.mxu0 %v589
        %1695 = vmatpush2.msra.mxu0 %v588
        %1696 = vmatprep.subr.mxu0 %v585
        %1697 = vmatpush2.msra.mxu0 %v584
        %1698 = vmatprep.subr.mxu0 %v581
        %1699 = vmatpush2.msra.mxu0 %v580
        %1700 = vmatprep.mubr.f32.mxu0 %v1633
        %1701 = vmatmul.mubr.f32.gmra.mxu0 %v1635
        %v1702 = vpop.f32.mrf.mxu0
        %v1703 = vadd.f32 %v779, %v1702
        %v1704 = vpop.f32.mrf.mxu0
        %v1705 = vadd.f32 %v783, %v1704
        %1706 = vdwg.mxu0
        %1707 = vmatprep.subr.mxu0 %v579
        %1708 = vmatpush1.msra.mxu0 %v578
        %1709 = vmatprep.subr.mxu0 %v575
        %1710 = vmatpush1.msra.mxu0 %v574
        %1711 = vmatprep.subr.mxu0 %v571
        %1712 = vmatpush1.msra.mxu0 %v570
        %1713 = vmatprep.subr.mxu0 %v567
        %1714 = vmatpush1.msra.mxu0 %v566
        %1715 = vmatprep.subr.mxu0 %v563
        %1716 = vmatpush1.msra.mxu0 %v562
        %1717 = vmatprep.subr.mxu0 %v559
        %1718 = vmatpush1.msra.mxu0 %v558
        %1719 = vmatprep.subr.mxu0 %v555
        %1720 = vmatpush1.msra.mxu0 %v554
        %1721 = vmatprep.subr.mxu0 %v551
        %1722 = vmatpush1.msra.mxu0 %v550
        %1723 = vmatprep.subr.mxu0 %v547
        %1724 = vmatpush1.msra.mxu0 %v546
        %1725 = vmatprep.subr.mxu0 %v543
        %1726 = vmatpush1.msra.mxu0 %v542
        %1727 = vmatprep.subr.mxu0 %v539
        %1728 = vmatpush1.msra.mxu0 %v538
        %1729 = vmatprep.subr.mxu0 %v535
        %1730 = vmatpush1.msra.mxu0 %v534
        %1731 = vmatprep.subr.mxu0 %v531
        %1732 = vmatpush1.msra.mxu0 %v530
        %1733 = vmatprep.subr.mxu0 %v527
        %1734 = vmatpush1.msra.mxu0 %v526
        %1735 = vmatprep.subr.mxu0 %v523
        %1736 = vmatpush1.msra.mxu0 %v522
        %1737 = vmatprep.subr.mxu0 %v519
        %1738 = vmatpush1.msra.mxu0 %v518
        %1739 = vmatprep.subr.mxu0 %v643
        %1740 = vmatpush2.msra.mxu0 %v642
        %1741 = vmatprep.subr.mxu0 %v639
        %1742 = vmatpush2.msra.mxu0 %v638
        %1743 = vmatprep.subr.mxu0 %v635
        %1744 = vmatpush2.msra.mxu0 %v634
        %1745 = vmatprep.subr.mxu0 %v631
        %1746 = vmatpush2.msra.mxu0 %v630
        %1747 = vmatprep.subr.mxu0 %v627
        %1748 = vmatpush2.msra.mxu0 %v626
        %1749 = vmatprep.subr.mxu0 %v623
        %1750 = vmatpush2.msra.mxu0 %v622
        %1751 = vmatprep.subr.mxu0 %v619
        %1752 = vmatpush2.msra.mxu0 %v618
        %1753 = vmatprep.subr.mxu0 %v615
        %1754 = vmatpush2.msra.mxu0 %v614
        %1755 = vmatprep.subr.mxu0 %v611
        %1756 = vmatpush2.msra.mxu0 %v610
        %1757 = vmatprep.subr.mxu0 %v607
        %1758 = vmatpush2.msra.mxu0 %v606
        %1759 = vmatprep.subr.mxu0 %v603
        %1760 = vmatpush2.msra.mxu0 %v602
        %1761 = vmatprep.subr.mxu0 %v599
        %1762 = vmatpush2.msra.mxu0 %v598
        %1763 = vmatprep.subr.mxu0 %v595
        %1764 = vmatpush2.msra.mxu0 %v594
        %1765 = vmatprep.subr.mxu0 %v591
        %1766 = vmatpush2.msra.mxu0 %v590
        %1767 = vmatprep.subr.mxu0 %v587
        %1768 = vmatpush2.msra.mxu0 %v586
        %1769 = vmatprep.subr.mxu0 %v583
        %1770 = vmatpush2.msra.mxu0 %v582
        %1771 = vmatprep.mubr.f32.mxu0 %v1633
        %1772 = vmatmul.mubr.f32.gmra.mxu0 %v1635
        %v1773 = vpop.f32.mrf.mxu0
        %v1774 = vadd.f32 %v787, %v1773
        %v1775 = vpop.f32.mrf.mxu0
        %v1776 = vadd.f32 %v791, %v1775
        %1777 = vdwg.mxu0
        %v1778 = vxor.u32 %v1703, 2147483648
        %v1779 = vmul.f32 %v1778, 1.442695
        %v1780 = vpow.pop %v1779
        %v1781 = vadd.f32 %v1780, 1.0
        %v1782 = vrcp.pop %v1781
        %v1783 = vmul.f32 1.0, %v1782
        %v1784 = vxor.u32 %v1705, 2147483648
        %v1785 = vmul.f32 %v1784, 1.442695
        %v1786 = vpow.pop %v1785
        %v1787 = vadd.f32 %v1786, 1.0
        %v1788 = vrcp.pop %v1787
        %v1789 = vmul.f32 1.0, %v1788
        %v1790 = vtanh.pop %v1774
        %v1791 = vxor.u32 %v1776, 2147483648
        %v1792 = vmul.f32 %v1791, 1.442695
        %v1793 = vpow.pop %v1792
        %v1794 = vadd.f32 %v1793, 1.0
        %v1795 = vrcp.pop %v1794
        %v1796 = vmul.f32 1.0, %v1795
        %v1797 = vmul.f32 %v1789, %v1631
        %v1798 = vmul.f32 %v1783, %v1790
        %v1799 = vadd.f32 %v1797, %v1798
        %v1800 = vtanh.pop %v1799
        %v1801 = vmul.f32 %v1796, %v1800
        %s1802 = scalar_lea.vmem %s452, 48 [#allocation2]
        %v1803 = vld [vmem:[%s1802] sm:$0xff]
        %1804 = vmatprep.subr.mxu0 %v577
        %1805 = vmatpush1.msra.mxu0 %v576
        %1806 = vmatprep.subr.mxu0 %v573
        %1807 = vmatpush1.msra.mxu0 %v572
        %1808 = vmatprep.subr.mxu0 %v569
        %1809 = vmatpush1.msra.mxu0 %v568
        %1810 = vmatprep.subr.mxu0 %v565
        %1811 = vmatpush1.msra.mxu0 %v564
        %1812 = vmatprep.subr.mxu0 %v561
        %1813 = vmatpush1.msra.mxu0 %v560
        %1814 = vmatprep.subr.mxu0 %v557
        %1815 = vmatpush1.msra.mxu0 %v556
        %1816 = vmatprep.subr.mxu0 %v553
        %1817 = vmatpush1.msra.mxu0 %v552
        %1818 = vmatprep.subr.mxu0 %v549
        %1819 = vmatpush1.msra.mxu0 %v548
        %1820 = vmatprep.subr.mxu0 %v545
        %1821 = vmatpush1.msra.mxu0 %v544
        %1822 = vmatprep.subr.mxu0 %v541
        %1823 = vmatpush1.msra.mxu0 %v540
        %1824 = vmatprep.subr.mxu0 %v537
        %1825 = vmatpush1.msra.mxu0 %v536
        %1826 = vmatprep.subr.mxu0 %v533
        %1827 = vmatpush1.msra.mxu0 %v532
        %1828 = vmatprep.subr.mxu0 %v529
        %1829 = vmatpush1.msra.mxu0 %v528
        %1830 = vmatprep.subr.mxu0 %v525
        %1831 = vmatpush1.msra.mxu0 %v524
        %1832 = vmatprep.subr.mxu0 %v521
        %1833 = vmatpush1.msra.mxu0 %v520
        %1834 = vmatprep.subr.mxu0 %v517
        %1835 = vmatpush1.msra.mxu0 %v516
        %1836 = vmatprep.subr.mxu0 %v641
        %1837 = vmatpush2.msra.mxu0 %v640
        %1838 = vmatprep.subr.mxu0 %v637
        %1839 = vmatpush2.msra.mxu0 %v636
        %1840 = vmatprep.subr.mxu0 %v633
        %1841 = vmatpush2.msra.mxu0 %v632
        %1842 = vmatprep.subr.mxu0 %v629
        %1843 = vmatpush2.msra.mxu0 %v628
        %1844 = vmatprep.subr.mxu0 %v625
        %1845 = vmatpush2.msra.mxu0 %v624
        %1846 = vmatprep.subr.mxu0 %v621
        %1847 = vmatpush2.msra.mxu0 %v620
        %1848 = vmatprep.subr.mxu0 %v617
        %1849 = vmatpush2.msra.mxu0 %v616
        %1850 = vmatprep.subr.mxu0 %v613
        %1851 = vmatpush2.msra.mxu0 %v612
        %1852 = vmatprep.subr.mxu0 %v609
        %1853 = vmatpush2.msra.mxu0 %v608
        %1854 = vmatprep.subr.mxu0 %v605
        %1855 = vmatpush2.msra.mxu0 %v604
        %1856 = vmatprep.subr.mxu0 %v601
        %1857 = vmatpush2.msra.mxu0 %v600
        %1858 = vmatprep.subr.mxu0 %v597
        %1859 = vmatpush2.msra.mxu0 %v596
        %1860 = vmatprep.subr.mxu0 %v593
        %1861 = vmatpush2.msra.mxu0 %v592
        %1862 = vmatprep.subr.mxu0 %v589
        %1863 = vmatpush2.msra.mxu0 %v588
        %1864 = vmatprep.subr.mxu0 %v585
        %1865 = vmatpush2.msra.mxu0 %v584
        %1866 = vmatprep.subr.mxu0 %v581
        %1867 = vmatpush2.msra.mxu0 %v580
        %1868 = vmatprep.mubr.f32.mxu0 %v1801
        %1869 = vmatmul.mubr.f32.gmra.mxu0 %v1803
        %v1870 = vpop.f32.mrf.mxu0
        %v1871 = vadd.f32 %v779, %v1870
        %v1872 = vpop.f32.mrf.mxu0
        %v1873 = vadd.f32 %v783, %v1872
        %1874 = vdwg.mxu0
        %1875 = vmatprep.subr.mxu0 %v579
        %1876 = vmatpush1.msra.mxu0 %v578
        %1877 = vmatprep.subr.mxu0 %v575
        %1878 = vmatpush1.msra.mxu0 %v574
        %1879 = vmatprep.subr.mxu0 %v571
        %1880 = vmatpush1.msra.mxu0 %v570
        %1881 = vmatprep.subr.mxu0 %v567
        %1882 = vmatpush1.msra.mxu0 %v566
        %1883 = vmatprep.subr.mxu0 %v563
        %1884 = vmatpush1.msra.mxu0 %v562
        %1885 = vmatprep.subr.mxu0 %v559
        %1886 = vmatpush1.msra.mxu0 %v558
        %1887 = vmatprep.subr.mxu0 %v555
        %1888 = vmatpush1.msra.mxu0 %v554
        %1889 = vmatprep.subr.mxu0 %v551
        %1890 = vmatpush1.msra.mxu0 %v550
        %1891 = vmatprep.subr.mxu0 %v547
        %1892 = vmatpush1.msra.mxu0 %v546
        %1893 = vmatprep.subr.mxu0 %v543
        %1894 = vmatpush1.msra.mxu0 %v542
        %1895 = vmatprep.subr.mxu0 %v539
        %1896 = vmatpush1.msra.mxu0 %v538
        %1897 = vmatprep.subr.mxu0 %v535
        %1898 = vmatpush1.msra.mxu0 %v534
        %1899 = vmatprep.subr.mxu0 %v531
        %1900 = vmatpush1.msra.mxu0 %v530
        %1901 = vmatprep.subr.mxu0 %v527
        %1902 = vmatpush1.msra.mxu0 %v526
        %1903 = vmatprep.subr.mxu0 %v523
        %1904 = vmatpush1.msra.mxu0 %v522
        %1905 = vmatprep.subr.mxu0 %v519
        %1906 = vmatpush1.msra.mxu0 %v518
        %1907 = vmatprep.subr.mxu0 %v643
        %1908 = vmatpush2.msra.mxu0 %v642
        %1909 = vmatprep.subr.mxu0 %v639
        %1910 = vmatpush2.msra.mxu0 %v638
        %1911 = vmatprep.subr.mxu0 %v635
        %1912 = vmatpush2.msra.mxu0 %v634
        %1913 = vmatprep.subr.mxu0 %v631
        %1914 = vmatpush2.msra.mxu0 %v630
        %1915 = vmatprep.subr.mxu0 %v627
        %1916 = vmatpush2.msra.mxu0 %v626
        %1917 = vmatprep.subr.mxu0 %v623
        %1918 = vmatpush2.msra.mxu0 %v622
        %1919 = vmatprep.subr.mxu0 %v619
        %1920 = vmatpush2.msra.mxu0 %v618
        %1921 = vmatprep.subr.mxu0 %v615
        %1922 = vmatpush2.msra.mxu0 %v614
        %1923 = vmatprep.subr.mxu0 %v611
        %1924 = vmatpush2.msra.mxu0 %v610
        %1925 = vmatprep.subr.mxu0 %v607
        %1926 = vmatpush2.msra.mxu0 %v606
        %1927 = vmatprep.subr.mxu0 %v603
        %1928 = vmatpush2.msra.mxu0 %v602
        %1929 = vmatprep.subr.mxu0 %v599
        %1930 = vmatpush2.msra.mxu0 %v598
        %1931 = vmatprep.subr.mxu0 %v595
        %1932 = vmatpush2.msra.mxu0 %v594
        %1933 = vmatprep.subr.mxu0 %v591
        %1934 = vmatpush2.msra.mxu0 %v590
        %1935 = vmatprep.subr.mxu0 %v587
        %1936 = vmatpush2.msra.mxu0 %v586
        %1937 = vmatprep.subr.mxu0 %v583
        %1938 = vmatpush2.msra.mxu0 %v582
        %1939 = vmatprep.mubr.f32.mxu0 %v1801
        %1940 = vmatmul.mubr.f32.gmra.mxu0 %v1803
        %v1941 = vpop.f32.mrf.mxu0
        %v1942 = vadd.f32 %v787, %v1941
        %v1943 = vpop.f32.mrf.mxu0
        %v1944 = vadd.f32 %v791, %v1943
        %1945 = vdwg.mxu0
        %v1946 = vxor.u32 %v1871, 2147483648
        %v1947 = vmul.f32 %v1946, 1.442695
        %v1948 = vpow.pop %v1947
        %v1949 = vadd.f32 %v1948, 1.0
        %v1950 = vrcp.pop %v1949
        %v1951 = vmul.f32 1.0, %v1950
        %v1952 = vxor.u32 %v1873, 2147483648
        %v1953 = vmul.f32 %v1952, 1.442695
        %v1954 = vpow.pop %v1953
        %v1955 = vadd.f32 %v1954, 1.0
        %v1956 = vrcp.pop %v1955
        %v1957 = vmul.f32 1.0, %v1956
        %v1958 = vtanh.pop %v1942
        %v1959 = vxor.u32 %v1944, 2147483648
        %v1960 = vmul.f32 %v1959, 1.442695
        %v1961 = vpow.pop %v1960
        %v1962 = vadd.f32 %v1961, 1.0
        %v1963 = vrcp.pop %v1962
        %v1964 = vmul.f32 1.0, %v1963
        %v1965 = vmul.f32 %v1957, %v1799
        %v1966 = vmul.f32 %v1951, %v1958
        %v1967 = vadd.f32 %v1965, %v1966
        %v1968 = vtanh.pop %v1967
        %v1969 = vmul.f32 %v1964, %v1968
        %s1970 = scalar_lea.vmem %s452, 56 [#allocation2]
        %v1971 = vld [vmem:[%s1970] sm:$0xff]
        %1972 = vmatprep.subr.mxu0 %v577
        %1973 = vmatpush1.msra.mxu0 %v576
        %1974 = vmatprep.subr.mxu0 %v573
        %1975 = vmatpush1.msra.mxu0 %v572
        %1976 = vmatprep.subr.mxu0 %v569
        %1977 = vmatpush1.msra.mxu0 %v568
        %1978 = vmatprep.subr.mxu0 %v565
        %1979 = vmatpush1.msra.mxu0 %v564
        %1980 = vmatprep.subr.mxu0 %v561
        %1981 = vmatpush1.msra.mxu0 %v560
        %1982 = vmatprep.subr.mxu0 %v557
        %1983 = vmatpush1.msra.mxu0 %v556
        %1984 = vmatprep.subr.mxu0 %v553
        %1985 = vmatpush1.msra.mxu0 %v552
        %1986 = vmatprep.subr.mxu0 %v549
        %1987 = vmatpush1.msra.mxu0 %v548
        %1988 = vmatprep.subr.mxu0 %v545
        %1989 = vmatpush1.msra.mxu0 %v544
        %1990 = vmatprep.subr.mxu0 %v541
        %1991 = vmatpush1.msra.mxu0 %v540
        %1992 = vmatprep.subr.mxu0 %v537
        %1993 = vmatpush1.msra.mxu0 %v536
        %1994 = vmatprep.subr.mxu0 %v533
        %1995 = vmatpush1.msra.mxu0 %v532
        %1996 = vmatprep.subr.mxu0 %v529
        %1997 = vmatpush1.msra.mxu0 %v528
        %1998 = vmatprep.subr.mxu0 %v525
        %1999 = vmatpush1.msra.mxu0 %v524
        %2000 = vmatprep.subr.mxu0 %v521
        %2001 = vmatpush1.msra.mxu0 %v520
        %2002 = vmatprep.subr.mxu0 %v517
        %2003 = vmatpush1.msra.mxu0 %v516
        %2004 = vmatprep.subr.mxu0 %v641
        %2005 = vmatpush2.msra.mxu0 %v640
        %2006 = vmatprep.subr.mxu0 %v637
        %2007 = vmatpush2.msra.mxu0 %v636
        %2008 = vmatprep.subr.mxu0 %v633
        %2009 = vmatpush2.msra.mxu0 %v632
        %2010 = vmatprep.subr.mxu0 %v629
        %2011 = vmatpush2.msra.mxu0 %v628
        %2012 = vmatprep.subr.mxu0 %v625
        %2013 = vmatpush2.msra.mxu0 %v624
        %2014 = vmatprep.subr.mxu0 %v621
        %2015 = vmatpush2.msra.mxu0 %v620
        %2016 = vmatprep.subr.mxu0 %v617
        %2017 = vmatpush2.msra.mxu0 %v616
        %2018 = vmatprep.subr.mxu0 %v613
        %2019 = vmatpush2.msra.mxu0 %v612
        %2020 = vmatprep.subr.mxu0 %v609
        %2021 = vmatpush2.msra.mxu0 %v608
        %2022 = vmatprep.subr.mxu0 %v605
        %2023 = vmatpush2.msra.mxu0 %v604
        %2024 = vmatprep.subr.mxu0 %v601
        %2025 = vmatpush2.msra.mxu0 %v600
        %2026 = vmatprep.subr.mxu0 %v597
        %2027 = vmatpush2.msra.mxu0 %v596
        %2028 = vmatprep.subr.mxu0 %v593
        %2029 = vmatpush2.msra.mxu0 %v592
        %2030 = vmatprep.subr.mxu0 %v589
        %2031 = vmatpush2.msra.mxu0 %v588
        %2032 = vmatprep.subr.mxu0 %v585
        %2033 = vmatpush2.msra.mxu0 %v584
        %2034 = vmatprep.subr.mxu0 %v581
        %2035 = vmatpush2.msra.mxu0 %v580
        %2036 = vmatprep.mubr.f32.mxu0 %v1969
        %2037 = vmatmul.mubr.f32.gmra.mxu0 %v1971
        %v2038 = vpop.f32.mrf.mxu0
        %v2039 = vadd.f32 %v779, %v2038
        %v2040 = vpop.f32.mrf.mxu0
        %v2041 = vadd.f32 %v783, %v2040
        %2042 = vdwg.mxu0
        %2043 = vmatprep.subr.mxu0 %v579
        %2044 = vmatpush1.msra.mxu0 %v578
        %2045 = vmatprep.subr.mxu0 %v575
        %2046 = vmatpush1.msra.mxu0 %v574
        %2047 = vmatprep.subr.mxu0 %v571
        %2048 = vmatpush1.msra.mxu0 %v570
        %2049 = vmatprep.subr.mxu0 %v567
        %2050 = vmatpush1.msra.mxu0 %v566
        %2051 = vmatprep.subr.mxu0 %v563
        %2052 = vmatpush1.msra.mxu0 %v562
        %2053 = vmatprep.subr.mxu0 %v559
        %2054 = vmatpush1.msra.mxu0 %v558
        %2055 = vmatprep.subr.mxu0 %v555
        %2056 = vmatpush1.msra.mxu0 %v554
        %2057 = vmatprep.subr.mxu0 %v551
        %2058 = vmatpush1.msra.mxu0 %v550
        %2059 = vmatprep.subr.mxu0 %v547
        %2060 = vmatpush1.msra.mxu0 %v546
        %2061 = vmatprep.subr.mxu0 %v543
        %2062 = vmatpush1.msra.mxu0 %v542
        %2063 = vmatprep.subr.mxu0 %v539
        %2064 = vmatpush1.msra.mxu0 %v538
        %2065 = vmatprep.subr.mxu0 %v535
        %2066 = vmatpush1.msra.mxu0 %v534
        %2067 = vmatprep.subr.mxu0 %v531
        %2068 = vmatpush1.msra.mxu0 %v530
        %2069 = vmatprep.subr.mxu0 %v527
        %2070 = vmatpush1.msra.mxu0 %v526
        %2071 = vmatprep.subr.mxu0 %v523
        %2072 = vmatpush1.msra.mxu0 %v522
        %2073 = vmatprep.subr.mxu0 %v519
        %2074 = vmatpush1.msra.mxu0 %v518
        %2075 = vmatprep.subr.mxu0 %v643
        %2076 = vmatpush2.msra.mxu0 %v642
        %2077 = vmatprep.subr.mxu0 %v639
        %2078 = vmatpush2.msra.mxu0 %v638
        %2079 = vmatprep.subr.mxu0 %v635
        %2080 = vmatpush2.msra.mxu0 %v634
        %2081 = vmatprep.subr.mxu0 %v631
        %2082 = vmatpush2.msra.mxu0 %v630
        %2083 = vmatprep.subr.mxu0 %v627
        %2084 = vmatpush2.msra.mxu0 %v626
        %2085 = vmatprep.subr.mxu0 %v623
        %2086 = vmatpush2.msra.mxu0 %v622
        %2087 = vmatprep.subr.mxu0 %v619
        %2088 = vmatpush2.msra.mxu0 %v618
        %2089 = vmatprep.subr.mxu0 %v615
        %2090 = vmatpush2.msra.mxu0 %v614
        %2091 = vmatprep.subr.mxu0 %v611
        %2092 = vmatpush2.msra.mxu0 %v610
        %2093 = vmatprep.subr.mxu0 %v607
        %2094 = vmatpush2.msra.mxu0 %v606
        %2095 = vmatprep.subr.mxu0 %v603
        %2096 = vmatpush2.msra.mxu0 %v602
        %2097 = vmatprep.subr.mxu0 %v599
        %2098 = vmatpush2.msra.mxu0 %v598
        %2099 = vmatprep.subr.mxu0 %v595
        %2100 = vmatpush2.msra.mxu0 %v594
        %2101 = vmatprep.subr.mxu0 %v591
        %2102 = vmatpush2.msra.mxu0 %v590
        %2103 = vmatprep.subr.mxu0 %v587
        %2104 = vmatpush2.msra.mxu0 %v586
        %2105 = vmatprep.subr.mxu0 %v583
        %2106 = vmatpush2.msra.mxu0 %v582
        %2107 = vmatprep.mubr.f32.mxu0 %v1969
        %2108 = vmatmul.mubr.f32.gmra.mxu0 %v1971
        %v2109 = vpop.f32.mrf.mxu0
        %v2110 = vadd.f32 %v787, %v2109
        %v2111 = vpop.f32.mrf.mxu0
        %v2112 = vadd.f32 %v791, %v2111
        %2113 = vdwg.mxu0
        %v2114 = vxor.u32 %v2039, 2147483648
        %v2115 = vmul.f32 %v2114, 1.442695
        %v2116 = vpow.pop %v2115
        %v2117 = vadd.f32 %v2116, 1.0
        %v2118 = vrcp.pop %v2117
        %v2119 = vmul.f32 1.0, %v2118
        %v2120 = vxor.u32 %v2041, 2147483648
        %v2121 = vmul.f32 %v2120, 1.442695
        %v2122 = vpow.pop %v2121
        %v2123 = vadd.f32 %v2122, 1.0
        %v2124 = vrcp.pop %v2123
        %v2125 = vmul.f32 1.0, %v2124
        %v2126 = vtanh.pop %v2110
        %v2127 = vxor.u32 %v2112, 2147483648
        %v2128 = vmul.f32 %v2127, 1.442695
        %v2129 = vpow.pop %v2128
        %v2130 = vadd.f32 %v2129, 1.0
        %v2131 = vrcp.pop %v2130
        %v2132 = vmul.f32 1.0, %v2131
        %v2133 = vmul.f32 %v2125, %v1967
        %v2134 = vmul.f32 %v2119, %v2126
        %v2135 = vadd.f32 %v2133, %v2134
        %v2136 = vtanh.pop %v2135
        %v2137 = vmul.f32 %v2132, %v2136
        %v2138 = vld [vmem:[%s4] sm:$0xff]
        %v2139 = vld [vmem:[%s4 + $0x8] sm:$0xff]
        %v2140 = vld [vmem:[%s4 + $0x10] sm:$0xff]
        %v2141 = vld [vmem:[%s4 + $0x18] sm:$0xff]
        %v2142 = vld [vmem:[%s4 + $0x20] sm:$0xff]
        %v2143 = vld [vmem:[%s4 + $0x28] sm:$0xff]
        %v2144 = vld [vmem:[%s4 + $0x30] sm:$0xff]
        %v2145 = vld [vmem:[%s4 + $0x38] sm:$0xff]
        %v2146 = vld [vmem:[%s4 + $0x40] sm:$0xff]
        %v2147 = vld [vmem:[%s4 + $0x48] sm:$0xff]
        %v2148 = vld [vmem:[%s4 + $0x50] sm:$0xff]
        %v2149 = vld [vmem:[%s4 + $0x58] sm:$0xff]
        %v2150 = vld [vmem:[%s4 + $0x60] sm:$0xff]
        %v2151 = vld [vmem:[%s4 + $0x68] sm:$0xff]
        %v2152 = vld [vmem:[%s4 + $0x70] sm:$0xff]
        %v2153 = vld [vmem:[%s4 + $0x78] sm:$0xff]
        %v2154 = vld [vmem:[%s4 + $0x80] sm:$0xff]
        %v2155 = vld [vmem:[%s4 + $0x88] sm:$0xff]
        %v2156 = vld [vmem:[%s4 + $0x90] sm:$0xff]
        %v2157 = vld [vmem:[%s4 + $0x98] sm:$0xff]
        %v2158 = vld [vmem:[%s4 + $0xa0] sm:$0xff]
        %v2159 = vld [vmem:[%s4 + $0xa8] sm:$0xff]
        %v2160 = vld [vmem:[%s4 + $0xb0] sm:$0xff]
        %v2161 = vld [vmem:[%s4 + $0xb8] sm:$0xff]
        %v2162 = vld [vmem:[%s4 + $0xc0] sm:$0xff]
        %v2163 = vld [vmem:[%s4 + $0xc8] sm:$0xff]
        %v2164 = vld [vmem:[%s4 + $0xd0] sm:$0xff]
        %v2165 = vld [vmem:[%s4 + $0xd8] sm:$0xff]
        %v2166 = vld [vmem:[%s4 + $0xe0] sm:$0xff]
        %v2167 = vld [vmem:[%s4 + $0xe8] sm:$0xff]
        %v2168 = vld [vmem:[%s4 + $0xf0] sm:$0xff]
        %v2169 = vld [vmem:[%s4 + $0xf8] sm:$0xff]
        %v2170 = vld [vmem:[%s5] sm:$0x3]
        %v2172 = vlaneseq
        %v2173 = vshrl.u32 %v2172, 7
        %v2174 = vsub.s32 0, %v2173
        %v2175 = vrot.slane %v2170, %v2174
        %v2176 = vlaneseq
        %v2177 = vshrl.u32 %v2176, 7
        %v2178 = vsub.s32 1, %v2177
        %v2179 = vrot.slane %v2170, %v2178
        %2182 = vmatprep.subr.mxu0 %v2169
        %2183 = vmatpush1.msra.mxu0 %v2168
        %2184 = vmatprep.subr.mxu0 %v2167
        %2185 = vmatpush1.msra.mxu0 %v2166
        %2186 = vmatprep.subr.mxu0 %v2165
        %2187 = vmatpush1.msra.mxu0 %v2164
        %2188 = vmatprep.subr.mxu0 %v2163
        %2189 = vmatpush1.msra.mxu0 %v2162
        %2190 = vmatprep.subr.mxu0 %v2161
        %2191 = vmatpush1.msra.mxu0 %v2160
        %2192 = vmatprep.subr.mxu0 %v2159
        %2193 = vmatpush1.msra.mxu0 %v2158
        %2194 = vmatprep.subr.mxu0 %v2157
        %2195 = vmatpush1.msra.mxu0 %v2156
        %2196 = vmatprep.subr.mxu0 %v2155
        %2197 = vmatpush1.msra.mxu0 %v2154
        %2198 = vmatprep.subr.mxu0 %v2153
        %2199 = vmatpush1.msra.mxu0 %v2152
        %2200 = vmatprep.subr.mxu0 %v2151
        %2201 = vmatpush1.msra.mxu0 %v2150
        %2202 = vmatprep.subr.mxu0 %v2149
        %2203 = vmatpush1.msra.mxu0 %v2148
        %2204 = vmatprep.subr.mxu0 %v2147
        %2205 = vmatpush1.msra.mxu0 %v2146
        %2206 = vmatprep.subr.mxu0 %v2145
        %2207 = vmatpush1.msra.mxu0 %v2144
        %2208 = vmatprep.subr.mxu0 %v2143
        %2209 = vmatpush1.msra.mxu0 %v2142
        %2210 = vmatprep.subr.mxu0 %v2141
        %2211 = vmatpush1.msra.mxu0 %v2140
        %2212 = vmatprep.subr.mxu0 %v2139
        %2213 = vmatpush1.msra.mxu0 %v2138
        %2214 = vmatprep.subr.mxu0 0.0
        %2215 = vmatpush2.msra.mxu0 0.0
        %2216 = vmatprep.subr.mxu0 0.0
        %2217 = vmatpush2.msra.mxu0 0.0
        %2218 = vmatprep.subr.mxu0 0.0
        %2219 = vmatpush2.msra.mxu0 0.0
        %2220 = vmatprep.subr.mxu0 0.0
        %2221 = vmatpush2.msra.mxu0 0.0
        %2222 = vmatprep.subr.mxu0 0.0
        %2223 = vmatpush2.msra.mxu0 0.0
        %2224 = vmatprep.subr.mxu0 0.0
        %2225 = vmatpush2.msra.mxu0 0.0
        %2226 = vmatprep.subr.mxu0 0.0
        %2227 = vmatpush2.msra.mxu0 0.0
        %2228 = vmatprep.subr.mxu0 0.0
        %2229 = vmatpush2.msra.mxu0 0.0
        %2230 = vmatprep.subr.mxu0 0.0
        %2231 = vmatpush2.msra.mxu0 0.0
        %2232 = vmatprep.subr.mxu0 0.0
        %2233 = vmatpush2.msra.mxu0 0.0
        %2234 = vmatprep.subr.mxu0 0.0
        %2235 = vmatpush2.msra.mxu0 0.0
        %2236 = vmatprep.subr.mxu0 0.0
        %2237 = vmatpush2.msra.mxu0 0.0
        %2238 = vmatprep.subr.mxu0 0.0
        %2239 = vmatpush2.msra.mxu0 0.0
        %2240 = vmatprep.subr.mxu0 0.0
        %2241 = vmatpush2.msra.mxu0 0.0
        %2242 = vmatprep.subr.mxu0 0.0
        %2243 = vmatpush2.msra.mxu0 0.0
        %2244 = vmatprep.subr.mxu0 0.0
        %2245 = vmatpush2.msra.mxu0 0.0
        %2246 = vmatprep.mubr.f32.mxu0 0.0
        %2247 = vmatmul.mubr.f32.gmra.mxu0 %v2137
        %v2248 = vpop.f32.mrf.mxu0
        %v2249 = vadd.f32 %v2175, %v2248
        %v2250 = vpop.f32.mrf.mxu0
        %v2251 = vadd.f32 %v2179, %v2250
        %2252 = vdwg.mxu0
        %v2253 = vld [vmem:[%s511] sm:$0xff]
        %v2254 = vmul.f32 %v2251, %v2253
        %v2255 = vadd.f32 %v2249, %v2254
        %v2256 = vlaneseq
        %v2257 = vand.u32 %v2256, 127
        %vm2258 = vcmp.lt.s32.totalorder %v2257, 8
        %v2259 = vmul.f32 %v2251, %v2251
        %v2260 = vsel %vm2258, %v2259, 1.0
        %v2261 = vmul.f32 %v2249, %v2249
        %v2262 = vadd.f32 %v2259, %v2261
        %v2263 = vlog2.pop %v2260
        %v2264 = vmul.f32 %v2263, 0.6931472
        %v2265 = vsub.f32 %v2262, %v2264
        %v2266 = vsub.f32 %v2265, 1.0
        %v2267 = vsel %vm2258, %v2266, 0.0
        %2268 = vst [vmem:[%s515] sm:$0xff] %v2267
        %v2269 = vld [vmem:[#allocation5] sm:$0xff]
        %v2270 = vld [vmem:[#allocation5 + $0x8] sm:$0xff]
        %v2271 = vld [vmem:[#allocation5 + $0x10] sm:$0xff]
        %v2272 = vld [vmem:[#allocation5 + $0x18] sm:$0xff]
        %v2273 = vld [vmem:[#allocation5 + $0x20] sm:$0xff]
        %v2274 = vld [vmem:[#allocation5 + $0x28] sm:$0xff]
        %v2275 = vld [vmem:[#allocation5 + $0x30] sm:$0xff]
        %v2276 = vld [vmem:[#allocation5 + $0x38] sm:$0xff]
        %v2277 = vld [vmem:[#allocation5 + $0x40] sm:$0xff]
        %v2278 = vld [vmem:[#allocation5 + $0x48] sm:$0xff]
        %v2279 = vld [vmem:[#allocation5 + $0x50] sm:$0xff]
        %v2280 = vld [vmem:[#allocation5 + $0x58] sm:$0xff]
        %v2281 = vld [vmem:[#allocation5 + $0x60] sm:$0xff]
        %v2282 = vld [vmem:[#allocation5 + $0x68] sm:$0xff]
        %v2283 = vld [vmem:[#allocation5 + $0x70] sm:$0xff]
        %v2284 = vld [vmem:[#allocation5 + $0x78] sm:$0xff]
        %v2285 = vld [vmem:[#allocation5 + $0x80] sm:$0xff]
        %v2286 = vld [vmem:[#allocation5 + $0x88] sm:$0xff]
        %v2287 = vld [vmem:[#allocation5 + $0x90] sm:$0xff]
        %v2288 = vld [vmem:[#allocation5 + $0x98] sm:$0xff]
        %v2289 = vld [vmem:[#allocation5 + $0xa0] sm:$0xff]
        %v2290 = vld [vmem:[#allocation5 + $0xa8] sm:$0xff]
        %v2291 = vld [vmem:[#allocation5 + $0xb0] sm:$0xff]
        %v2292 = vld [vmem:[#allocation5 + $0xb8] sm:$0xff]
        %v2293 = vld [vmem:[#allocation5 + $0xc0] sm:$0xff]
        %v2294 = vld [vmem:[#allocation5 + $0xc8] sm:$0xff]
        %v2295 = vld [vmem:[#allocation5 + $0xd0] sm:$0xff]
        %v2296 = vld [vmem:[#allocation5 + $0xd8] sm:$0xff]
        %v2297 = vld [vmem:[#allocation5 + $0xe0] sm:$0xff]
        %v2298 = vld [vmem:[#allocation5 + $0xe8] sm:$0xff]
        %v2299 = vld [vmem:[#allocation5 + $0xf0] sm:$0xff]
        %v2300 = vld [vmem:[#allocation5 + $0xf8] sm:$0xff]
        %v2301 = vld [vmem:[#allocation5 + $0x100] sm:$0xff]
        %v2302 = vld [vmem:[#allocation5 + $0x108] sm:$0xff]
        %v2303 = vld [vmem:[#allocation5 + $0x110] sm:$0xff]
        %v2304 = vld [vmem:[#allocation5 + $0x118] sm:$0xff]
        %v2305 = vld [vmem:[#allocation5 + $0x120] sm:$0xff]
        %v2306 = vld [vmem:[#allocation5 + $0x128] sm:$0xff]
        %v2307 = vld [vmem:[#allocation5 + $0x130] sm:$0xff]
        %v2308 = vld [vmem:[#allocation5 + $0x138] sm:$0xff]
        %v2309 = vld [vmem:[#allocation5 + $0x140] sm:$0xff]
        %v2310 = vld [vmem:[#allocation5 + $0x148] sm:$0xff]
        %v2311 = vld [vmem:[#allocation5 + $0x150] sm:$0xff]
        %v2312 = vld [vmem:[#allocation5 + $0x158] sm:$0xff]
        %v2313 = vld [vmem:[#allocation5 + $0x160] sm:$0xff]
        %v2314 = vld [vmem:[#allocation5 + $0x168] sm:$0xff]
        %v2315 = vld [vmem:[#allocation5 + $0x170] sm:$0xff]
        %v2316 = vld [vmem:[#allocation5 + $0x178] sm:$0xff]
        %v2317 = vld [vmem:[#allocation5 + $0x180] sm:$0xff]
        %v2318 = vld [vmem:[#allocation5 + $0x188] sm:$0xff]
        %v2319 = vld [vmem:[#allocation5 + $0x190] sm:$0xff]
        %v2320 = vld [vmem:[#allocation5 + $0x198] sm:$0xff]
        %v2321 = vld [vmem:[#allocation5 + $0x1a0] sm:$0xff]
        %v2322 = vld [vmem:[#allocation5 + $0x1a8] sm:$0xff]
        %v2323 = vld [vmem:[#allocation5 + $0x1b0] sm:$0xff]
        %v2324 = vld [vmem:[#allocation5 + $0x1b8] sm:$0xff]
        %v2325 = vld [vmem:[#allocation5 + $0x1c0] sm:$0xff]
        %v2326 = vld [vmem:[#allocation5 + $0x1c8] sm:$0xff]
        %v2327 = vld [vmem:[#allocation5 + $0x1d0] sm:$0xff]
        %v2328 = vld [vmem:[#allocation5 + $0x1d8] sm:$0xff]
        %v2329 = vld [vmem:[#allocation5 + $0x1e0] sm:$0xff]
        %v2330 = vld [vmem:[#allocation5 + $0x1e8] sm:$0xff]
        %v2331 = vld [vmem:[#allocation5 + $0x1f0] sm:$0xff]
        %v2332 = vld [vmem:[#allocation5 + $0x1f8] sm:$0xff]
        %v2333 = vld [vmem:[#allocation5 + $0x200] sm:$0xff]
        %v2334 = vld [vmem:[#allocation5 + $0x208] sm:$0xff]
        %v2335 = vld [vmem:[#allocation5 + $0x210] sm:$0xff]
        %v2336 = vld [vmem:[#allocation5 + $0x218] sm:$0xff]
        %v2337 = vld [vmem:[#allocation5 + $0x220] sm:$0xff]
        %v2338 = vld [vmem:[#allocation5 + $0x228] sm:$0xff]
        %v2339 = vld [vmem:[#allocation5 + $0x230] sm:$0xff]
        %v2340 = vld [vmem:[#allocation5 + $0x238] sm:$0xff]
        %v2341 = vld [vmem:[#allocation5 + $0x240] sm:$0xff]
        %v2342 = vld [vmem:[#allocation5 + $0x248] sm:$0xff]
        %v2343 = vld [vmem:[#allocation5 + $0x250] sm:$0xff]
        %v2344 = vld [vmem:[#allocation5 + $0x258] sm:$0xff]
        %v2345 = vld [vmem:[#allocation5 + $0x260] sm:$0xff]
        %v2346 = vld [vmem:[#allocation5 + $0x268] sm:$0xff]
        %v2347 = vld [vmem:[#allocation5 + $0x270] sm:$0xff]
        %v2348 = vld [vmem:[#allocation5 + $0x278] sm:$0xff]
        %v2349 = vld [vmem:[#allocation5 + $0x280] sm:$0xff]
        %v2350 = vld [vmem:[#allocation5 + $0x288] sm:$0xff]
        %v2351 = vld [vmem:[#allocation5 + $0x290] sm:$0xff]
        %v2352 = vld [vmem:[#allocation5 + $0x298] sm:$0xff]
        %v2353 = vld [vmem:[#allocation5 + $0x2a0] sm:$0xff]
        %v2354 = vld [vmem:[#allocation5 + $0x2a8] sm:$0xff]
        %v2355 = vld [vmem:[#allocation5 + $0x2b0] sm:$0xff]
        %v2356 = vld [vmem:[#allocation5 + $0x2b8] sm:$0xff]
        %v2357 = vld [vmem:[#allocation5 + $0x2c0] sm:$0xff]
        %v2358 = vld [vmem:[#allocation5 + $0x2c8] sm:$0xff]
        %v2359 = vld [vmem:[#allocation5 + $0x2d0] sm:$0xff]
        %v2360 = vld [vmem:[#allocation5 + $0x2d8] sm:$0xff]
        %v2361 = vld [vmem:[#allocation5 + $0x2e0] sm:$0xff]
        %v2362 = vld [vmem:[#allocation5 + $0x2e8] sm:$0xff]
        %v2363 = vld [vmem:[#allocation5 + $0x2f0] sm:$0xff]
        %v2364 = vld [vmem:[#allocation5 + $0x2f8] sm:$0xff]
        %v2365 = vld [vmem:[#allocation5 + $0x300] sm:$0xff]
        %v2366 = vld [vmem:[#allocation5 + $0x308] sm:$0xff]
        %v2367 = vld [vmem:[#allocation5 + $0x310] sm:$0xff]
        %v2368 = vld [vmem:[#allocation5 + $0x318] sm:$0xff]
        %v2369 = vld [vmem:[#allocation5 + $0x320] sm:$0xff]
        %v2370 = vld [vmem:[#allocation5 + $0x328] sm:$0xff]
        %v2371 = vld [vmem:[#allocation5 + $0x330] sm:$0xff]
        %v2372 = vld [vmem:[#allocation5 + $0x338] sm:$0xff]
        %v2373 = vld [vmem:[#allocation5 + $0x340] sm:$0xff]
        %v2374 = vld [vmem:[#allocation5 + $0x348] sm:$0xff]
        %v2375 = vld [vmem:[#allocation5 + $0x350] sm:$0xff]
        %v2376 = vld [vmem:[#allocation5 + $0x358] sm:$0xff]
        %v2377 = vld [vmem:[#allocation5 + $0x360] sm:$0xff]
        %v2378 = vld [vmem:[#allocation5 + $0x368] sm:$0xff]
        %v2379 = vld [vmem:[#allocation5 + $0x370] sm:$0xff]
        %v2380 = vld [vmem:[#allocation5 + $0x378] sm:$0xff]
        %v2381 = vld [vmem:[#allocation5 + $0x380] sm:$0xff]
        %v2382 = vld [vmem:[#allocation5 + $0x388] sm:$0xff]
        %v2383 = vld [vmem:[#allocation5 + $0x390] sm:$0xff]
        %v2384 = vld [vmem:[#allocation5 + $0x398] sm:$0xff]
        %v2385 = vld [vmem:[#allocation5 + $0x3a0] sm:$0xff]
        %v2386 = vld [vmem:[#allocation5 + $0x3a8] sm:$0xff]
        %v2387 = vld [vmem:[#allocation5 + $0x3b0] sm:$0xff]
        %v2388 = vld [vmem:[#allocation5 + $0x3b8] sm:$0xff]
        %v2389 = vld [vmem:[#allocation5 + $0x3c0] sm:$0xff]
        %v2390 = vld [vmem:[#allocation5 + $0x3c8] sm:$0xff]
        %v2391 = vld [vmem:[#allocation5 + $0x3d0] sm:$0xff]
        %v2392 = vld [vmem:[#allocation5 + $0x3d8] sm:$0xff]
        %v2393 = vld [vmem:[#allocation5 + $0x3e0] sm:$0xff]
        %v2394 = vld [vmem:[#allocation5 + $0x3e8] sm:$0xff]
        %v2395 = vld [vmem:[#allocation5 + $0x3f0] sm:$0xff]
        %v2396 = vld [vmem:[#allocation5 + $0x3f8] sm:$0xff]
        %v2397 = vld [vmem:[%s7] sm:$0xff]
        %v2399 = vlaneseq
        %v2400 = vshrl.u32 %v2399, 7
        %v2401 = vsub.s32 0, %v2400
        %v2402 = vrot.slane %v2397, %v2401
        %v2403 = vlaneseq
        %v2404 = vshrl.u32 %v2403, 7
        %v2405 = vsub.s32 1, %v2404
        %v2406 = vrot.slane %v2397, %v2405
        %v2407 = vlaneseq
        %v2408 = vshrl.u32 %v2407, 7
        %v2409 = vsub.s32 2, %v2408
        %v2410 = vrot.slane %v2397, %v2409
        %v2411 = vlaneseq
        %v2412 = vshrl.u32 %v2411, 7
        %v2413 = vsub.s32 3, %v2412
        %v2414 = vrot.slane %v2397, %v2413
        %v2415 = vlaneseq
        %v2416 = vshrl.u32 %v2415, 7
        %v2417 = vsub.s32 4, %v2416
        %v2418 = vrot.slane %v2397, %v2417
        %v2419 = vlaneseq
        %v2420 = vshrl.u32 %v2419, 7
        %v2421 = vsub.s32 5, %v2420
        %v2422 = vrot.slane %v2397, %v2421
        %v2423 = vlaneseq
        %v2424 = vshrl.u32 %v2423, 7
        %v2425 = vsub.s32 6, %v2424
        %v2426 = vrot.slane %v2397, %v2425
        %v2427 = vlaneseq
        %v2428 = vshrl.u32 %v2427, 7
        %v2429 = vsub.s32 7, %v2428
        %v2430 = vrot.slane %v2397, %v2429
        %2439 = vmatprep.subr.mxu0 %v2390
        %2440 = vmatpush1.msra.mxu0 %v2389
        %2441 = vmatprep.subr.mxu0 %v2382
        %2442 = vmatpush1.msra.mxu0 %v2381
        %2443 = vmatprep.subr.mxu0 %v2374
        %2444 = vmatpush1.msra.mxu0 %v2373
        %2445 = vmatprep.subr.mxu0 %v2366
        %2446 = vmatpush1.msra.mxu0 %v2365
        %2447 = vmatprep.subr.mxu0 %v2358
        %2448 = vmatpush1.msra.mxu0 %v2357
        %2449 = vmatprep.subr.mxu0 %v2350
        %2450 = vmatpush1.msra.mxu0 %v2349
        %2451 = vmatprep.subr.mxu0 %v2342
        %2452 = vmatpush1.msra.mxu0 %v2341
        %2453 = vmatprep.subr.mxu0 %v2334
        %2454 = vmatpush1.msra.mxu0 %v2333
        %2455 = vmatprep.subr.mxu0 %v2326
        %2456 = vmatpush1.msra.mxu0 %v2325
        %2457 = vmatprep.subr.mxu0 %v2318
        %2458 = vmatpush1.msra.mxu0 %v2317
        %2459 = vmatprep.subr.mxu0 %v2310
        %2460 = vmatpush1.msra.mxu0 %v2309
        %2461 = vmatprep.subr.mxu0 %v2302
        %2462 = vmatpush1.msra.mxu0 %v2301
        %2463 = vmatprep.subr.mxu0 %v2294
        %2464 = vmatpush1.msra.mxu0 %v2293
        %2465 = vmatprep.subr.mxu0 %v2286
        %2466 = vmatpush1.msra.mxu0 %v2285
        %2467 = vmatprep.subr.mxu0 %v2278
        %2468 = vmatpush1.msra.mxu0 %v2277
        %2469 = vmatprep.subr.mxu0 %v2270
        %2470 = vmatpush1.msra.mxu0 %v2269
        %2471 = vmatprep.subr.mxu0 0.0
        %2472 = vmatpush2.msra.mxu0 0.0
        %2473 = vmatprep.subr.mxu0 0.0
        %2474 = vmatpush2.msra.mxu0 0.0
        %2475 = vmatprep.subr.mxu0 0.0
        %2476 = vmatpush2.msra.mxu0 0.0
        %2477 = vmatprep.subr.mxu0 0.0
        %2478 = vmatpush2.msra.mxu0 0.0
        %2479 = vmatprep.subr.mxu0 0.0
        %2480 = vmatpush2.msra.mxu0 0.0
        %2481 = vmatprep.subr.mxu0 0.0
        %2482 = vmatpush2.msra.mxu0 0.0
        %2483 = vmatprep.subr.mxu0 0.0
        %2484 = vmatpush2.msra.mxu0 0.0
        %2485 = vmatprep.subr.mxu0 0.0
        %2486 = vmatpush2.msra.mxu0 0.0
        %2487 = vmatprep.subr.mxu0 0.0
        %2488 = vmatpush2.msra.mxu0 0.0
        %2489 = vmatprep.subr.mxu0 0.0
        %2490 = vmatpush2.msra.mxu0 0.0
        %2491 = vmatprep.subr.mxu0 0.0
        %2492 = vmatpush2.msra.mxu0 0.0
        %2493 = vmatprep.subr.mxu0 0.0
        %2494 = vmatpush2.msra.mxu0 0.0
        %2495 = vmatprep.subr.mxu0 0.0
        %2496 = vmatpush2.msra.mxu0 0.0
        %2497 = vmatprep.subr.mxu0 0.0
        %2498 = vmatpush2.msra.mxu0 0.0
        %2499 = vmatprep.subr.mxu0 0.0
        %2500 = vmatpush2.msra.mxu0 0.0
        %2501 = vmatprep.subr.mxu0 0.0
        %2502 = vmatpush2.msra.mxu0 0.0
        %2503 = vmatprep.mubr.f32.mxu0 0.0
        %2504 = vmatmul.mubr.f32.gmra.mxu0 %v2255
        %v2505 = vpop.f32.mrf.mxu0
        %v2506 = vadd.f32 %v2402, %v2505
        %v2507 = vpop.f32.mrf.mxu0
        %v2508 = vadd.f32 %v2406, %v2507
        %2509 = vdwg.mxu0
        %2510 = vmatprep.subr.mxu0 %v2392
        %2511 = vmatpush1.msra.mxu0 %v2391
        %2512 = vmatprep.subr.mxu0 %v2384
        %2513 = vmatpush1.msra.mxu0 %v2383
        %2514 = vmatprep.subr.mxu0 %v2376
        %2515 = vmatpush1.msra.mxu0 %v2375
        %2516 = vmatprep.subr.mxu0 %v2368
        %2517 = vmatpush1.msra.mxu0 %v2367
        %2518 = vmatprep.subr.mxu0 %v2360
        %2519 = vmatpush1.msra.mxu0 %v2359
        %2520 = vmatprep.subr.mxu0 %v2352
        %2521 = vmatpush1.msra.mxu0 %v2351
        %2522 = vmatprep.subr.mxu0 %v2344
        %2523 = vmatpush1.msra.mxu0 %v2343
        %2524 = vmatprep.subr.mxu0 %v2336
        %2525 = vmatpush1.msra.mxu0 %v2335
        %2526 = vmatprep.subr.mxu0 %v2328
        %2527 = vmatpush1.msra.mxu0 %v2327
        %2528 = vmatprep.subr.mxu0 %v2320
        %2529 = vmatpush1.msra.mxu0 %v2319
        %2530 = vmatprep.subr.mxu0 %v2312
        %2531 = vmatpush1.msra.mxu0 %v2311
        %2532 = vmatprep.subr.mxu0 %v2304
        %2533 = vmatpush1.msra.mxu0 %v2303
        %2534 = vmatprep.subr.mxu0 %v2296
        %2535 = vmatpush1.msra.mxu0 %v2295
        %2536 = vmatprep.subr.mxu0 %v2288
        %2537 = vmatpush1.msra.mxu0 %v2287
        %2538 = vmatprep.subr.mxu0 %v2280
        %2539 = vmatpush1.msra.mxu0 %v2279
        %2540 = vmatprep.subr.mxu0 %v2272
        %2541 = vmatpush1.msra.mxu0 %v2271
        %2542 = vmatprep.subr.mxu0 0.0
        %2543 = vmatpush2.msra.mxu0 0.0
        %2544 = vmatprep.subr.mxu0 0.0
        %2545 = vmatpush2.msra.mxu0 0.0
        %2546 = vmatprep.subr.mxu0 0.0
        %2547 = vmatpush2.msra.mxu0 0.0
        %2548 = vmatprep.subr.mxu0 0.0
        %2549 = vmatpush2.msra.mxu0 0.0
        %2550 = vmatprep.subr.mxu0 0.0
        %2551 = vmatpush2.msra.mxu0 0.0
        %2552 = vmatprep.subr.mxu0 0.0
        %2553 = vmatpush2.msra.mxu0 0.0
        %2554 = vmatprep.subr.mxu0 0.0
        %2555 = vmatpush2.msra.mxu0 0.0
        %2556 = vmatprep.subr.mxu0 0.0
        %2557 = vmatpush2.msra.mxu0 0.0
        %2558 = vmatprep.subr.mxu0 0.0
        %2559 = vmatpush2.msra.mxu0 0.0
        %2560 = vmatprep.subr.mxu0 0.0
        %2561 = vmatpush2.msra.mxu0 0.0
        %2562 = vmatprep.subr.mxu0 0.0
        %2563 = vmatpush2.msra.mxu0 0.0
        %2564 = vmatprep.subr.mxu0 0.0
        %2565 = vmatpush2.msra.mxu0 0.0
        %2566 = vmatprep.subr.mxu0 0.0
        %2567 = vmatpush2.msra.mxu0 0.0
        %2568 = vmatprep.subr.mxu0 0.0
        %2569 = vmatpush2.msra.mxu0 0.0
        %2570 = vmatprep.subr.mxu0 0.0
        %2571 = vmatpush2.msra.mxu0 0.0
        %2572 = vmatprep.subr.mxu0 0.0
        %2573 = vmatpush2.msra.mxu0 0.0
        %2574 = vmatprep.mubr.f32.mxu0 0.0
        %2575 = vmatmul.mubr.f32.gmra.mxu0 %v2255
        %v2576 = vpop.f32.mrf.mxu0
        %v2577 = vadd.f32 %v2410, %v2576
        %v2578 = vpop.f32.mrf.mxu0
        %v2579 = vadd.f32 %v2414, %v2578
        %2580 = vdwg.mxu0
        %2581 = vmatprep.subr.mxu0 %v2394
        %2582 = vmatpush1.msra.mxu0 %v2393
        %2583 = vmatprep.subr.mxu0 %v2386
        %2584 = vmatpush1.msra.mxu0 %v2385
        %2585 = vmatprep.subr.mxu0 %v2378
        %2586 = vmatpush1.msra.mxu0 %v2377
        %2587 = vmatprep.subr.mxu0 %v2370
        %2588 = vmatpush1.msra.mxu0 %v2369
        %2589 = vmatprep.subr.mxu0 %v2362
        %2590 = vmatpush1.msra.mxu0 %v2361
        %2591 = vmatprep.subr.mxu0 %v2354
        %2592 = vmatpush1.msra.mxu0 %v2353
        %2593 = vmatprep.subr.mxu0 %v2346
        %2594 = vmatpush1.msra.mxu0 %v2345
        %2595 = vmatprep.subr.mxu0 %v2338
        %2596 = vmatpush1.msra.mxu0 %v2337
        %2597 = vmatprep.subr.mxu0 %v2330
        %2598 = vmatpush1.msra.mxu0 %v2329
        %2599 = vmatprep.subr.mxu0 %v2322
        %2600 = vmatpush1.msra.mxu0 %v2321
        %2601 = vmatprep.subr.mxu0 %v2314
        %2602 = vmatpush1.msra.mxu0 %v2313
        %2603 = vmatprep.subr.mxu0 %v2306
        %2604 = vmatpush1.msra.mxu0 %v2305
        %2605 = vmatprep.subr.mxu0 %v2298
        %2606 = vmatpush1.msra.mxu0 %v2297
        %2607 = vmatprep.subr.mxu0 %v2290
        %2608 = vmatpush1.msra.mxu0 %v2289
        %2609 = vmatprep.subr.mxu0 %v2282
        %2610 = vmatpush1.msra.mxu0 %v2281
        %2611 = vmatprep.subr.mxu0 %v2274
        %2612 = vmatpush1.msra.mxu0 %v2273
        %2613 = vmatprep.subr.mxu0 0.0
        %2614 = vmatpush2.msra.mxu0 0.0
        %2615 = vmatprep.subr.mxu0 0.0
        %2616 = vmatpush2.msra.mxu0 0.0
        %2617 = vmatprep.subr.mxu0 0.0
        %2618 = vmatpush2.msra.mxu0 0.0
        %2619 = vmatprep.subr.mxu0 0.0
        %2620 = vmatpush2.msra.mxu0 0.0
        %2621 = vmatprep.subr.mxu0 0.0
        %2622 = vmatpush2.msra.mxu0 0.0
        %2623 = vmatprep.subr.mxu0 0.0
        %2624 = vmatpush2.msra.mxu0 0.0
        %2625 = vmatprep.subr.mxu0 0.0
        %2626 = vmatpush2.msra.mxu0 0.0
        %2627 = vmatprep.subr.mxu0 0.0
        %2628 = vmatpush2.msra.mxu0 0.0
        %2629 = vmatprep.subr.mxu0 0.0
        %2630 = vmatpush2.msra.mxu0 0.0
        %2631 = vmatprep.subr.mxu0 0.0
        %2632 = vmatpush2.msra.mxu0 0.0
        %2633 = vmatprep.subr.mxu0 0.0
        %2634 = vmatpush2.msra.mxu0 0.0
        %2635 = vmatprep.subr.mxu0 0.0
        %2636 = vmatpush2.msra.mxu0 0.0
        %2637 = vmatprep.subr.mxu0 0.0
        %2638 = vmatpush2.msra.mxu0 0.0
        %2639 = vmatprep.subr.mxu0 0.0
        %2640 = vmatpush2.msra.mxu0 0.0
        %2641 = vmatprep.subr.mxu0 0.0
        %2642 = vmatpush2.msra.mxu0 0.0
        %2643 = vmatprep.subr.mxu0 0.0
        %2644 = vmatpush2.msra.mxu0 0.0
        %2645 = vmatprep.mubr.f32.mxu0 0.0
        %2646 = vmatmul.mubr.f32.gmra.mxu0 %v2255
        %v2647 = vpop.f32.mrf.mxu0
        %v2648 = vadd.f32 %v2418, %v2647
        %v2649 = vpop.f32.mrf.mxu0
        %v2650 = vadd.f32 %v2422, %v2649
        %2651 = vdwg.mxu0
        %2652 = vmatprep.subr.mxu0 %v2396
        %2653 = vmatpush1.msra.mxu0 %v2395
        %2654 = vmatprep.subr.mxu0 %v2388
        %2655 = vmatpush1.msra.mxu0 %v2387
        %2656 = vmatprep.subr.mxu0 %v2380
        %2657 = vmatpush1.msra.mxu0 %v2379
        %2658 = vmatprep.subr.mxu0 %v2372
        %2659 = vmatpush1.msra.mxu0 %v2371
        %2660 = vmatprep.subr.mxu0 %v2364
        %2661 = vmatpush1.msra.mxu0 %v2363
        %2662 = vmatprep.subr.mxu0 %v2356
        %2663 = vmatpush1.msra.mxu0 %v2355
        %2664 = vmatprep.subr.mxu0 %v2348
        %2665 = vmatpush1.msra.mxu0 %v2347
        %2666 = vmatprep.subr.mxu0 %v2340
        %2667 = vmatpush1.msra.mxu0 %v2339
        %2668 = vmatprep.subr.mxu0 %v2332
        %2669 = vmatpush1.msra.mxu0 %v2331
        %2670 = vmatprep.subr.mxu0 %v2324
        %2671 = vmatpush1.msra.mxu0 %v2323
        %2672 = vmatprep.subr.mxu0 %v2316
        %2673 = vmatpush1.msra.mxu0 %v2315
        %2674 = vmatprep.subr.mxu0 %v2308
        %2675 = vmatpush1.msra.mxu0 %v2307
        %2676 = vmatprep.subr.mxu0 %v2300
        %2677 = vmatpush1.msra.mxu0 %v2299
        %2678 = vmatprep.subr.mxu0 %v2292
        %2679 = vmatpush1.msra.mxu0 %v2291
        %2680 = vmatprep.subr.mxu0 %v2284
        %2681 = vmatpush1.msra.mxu0 %v2283
        %2682 = vmatprep.subr.mxu0 %v2276
        %2683 = vmatpush1.msra.mxu0 %v2275
        %2684 = vmatprep.subr.mxu0 0.0
        %2685 = vmatpush2.msra.mxu0 0.0
        %2686 = vmatprep.subr.mxu0 0.0
        %2687 = vmatpush2.msra.mxu0 0.0
        %2688 = vmatprep.subr.mxu0 0.0
        %2689 = vmatpush2.msra.mxu0 0.0
        %2690 = vmatprep.subr.mxu0 0.0
        %2691 = vmatpush2.msra.mxu0 0.0
        %2692 = vmatprep.subr.mxu0 0.0
        %2693 = vmatpush2.msra.mxu0 0.0
        %2694 = vmatprep.subr.mxu0 0.0
        %2695 = vmatpush2.msra.mxu0 0.0
        %2696 = vmatprep.subr.mxu0 0.0
        %2697 = vmatpush2.msra.mxu0 0.0
        %2698 = vmatprep.subr.mxu0 0.0
        %2699 = vmatpush2.msra.mxu0 0.0
        %2700 = vmatprep.subr.mxu0 0.0
        %2701 = vmatpush2.msra.mxu0 0.0
        %2702 = vmatprep.subr.mxu0 0.0
        %2703 = vmatpush2.msra.mxu0 0.0
        %2704 = vmatprep.subr.mxu0 0.0
        %2705 = vmatpush2.msra.mxu0 0.0
        %2706 = vmatprep.subr.mxu0 0.0
        %2707 = vmatpush2.msra.mxu0 0.0
        %2708 = vmatprep.subr.mxu0 0.0
        %2709 = vmatpush2.msra.mxu0 0.0
        %2710 = vmatprep.subr.mxu0 0.0
        %2711 = vmatpush2.msra.mxu0 0.0
        %2712 = vmatprep.subr.mxu0 0.0
        %2713 = vmatpush2.msra.mxu0 0.0
        %2714 = vmatprep.subr.mxu0 0.0
        %2715 = vmatpush2.msra.mxu0 0.0
        %2716 = vmatprep.mubr.f32.mxu0 0.0
        %2717 = vmatmul.mubr.f32.gmra.mxu0 %v2255
        %v2718 = vpop.f32.mrf.mxu0
        %v2719 = vadd.f32 %v2426, %v2718
        %v2720 = vpop.f32.mrf.mxu0
        %v2721 = vadd.f32 %v2430, %v2720
        %2722 = vdwg.mxu0
        %v2723 = vmax.f32 %v2506, 0.0
        %v2724 = vmax.f32 %v2508, 0.0
        %v2725 = vmax.f32 %v2577, 0.0
        %v2726 = vmax.f32 %v2579, 0.0
        %v2727 = vmax.f32 %v2648, 0.0
        %v2728 = vmax.f32 %v2650, 0.0
        %v2729 = vmax.f32 %v2719, 0.0
        %v2730 = vmax.f32 %v2721, 0.0
        %v2732 = vlaneseq
        %v2733 = vshrl.u32 %v2732, 7
        %v2734 = vsub.s32 0, %v2733
        %v2735 = vrot.slane %v773, %v2734
        %v2736 = vlaneseq
        %v2737 = vshrl.u32 %v2736, 7
        %v2738 = vsub.s32 1, %v2737
        %v2739 = vrot.slane %v773, %v2738
        %v2740 = vlaneseq
        %v2741 = vshrl.u32 %v2740, 7
        %v2742 = vsub.s32 2, %v2741
        %v2743 = vrot.slane %v773, %v2742
        %v2744 = vlaneseq
        %v2745 = vshrl.u32 %v2744, 7
        %v2746 = vsub.s32 3, %v2745
        %v2747 = vrot.slane %v773, %v2746
        %2752 = vmatprep.subr.mxu0 %v706
        %2753 = vmatpush1.msra.mxu0 %v705
        %2754 = vmatprep.subr.mxu0 %v702
        %2755 = vmatpush1.msra.mxu0 %v701
        %2756 = vmatprep.subr.mxu0 %v698
        %2757 = vmatpush1.msra.mxu0 %v697
        %2758 = vmatprep.subr.mxu0 %v694
        %2759 = vmatpush1.msra.mxu0 %v693
        %2760 = vmatprep.subr.mxu0 %v690
        %2761 = vmatpush1.msra.mxu0 %v689
        %2762 = vmatprep.subr.mxu0 %v686
        %2763 = vmatpush1.msra.mxu0 %v685
        %2764 = vmatprep.subr.mxu0 %v682
        %2765 = vmatpush1.msra.mxu0 %v681
        %2766 = vmatprep.subr.mxu0 %v678
        %2767 = vmatpush1.msra.mxu0 %v677
        %2768 = vmatprep.subr.mxu0 %v674
        %2769 = vmatpush1.msra.mxu0 %v673
        %2770 = vmatprep.subr.mxu0 %v670
        %2771 = vmatpush1.msra.mxu0 %v669
        %2772 = vmatprep.subr.mxu0 %v666
        %2773 = vmatpush1.msra.mxu0 %v665
        %2774 = vmatprep.subr.mxu0 %v662
        %2775 = vmatpush1.msra.mxu0 %v661
        %2776 = vmatprep.subr.mxu0 %v658
        %2777 = vmatpush1.msra.mxu0 %v657
        %2778 = vmatprep.subr.mxu0 %v654
        %2779 = vmatpush1.msra.mxu0 %v653
        %2780 = vmatprep.subr.mxu0 %v650
        %2781 = vmatpush1.msra.mxu0 %v649
        %2782 = vmatprep.subr.mxu0 %v646
        %2783 = vmatpush1.msra.mxu0 %v645
        %2784 = vmatprep.subr.mxu0 %v770
        %2785 = vmatpush2.msra.mxu0 %v769
        %2786 = vmatprep.subr.mxu0 %v766
        %2787 = vmatpush2.msra.mxu0 %v765
        %2788 = vmatprep.subr.mxu0 %v762
        %2789 = vmatpush2.msra.mxu0 %v761
        %2790 = vmatprep.subr.mxu0 %v758
        %2791 = vmatpush2.msra.mxu0 %v757
        %2792 = vmatprep.subr.mxu0 %v754
        %2793 = vmatpush2.msra.mxu0 %v753
        %2794 = vmatprep.subr.mxu0 %v750
        %2795 = vmatpush2.msra.mxu0 %v749
        %2796 = vmatprep.subr.mxu0 %v746
        %2797 = vmatpush2.msra.mxu0 %v745
        %2798 = vmatprep.subr.mxu0 %v742
        %2799 = vmatpush2.msra.mxu0 %v741
        %2800 = vmatprep.subr.mxu0 %v738
        %2801 = vmatpush2.msra.mxu0 %v737
        %2802 = vmatprep.subr.mxu0 %v734
        %2803 = vmatpush2.msra.mxu0 %v733
        %2804 = vmatprep.subr.mxu0 %v730
        %2805 = vmatpush2.msra.mxu0 %v729
        %2806 = vmatprep.subr.mxu0 %v726
        %2807 = vmatpush2.msra.mxu0 %v725
        %2808 = vmatprep.subr.mxu0 %v722
        %2809 = vmatpush2.msra.mxu0 %v721
        %2810 = vmatprep.subr.mxu0 %v718
        %2811 = vmatpush2.msra.mxu0 %v717
        %2812 = vmatprep.subr.mxu0 %v714
        %2813 = vmatpush2.msra.mxu0 %v713
        %2814 = vmatprep.subr.mxu0 %v710
        %2815 = vmatpush2.msra.mxu0 %v709
        %2816 = vmatprep.mubr.f32.mxu0 0.0
        %2817 = vmatmul.mubr.f32.gmra.mxu0 %v2723
        %v2818 = vpop.f32.mrf.mxu0
        %v2819 = vadd.f32 %v2735, %v2818
        %v2820 = vpop.f32.mrf.mxu0
        %v2821 = vadd.f32 %v2739, %v2820
        %2822 = vdwg.mxu0
        %2823 = vmatprep.subr.mxu0 %v708
        %2824 = vmatpush1.msra.mxu0 %v707
        %2825 = vmatprep.subr.mxu0 %v704
        %2826 = vmatpush1.msra.mxu0 %v703
        %2827 = vmatprep.subr.mxu0 %v700
        %2828 = vmatpush1.msra.mxu0 %v699
        %2829 = vmatprep.subr.mxu0 %v696
        %2830 = vmatpush1.msra.mxu0 %v695
        %2831 = vmatprep.subr.mxu0 %v692
        %2832 = vmatpush1.msra.mxu0 %v691
        %2833 = vmatprep.subr.mxu0 %v688
        %2834 = vmatpush1.msra.mxu0 %v687
        %2835 = vmatprep.subr.mxu0 %v684
        %2836 = vmatpush1.msra.mxu0 %v683
        %2837 = vmatprep.subr.mxu0 %v680
        %2838 = vmatpush1.msra.mxu0 %v679
        %2839 = vmatprep.subr.mxu0 %v676
        %2840 = vmatpush1.msra.mxu0 %v675
        %2841 = vmatprep.subr.mxu0 %v672
        %2842 = vmatpush1.msra.mxu0 %v671
        %2843 = vmatprep.subr.mxu0 %v668
        %2844 = vmatpush1.msra.mxu0 %v667
        %2845 = vmatprep.subr.mxu0 %v664
        %2846 = vmatpush1.msra.mxu0 %v663
        %2847 = vmatprep.subr.mxu0 %v660
        %2848 = vmatpush1.msra.mxu0 %v659
        %2849 = vmatprep.subr.mxu0 %v656
        %2850 = vmatpush1.msra.mxu0 %v655
        %2851 = vmatprep.subr.mxu0 %v652
        %2852 = vmatpush1.msra.mxu0 %v651
        %2853 = vmatprep.subr.mxu0 %v648
        %2854 = vmatpush1.msra.mxu0 %v647
        %2855 = vmatprep.subr.mxu0 %v772
        %2856 = vmatpush2.msra.mxu0 %v771
        %2857 = vmatprep.subr.mxu0 %v768
        %2858 = vmatpush2.msra.mxu0 %v767
        %2859 = vmatprep.subr.mxu0 %v764
        %2860 = vmatpush2.msra.mxu0 %v763
        %2861 = vmatprep.subr.mxu0 %v760
        %2862 = vmatpush2.msra.mxu0 %v759
        %2863 = vmatprep.subr.mxu0 %v756
        %2864 = vmatpush2.msra.mxu0 %v755
        %2865 = vmatprep.subr.mxu0 %v752
        %2866 = vmatpush2.msra.mxu0 %v751
        %2867 = vmatprep.subr.mxu0 %v748
        %2868 = vmatpush2.msra.mxu0 %v747
        %2869 = vmatprep.subr.mxu0 %v744
        %2870 = vmatpush2.msra.mxu0 %v743
        %2871 = vmatprep.subr.mxu0 %v740
        %2872 = vmatpush2.msra.mxu0 %v739
        %2873 = vmatprep.subr.mxu0 %v736
        %2874 = vmatpush2.msra.mxu0 %v735
        %2875 = vmatprep.subr.mxu0 %v732
        %2876 = vmatpush2.msra.mxu0 %v731
        %2877 = vmatprep.subr.mxu0 %v728
        %2878 = vmatpush2.msra.mxu0 %v727
        %2879 = vmatprep.subr.mxu0 %v724
        %2880 = vmatpush2.msra.mxu0 %v723
        %2881 = vmatprep.subr.mxu0 %v720
        %2882 = vmatpush2.msra.mxu0 %v719
        %2883 = vmatprep.subr.mxu0 %v716
        %2884 = vmatpush2.msra.mxu0 %v715
        %2885 = vmatprep.subr.mxu0 %v712
        %2886 = vmatpush2.msra.mxu0 %v711
        %2887 = vmatprep.mubr.f32.mxu0 0.0
        %2888 = vmatmul.mubr.f32.gmra.mxu0 %v2723
        %v2889 = vpop.f32.mrf.mxu0
        %v2890 = vadd.f32 %v2743, %v2889
        %v2891 = vpop.f32.mrf.mxu0
        %v2892 = vadd.f32 %v2747, %v2891
        %2893 = vdwg.mxu0
        %v2894 = vxor.u32 %v2819, 2147483648
        %v2895 = vmul.f32 %v2894, 1.442695
        %v2896 = vpow.pop %v2895
        %v2897 = vadd.f32 %v2896, 1.0
        %v2898 = vrcp.pop %v2897
        %v2899 = vmul.f32 1.0, %v2898
        %v2900 = vxor.u32 %v2821, 2147483648
        %v2901 = vmul.f32 %v2900, 1.442695
        %v2902 = vpow.pop %v2901
        %v2903 = vadd.f32 %v2902, 1.0
        %v2904 = vrcp.pop %v2903
        %v2905 = vmul.f32 1.0, %v2904
        %v2906 = vtanh.pop %v2890
        %v2907 = vxor.u32 %v2892, 2147483648
        %v2908 = vmul.f32 %v2907, 1.442695
        %v2909 = vpow.pop %v2908
        %v2910 = vadd.f32 %v2909, 1.0
        %v2911 = vrcp.pop %v2910
        %v2912 = vmul.f32 1.0, %v2911
        %v2913 = vmul.f32 %v2905, 0.0
        %v2914 = vmul.f32 %v2899, %v2906
        %v2915 = vadd.f32 %v2913, %v2914
        %v2916 = vtanh.pop %v2915
        %v2917 = vmul.f32 %v2912, %v2916
        %v2918 = vxor.u32 %v2917, 2147483648
        %v2919 = vmul.f32 %v2918, 1.442695
        %v2920 = vpow.pop %v2919
        %v2921 = vadd.f32 %v2920, 1.0
        %v2922 = vrcp.pop %v2921
        %v2923 = vmul.f32 1.0, %v2922
        %2924 = vst [vmem:[%s501] sm:$0xff] %v2923
        %2925 = vmatprep.subr.mxu0 %v706
        %2926 = vmatpush1.msra.mxu0 %v705
        %2927 = vmatprep.subr.mxu0 %v702
        %2928 = vmatpush1.msra.mxu0 %v701
        %2929 = vmatprep.subr.mxu0 %v698
        %2930 = vmatpush1.msra.mxu0 %v697
        %2931 = vmatprep.subr.mxu0 %v694
        %2932 = vmatpush1.msra.mxu0 %v693
        %2933 = vmatprep.subr.mxu0 %v690
        %2934 = vmatpush1.msra.mxu0 %v689
        %2935 = vmatprep.subr.mxu0 %v686
        %2936 = vmatpush1.msra.mxu0 %v685
        %2937 = vmatprep.subr.mxu0 %v682
        %2938 = vmatpush1.msra.mxu0 %v681
        %2939 = vmatprep.subr.mxu0 %v678
        %2940 = vmatpush1.msra.mxu0 %v677
        %2941 = vmatprep.subr.mxu0 %v674
        %2942 = vmatpush1.msra.mxu0 %v673
        %2943 = vmatprep.subr.mxu0 %v670
        %2944 = vmatpush1.msra.mxu0 %v669
        %2945 = vmatprep.subr.mxu0 %v666
        %2946 = vmatpush1.msra.mxu0 %v665
        %2947 = vmatprep.subr.mxu0 %v662
        %2948 = vmatpush1.msra.mxu0 %v661
        %2949 = vmatprep.subr.mxu0 %v658
        %2950 = vmatpush1.msra.mxu0 %v657
        %2951 = vmatprep.subr.mxu0 %v654
        %2952 = vmatpush1.msra.mxu0 %v653
        %2953 = vmatprep.subr.mxu0 %v650
        %2954 = vmatpush1.msra.mxu0 %v649
        %2955 = vmatprep.subr.mxu0 %v646
        %2956 = vmatpush1.msra.mxu0 %v645
        %2957 = vmatprep.subr.mxu0 %v770
        %2958 = vmatpush2.msra.mxu0 %v769
        %2959 = vmatprep.subr.mxu0 %v766
        %2960 = vmatpush2.msra.mxu0 %v765
        %2961 = vmatprep.subr.mxu0 %v762
        %2962 = vmatpush2.msra.mxu0 %v761
        %2963 = vmatprep.subr.mxu0 %v758
        %2964 = vmatpush2.msra.mxu0 %v757
        %2965 = vmatprep.subr.mxu0 %v754
        %2966 = vmatpush2.msra.mxu0 %v753
        %2967 = vmatprep.subr.mxu0 %v750
        %2968 = vmatpush2.msra.mxu0 %v749
        %2969 = vmatprep.subr.mxu0 %v746
        %2970 = vmatpush2.msra.mxu0 %v745
        %2971 = vmatprep.subr.mxu0 %v742
        %2972 = vmatpush2.msra.mxu0 %v741
        %2973 = vmatprep.subr.mxu0 %v738
        %2974 = vmatpush2.msra.mxu0 %v737
        %2975 = vmatprep.subr.mxu0 %v734
        %2976 = vmatpush2.msra.mxu0 %v733
        %2977 = vmatprep.subr.mxu0 %v730
        %2978 = vmatpush2.msra.mxu0 %v729
        %2979 = vmatprep.subr.mxu0 %v726
        %2980 = vmatpush2.msra.mxu0 %v725
        %2981 = vmatprep.subr.mxu0 %v722
        %2982 = vmatpush2.msra.mxu0 %v721
        %2983 = vmatprep.subr.mxu0 %v718
        %2984 = vmatpush2.msra.mxu0 %v717
        %2985 = vmatprep.subr.mxu0 %v714
        %2986 = vmatpush2.msra.mxu0 %v713
        %2987 = vmatprep.subr.mxu0 %v710
        %2988 = vmatpush2.msra.mxu0 %v709
        %2989 = vmatprep.mubr.f32.mxu0 %v2917
        %2990 = vmatmul.mubr.f32.gmra.mxu0 %v2724
        %v2991 = vpop.f32.mrf.mxu0
        %v2992 = vadd.f32 %v2735, %v2991
        %v2993 = vpop.f32.mrf.mxu0
        %v2994 = vadd.f32 %v2739, %v2993
        %2995 = vdwg.mxu0
        %2996 = vmatprep.subr.mxu0 %v708
        %2997 = vmatpush1.msra.mxu0 %v707
        %2998 = vmatprep.subr.mxu0 %v704
        %2999 = vmatpush1.msra.mxu0 %v703
        %3000 = vmatprep.subr.mxu0 %v700
        %3001 = vmatpush1.msra.mxu0 %v699
        %3002 = vmatprep.subr.mxu0 %v696
        %3003 = vmatpush1.msra.mxu0 %v695
        %3004 = vmatprep.subr.mxu0 %v692
        %3005 = vmatpush1.msra.mxu0 %v691
        %3006 = vmatprep.subr.mxu0 %v688
        %3007 = vmatpush1.msra.mxu0 %v687
        %3008 = vmatprep.subr.mxu0 %v684
        %3009 = vmatpush1.msra.mxu0 %v683
        %3010 = vmatprep.subr.mxu0 %v680
        %3011 = vmatpush1.msra.mxu0 %v679
        %3012 = vmatprep.subr.mxu0 %v676
        %3013 = vmatpush1.msra.mxu0 %v675
        %3014 = vmatprep.subr.mxu0 %v672
        %3015 = vmatpush1.msra.mxu0 %v671
        %3016 = vmatprep.subr.mxu0 %v668
        %3017 = vmatpush1.msra.mxu0 %v667
        %3018 = vmatprep.subr.mxu0 %v664
        %3019 = vmatpush1.msra.mxu0 %v663
        %3020 = vmatprep.subr.mxu0 %v660
        %3021 = vmatpush1.msra.mxu0 %v659
        %3022 = vmatprep.subr.mxu0 %v656
        %3023 = vmatpush1.msra.mxu0 %v655
        %3024 = vmatprep.subr.mxu0 %v652
        %3025 = vmatpush1.msra.mxu0 %v651
        %3026 = vmatprep.subr.mxu0 %v648
        %3027 = vmatpush1.msra.mxu0 %v647
        %3028 = vmatprep.subr.mxu0 %v772
        %3029 = vmatpush2.msra.mxu0 %v771
        %3030 = vmatprep.subr.mxu0 %v768
        %3031 = vmatpush2.msra.mxu0 %v767
        %3032 = vmatprep.subr.mxu0 %v764
        %3033 = vmatpush2.msra.mxu0 %v763
        %3034 = vmatprep.subr.mxu0 %v760
        %3035 = vmatpush2.msra.mxu0 %v759
        %3036 = vmatprep.subr.mxu0 %v756
        %3037 = vmatpush2.msra.mxu0 %v755
        %3038 = vmatprep.subr.mxu0 %v752
        %3039 = vmatpush2.msra.mxu0 %v751
        %3040 = vmatprep.subr.mxu0 %v748
        %3041 = vmatpush2.msra.mxu0 %v747
        %3042 = vmatprep.subr.mxu0 %v744
        %3043 = vmatpush2.msra.mxu0 %v743
        %3044 = vmatprep.subr.mxu0 %v740
        %3045 = vmatpush2.msra.mxu0 %v739
        %3046 = vmatprep.subr.mxu0 %v736
        %3047 = vmatpush2.msra.mxu0 %v735
        %3048 = vmatprep.subr.mxu0 %v732
        %3049 = vmatpush2.msra.mxu0 %v731
        %3050 = vmatprep.subr.mxu0 %v728
        %3051 = vmatpush2.msra.mxu0 %v727
        %3052 = vmatprep.subr.mxu0 %v724
        %3053 = vmatpush2.msra.mxu0 %v723
        %3054 = vmatprep.subr.mxu0 %v720
        %3055 = vmatpush2.msra.mxu0 %v719
        %3056 = vmatprep.subr.mxu0 %v716
        %3057 = vmatpush2.msra.mxu0 %v715
        %3058 = vmatprep.subr.mxu0 %v712
        %3059 = vmatpush2.msra.mxu0 %v711
        %3060 = vmatprep.mubr.f32.mxu0 %v2917
        %3061 = vmatmul.mubr.f32.gmra.mxu0 %v2724
        %v3062 = vpop.f32.mrf.mxu0
        %v3063 = vadd.f32 %v2743, %v3062
        %v3064 = vpop.f32.mrf.mxu0
        %v3065 = vadd.f32 %v2747, %v3064
        %3066 = vdwg.mxu0
        %v3067 = vxor.u32 %v2992, 2147483648
        %v3068 = vmul.f32 %v3067, 1.442695
        %v3069 = vpow.pop %v3068
        %v3070 = vadd.f32 %v3069, 1.0
        %v3071 = vrcp.pop %v3070
        %v3072 = vmul.f32 1.0, %v3071
        %v3073 = vxor.u32 %v2994, 2147483648
        %v3074 = vmul.f32 %v3073, 1.442695
        %v3075 = vpow.pop %v3074
        %v3076 = vadd.f32 %v3075, 1.0
        %v3077 = vrcp.pop %v3076
        %v3078 = vmul.f32 1.0, %v3077
        %v3079 = vtanh.pop %v3063
        %v3080 = vxor.u32 %v3065, 2147483648
        %v3081 = vmul.f32 %v3080, 1.442695
        %v3082 = vpow.pop %v3081
        %v3083 = vadd.f32 %v3082, 1.0
        %v3084 = vrcp.pop %v3083
        %v3085 = vmul.f32 1.0, %v3084
        %v3086 = vmul.f32 %v3078, %v2915
        %v3087 = vmul.f32 %v3072, %v3079
        %v3088 = vadd.f32 %v3086, %v3087
        %v3089 = vtanh.pop %v3088
        %v3090 = vmul.f32 %v3085, %v3089
        %v3091 = vxor.u32 %v3090, 2147483648
        %v3092 = vmul.f32 %v3091, 1.442695
        %v3093 = vpow.pop %v3092
        %v3094 = vadd.f32 %v3093, 1.0
        %v3095 = vrcp.pop %v3094
        %v3096 = vmul.f32 1.0, %v3095
        %s3097 = scalar_lea.vmem %s501, 8 [#allocation8]
        %3098 = vst [vmem:[%s3097] sm:$0xff] %v3096
        %3099 = vmatprep.subr.mxu0 %v706
        %3100 = vmatpush1.msra.mxu0 %v705
        %3101 = vmatprep.subr.mxu0 %v702
        %3102 = vmatpush1.msra.mxu0 %v701
        %3103 = vmatprep.subr.mxu0 %v698
        %3104 = vmatpush1.msra.mxu0 %v697
        %3105 = vmatprep.subr.mxu0 %v694
        %3106 = vmatpush1.msra.mxu0 %v693
        %3107 = vmatprep.subr.mxu0 %v690
        %3108 = vmatpush1.msra.mxu0 %v689
        %3109 = vmatprep.subr.mxu0 %v686
        %3110 = vmatpush1.msra.mxu0 %v685
        %3111 = vmatprep.subr.mxu0 %v682
        %3112 = vmatpush1.msra.mxu0 %v681
        %3113 = vmatprep.subr.mxu0 %v678
        %3114 = vmatpush1.msra.mxu0 %v677
        %3115 = vmatprep.subr.mxu0 %v674
        %3116 = vmatpush1.msra.mxu0 %v673
        %3117 = vmatprep.subr.mxu0 %v670
        %3118 = vmatpush1.msra.mxu0 %v669
        %3119 = vmatprep.subr.mxu0 %v666
        %3120 = vmatpush1.msra.mxu0 %v665
        %3121 = vmatprep.subr.mxu0 %v662
        %3122 = vmatpush1.msra.mxu0 %v661
        %3123 = vmatprep.subr.mxu0 %v658
        %3124 = vmatpush1.msra.mxu0 %v657
        %3125 = vmatprep.subr.mxu0 %v654
        %3126 = vmatpush1.msra.mxu0 %v653
        %3127 = vmatprep.subr.mxu0 %v650
        %3128 = vmatpush1.msra.mxu0 %v649
        %3129 = vmatprep.subr.mxu0 %v646
        %3130 = vmatpush1.msra.mxu0 %v645
        %3131 = vmatprep.subr.mxu0 %v770
        %3132 = vmatpush2.msra.mxu0 %v769
        %3133 = vmatprep.subr.mxu0 %v766
        %3134 = vmatpush2.msra.mxu0 %v765
        %3135 = vmatprep.subr.mxu0 %v762
        %3136 = vmatpush2.msra.mxu0 %v761
        %3137 = vmatprep.subr.mxu0 %v758
        %3138 = vmatpush2.msra.mxu0 %v757
        %3139 = vmatprep.subr.mxu0 %v754
        %3140 = vmatpush2.msra.mxu0 %v753
        %3141 = vmatprep.subr.mxu0 %v750
        %3142 = vmatpush2.msra.mxu0 %v749
        %3143 = vmatprep.subr.mxu0 %v746
        %3144 = vmatpush2.msra.mxu0 %v745
        %3145 = vmatprep.subr.mxu0 %v742
        %3146 = vmatpush2.msra.mxu0 %v741
        %3147 = vmatprep.subr.mxu0 %v738
        %3148 = vmatpush2.msra.mxu0 %v737
        %3149 = vmatprep.subr.mxu0 %v734
        %3150 = vmatpush2.msra.mxu0 %v733
        %3151 = vmatprep.subr.mxu0 %v730
        %3152 = vmatpush2.msra.mxu0 %v729
        %3153 = vmatprep.subr.mxu0 %v726
        %3154 = vmatpush2.msra.mxu0 %v725
        %3155 = vmatprep.subr.mxu0 %v722
        %3156 = vmatpush2.msra.mxu0 %v721
        %3157 = vmatprep.subr.mxu0 %v718
        %3158 = vmatpush2.msra.mxu0 %v717
        %3159 = vmatprep.subr.mxu0 %v714
        %3160 = vmatpush2.msra.mxu0 %v713
        %3161 = vmatprep.subr.mxu0 %v710
        %3162 = vmatpush2.msra.mxu0 %v709
        %3163 = vmatprep.mubr.f32.mxu0 %v3090
        %3164 = vmatmul.mubr.f32.gmra.mxu0 %v2725
        %v3165 = vpop.f32.mrf.mxu0
        %v3166 = vadd.f32 %v2735, %v3165
        %v3167 = vpop.f32.mrf.mxu0
        %v3168 = vadd.f32 %v2739, %v3167
        %3169 = vdwg.mxu0
        %3170 = vmatprep.subr.mxu0 %v708
        %3171 = vmatpush1.msra.mxu0 %v707
        %3172 = vmatprep.subr.mxu0 %v704
        %3173 = vmatpush1.msra.mxu0 %v703
        %3174 = vmatprep.subr.mxu0 %v700
        %3175 = vmatpush1.msra.mxu0 %v699
        %3176 = vmatprep.subr.mxu0 %v696
        %3177 = vmatpush1.msra.mxu0 %v695
        %3178 = vmatprep.subr.mxu0 %v692
        %3179 = vmatpush1.msra.mxu0 %v691
        %3180 = vmatprep.subr.mxu0 %v688
        %3181 = vmatpush1.msra.mxu0 %v687
        %3182 = vmatprep.subr.mxu0 %v684
        %3183 = vmatpush1.msra.mxu0 %v683
        %3184 = vmatprep.subr.mxu0 %v680
        %3185 = vmatpush1.msra.mxu0 %v679
        %3186 = vmatprep.subr.mxu0 %v676
        %3187 = vmatpush1.msra.mxu0 %v675
        %3188 = vmatprep.subr.mxu0 %v672
        %3189 = vmatpush1.msra.mxu0 %v671
        %3190 = vmatprep.subr.mxu0 %v668
        %3191 = vmatpush1.msra.mxu0 %v667
        %3192 = vmatprep.subr.mxu0 %v664
        %3193 = vmatpush1.msra.mxu0 %v663
        %3194 = vmatprep.subr.mxu0 %v660
        %3195 = vmatpush1.msra.mxu0 %v659
        %3196 = vmatprep.subr.mxu0 %v656
        %3197 = vmatpush1.msra.mxu0 %v655
        %3198 = vmatprep.subr.mxu0 %v652
        %3199 = vmatpush1.msra.mxu0 %v651
        %3200 = vmatprep.subr.mxu0 %v648
        %3201 = vmatpush1.msra.mxu0 %v647
        %3202 = vmatprep.subr.mxu0 %v772
        %3203 = vmatpush2.msra.mxu0 %v771
        %3204 = vmatprep.subr.mxu0 %v768
        %3205 = vmatpush2.msra.mxu0 %v767
        %3206 = vmatprep.subr.mxu0 %v764
        %3207 = vmatpush2.msra.mxu0 %v763
        %3208 = vmatprep.subr.mxu0 %v760
        %3209 = vmatpush2.msra.mxu0 %v759
        %3210 = vmatprep.subr.mxu0 %v756
        %3211 = vmatpush2.msra.mxu0 %v755
        %3212 = vmatprep.subr.mxu0 %v752
        %3213 = vmatpush2.msra.mxu0 %v751
        %3214 = vmatprep.subr.mxu0 %v748
        %3215 = vmatpush2.msra.mxu0 %v747
        %3216 = vmatprep.subr.mxu0 %v744
        %3217 = vmatpush2.msra.mxu0 %v743
        %3218 = vmatprep.subr.mxu0 %v740
        %3219 = vmatpush2.msra.mxu0 %v739
        %3220 = vmatprep.subr.mxu0 %v736
        %3221 = vmatpush2.msra.mxu0 %v735
        %3222 = vmatprep.subr.mxu0 %v732
        %3223 = vmatpush2.msra.mxu0 %v731
        %3224 = vmatprep.subr.mxu0 %v728
        %3225 = vmatpush2.msra.mxu0 %v727
        %3226 = vmatprep.subr.mxu0 %v724
        %3227 = vmatpush2.msra.mxu0 %v723
        %3228 = vmatprep.subr.mxu0 %v720
        %3229 = vmatpush2.msra.mxu0 %v719
        %3230 = vmatprep.subr.mxu0 %v716
        %3231 = vmatpush2.msra.mxu0 %v715
        %3232 = vmatprep.subr.mxu0 %v712
        %3233 = vmatpush2.msra.mxu0 %v711
        %3234 = vmatprep.mubr.f32.mxu0 %v3090
        %3235 = vmatmul.mubr.f32.gmra.mxu0 %v2725
        %v3236 = vpop.f32.mrf.mxu0
        %v3237 = vadd.f32 %v2743, %v3236
        %v3238 = vpop.f32.mrf.mxu0
        %v3239 = vadd.f32 %v2747, %v3238
        %3240 = vdwg.mxu0
        %v3241 = vxor.u32 %v3166, 2147483648
        %v3242 = vmul.f32 %v3241, 1.442695
        %v3243 = vpow.pop %v3242
        %v3244 = vadd.f32 %v3243, 1.0
        %v3245 = vrcp.pop %v3244
        %v3246 = vmul.f32 1.0, %v3245
        %v3247 = vxor.u32 %v3168, 2147483648
        %v3248 = vmul.f32 %v3247, 1.442695
        %v3249 = vpow.pop %v3248
        %v3250 = vadd.f32 %v3249, 1.0
        %v3251 = vrcp.pop %v3250
        %v3252 = vmul.f32 1.0, %v3251
        %v3253 = vtanh.pop %v3237
        %v3254 = vxor.u32 %v3239, 2147483648
        %v3255 = vmul.f32 %v3254, 1.442695
        %v3256 = vpow.pop %v3255
        %v3257 = vadd.f32 %v3256, 1.0
        %v3258 = vrcp.pop %v3257
        %v3259 = vmul.f32 1.0, %v3258
        %v3260 = vmul.f32 %v3252, %v3088
        %v3261 = vmul.f32 %v3246, %v3253
        %v3262 = vadd.f32 %v3260, %v3261
        %v3263 = vtanh.pop %v3262
        %v3264 = vmul.f32 %v3259, %v3263
        %v3265 = vxor.u32 %v3264, 2147483648
        %v3266 = vmul.f32 %v3265, 1.442695
        %v3267 = vpow.pop %v3266
        %v3268 = vadd.f32 %v3267, 1.0
        %v3269 = vrcp.pop %v3268
        %v3270 = vmul.f32 1.0, %v3269
        %s3271 = scalar_lea.vmem %s501, 16 [#allocation8]
        %3272 = vst [vmem:[%s3271] sm:$0xff] %v3270
        %3273 = vmatprep.subr.mxu0 %v706
        %3274 = vmatpush1.msra.mxu0 %v705
        %3275 = vmatprep.subr.mxu0 %v702
        %3276 = vmatpush1.msra.mxu0 %v701
        %3277 = vmatprep.subr.mxu0 %v698
        %3278 = vmatpush1.msra.mxu0 %v697
        %3279 = vmatprep.subr.mxu0 %v694
        %3280 = vmatpush1.msra.mxu0 %v693
        %3281 = vmatprep.subr.mxu0 %v690
        %3282 = vmatpush1.msra.mxu0 %v689
        %3283 = vmatprep.subr.mxu0 %v686
        %3284 = vmatpush1.msra.mxu0 %v685
        %3285 = vmatprep.subr.mxu0 %v682
        %3286 = vmatpush1.msra.mxu0 %v681
        %3287 = vmatprep.subr.mxu0 %v678
        %3288 = vmatpush1.msra.mxu0 %v677
        %3289 = vmatprep.subr.mxu0 %v674
        %3290 = vmatpush1.msra.mxu0 %v673
        %3291 = vmatprep.subr.mxu0 %v670
        %3292 = vmatpush1.msra.mxu0 %v669
        %3293 = vmatprep.subr.mxu0 %v666
        %3294 = vmatpush1.msra.mxu0 %v665
        %3295 = vmatprep.subr.mxu0 %v662
        %3296 = vmatpush1.msra.mxu0 %v661
        %3297 = vmatprep.subr.mxu0 %v658
        %3298 = vmatpush1.msra.mxu0 %v657
        %3299 = vmatprep.subr.mxu0 %v654
        %3300 = vmatpush1.msra.mxu0 %v653
        %3301 = vmatprep.subr.mxu0 %v650
        %3302 = vmatpush1.msra.mxu0 %v649
        %3303 = vmatprep.subr.mxu0 %v646
        %3304 = vmatpush1.msra.mxu0 %v645
        %3305 = vmatprep.subr.mxu0 %v770
        %3306 = vmatpush2.msra.mxu0 %v769
        %3307 = vmatprep.subr.mxu0 %v766
        %3308 = vmatpush2.msra.mxu0 %v765
        %3309 = vmatprep.subr.mxu0 %v762
        %3310 = vmatpush2.msra.mxu0 %v761
        %3311 = vmatprep.subr.mxu0 %v758
        %3312 = vmatpush2.msra.mxu0 %v757
        %3313 = vmatprep.subr.mxu0 %v754
        %3314 = vmatpush2.msra.mxu0 %v753
        %3315 = vmatprep.subr.mxu0 %v750
        %3316 = vmatpush2.msra.mxu0 %v749
        %3317 = vmatprep.subr.mxu0 %v746
        %3318 = vmatpush2.msra.mxu0 %v745
        %3319 = vmatprep.subr.mxu0 %v742
        %3320 = vmatpush2.msra.mxu0 %v741
        %3321 = vmatprep.subr.mxu0 %v738
        %3322 = vmatpush2.msra.mxu0 %v737
        %3323 = vmatprep.subr.mxu0 %v734
        %3324 = vmatpush2.msra.mxu0 %v733
        %3325 = vmatprep.subr.mxu0 %v730
        %3326 = vmatpush2.msra.mxu0 %v729
        %3327 = vmatprep.subr.mxu0 %v726
        %3328 = vmatpush2.msra.mxu0 %v725
        %3329 = vmatprep.subr.mxu0 %v722
        %3330 = vmatpush2.msra.mxu0 %v721
        %3331 = vmatprep.subr.mxu0 %v718
        %3332 = vmatpush2.msra.mxu0 %v717
        %3333 = vmatprep.subr.mxu0 %v714
        %3334 = vmatpush2.msra.mxu0 %v713
        %3335 = vmatprep.subr.mxu0 %v710
        %3336 = vmatpush2.msra.mxu0 %v709
        %3337 = vmatprep.mubr.f32.mxu0 %v3264
        %3338 = vmatmul.mubr.f32.gmra.mxu0 %v2726
        %v3339 = vpop.f32.mrf.mxu0
        %v3340 = vadd.f32 %v2735, %v3339
        %v3341 = vpop.f32.mrf.mxu0
        %v3342 = vadd.f32 %v2739, %v3341
        %3343 = vdwg.mxu0
        %3344 = vmatprep.subr.mxu0 %v708
        %3345 = vmatpush1.msra.mxu0 %v707
        %3346 = vmatprep.subr.mxu0 %v704
        %3347 = vmatpush1.msra.mxu0 %v703
        %3348 = vmatprep.subr.mxu0 %v700
        %3349 = vmatpush1.msra.mxu0 %v699
        %3350 = vmatprep.subr.mxu0 %v696
        %3351 = vmatpush1.msra.mxu0 %v695
        %3352 = vmatprep.subr.mxu0 %v692
        %3353 = vmatpush1.msra.mxu0 %v691
        %3354 = vmatprep.subr.mxu0 %v688
        %3355 = vmatpush1.msra.mxu0 %v687
        %3356 = vmatprep.subr.mxu0 %v684
        %3357 = vmatpush1.msra.mxu0 %v683
        %3358 = vmatprep.subr.mxu0 %v680
        %3359 = vmatpush1.msra.mxu0 %v679
        %3360 = vmatprep.subr.mxu0 %v676
        %3361 = vmatpush1.msra.mxu0 %v675
        %3362 = vmatprep.subr.mxu0 %v672
        %3363 = vmatpush1.msra.mxu0 %v671
        %3364 = vmatprep.subr.mxu0 %v668
        %3365 = vmatpush1.msra.mxu0 %v667
        %3366 = vmatprep.subr.mxu0 %v664
        %3367 = vmatpush1.msra.mxu0 %v663
        %3368 = vmatprep.subr.mxu0 %v660
        %3369 = vmatpush1.msra.mxu0 %v659
        %3370 = vmatprep.subr.mxu0 %v656
        %3371 = vmatpush1.msra.mxu0 %v655
        %3372 = vmatprep.subr.mxu0 %v652
        %3373 = vmatpush1.msra.mxu0 %v651
        %3374 = vmatprep.subr.mxu0 %v648
        %3375 = vmatpush1.msra.mxu0 %v647
        %3376 = vmatprep.subr.mxu0 %v772
        %3377 = vmatpush2.msra.mxu0 %v771
        %3378 = vmatprep.subr.mxu0 %v768
        %3379 = vmatpush2.msra.mxu0 %v767
        %3380 = vmatprep.subr.mxu0 %v764
        %3381 = vmatpush2.msra.mxu0 %v763
        %3382 = vmatprep.subr.mxu0 %v760
        %3383 = vmatpush2.msra.mxu0 %v759
        %3384 = vmatprep.subr.mxu0 %v756
        %3385 = vmatpush2.msra.mxu0 %v755
        %3386 = vmatprep.subr.mxu0 %v752
        %3387 = vmatpush2.msra.mxu0 %v751
        %3388 = vmatprep.subr.mxu0 %v748
        %3389 = vmatpush2.msra.mxu0 %v747
        %3390 = vmatprep.subr.mxu0 %v744
        %3391 = vmatpush2.msra.mxu0 %v743
        %3392 = vmatprep.subr.mxu0 %v740
        %3393 = vmatpush2.msra.mxu0 %v739
        %3394 = vmatprep.subr.mxu0 %v736
        %3395 = vmatpush2.msra.mxu0 %v735
        %3396 = vmatprep.subr.mxu0 %v732
        %3397 = vmatpush2.msra.mxu0 %v731
        %3398 = vmatprep.subr.mxu0 %v728
        %3399 = vmatpush2.msra.mxu0 %v727
        %3400 = vmatprep.subr.mxu0 %v724
        %3401 = vmatpush2.msra.mxu0 %v723
        %3402 = vmatprep.subr.mxu0 %v720
        %3403 = vmatpush2.msra.mxu0 %v719
        %3404 = vmatprep.subr.mxu0 %v716
        %3405 = vmatpush2.msra.mxu0 %v715
        %3406 = vmatprep.subr.mxu0 %v712
        %3407 = vmatpush2.msra.mxu0 %v711
        %3408 = vmatprep.mubr.f32.mxu0 %v3264
        %3409 = vmatmul.mubr.f32.gmra.mxu0 %v2726
        %v3410 = vpop.f32.mrf.mxu0
        %v3411 = vadd.f32 %v2743, %v3410
        %v3412 = vpop.f32.mrf.mxu0
        %v3413 = vadd.f32 %v2747, %v3412
        %3414 = vdwg.mxu0
        %v3415 = vxor.u32 %v3340, 2147483648
        %v3416 = vmul.f32 %v3415, 1.442695
        %v3417 = vpow.pop %v3416
        %v3418 = vadd.f32 %v3417, 1.0
        %v3419 = vrcp.pop %v3418
        %v3420 = vmul.f32 1.0, %v3419
        %v3421 = vxor.u32 %v3342, 2147483648
        %v3422 = vmul.f32 %v3421, 1.442695
        %v3423 = vpow.pop %v3422
        %v3424 = vadd.f32 %v3423, 1.0
        %v3425 = vrcp.pop %v3424
        %v3426 = vmul.f32 1.0, %v3425
        %v3427 = vtanh.pop %v3411
        %v3428 = vxor.u32 %v3413, 2147483648
        %v3429 = vmul.f32 %v3428, 1.442695
        %v3430 = vpow.pop %v3429
        %v3431 = vadd.f32 %v3430, 1.0
        %v3432 = vrcp.pop %v3431
        %v3433 = vmul.f32 1.0, %v3432
        %v3434 = vmul.f32 %v3426, %v3262
        %v3435 = vmul.f32 %v3420, %v3427
        %v3436 = vadd.f32 %v3434, %v3435
        %v3437 = vtanh.pop %v3436
        %v3438 = vmul.f32 %v3433, %v3437
        %v3439 = vxor.u32 %v3438, 2147483648
        %v3440 = vmul.f32 %v3439, 1.442695
        %v3441 = vpow.pop %v3440
        %v3442 = vadd.f32 %v3441, 1.0
        %v3443 = vrcp.pop %v3442
        %v3444 = vmul.f32 1.0, %v3443
        %s3445 = scalar_lea.vmem %s501, 24 [#allocation8]
        %3446 = vst [vmem:[%s3445] sm:$0xff] %v3444
        %3447 = vmatprep.subr.mxu0 %v706
        %3448 = vmatpush1.msra.mxu0 %v705
        %3449 = vmatprep.subr.mxu0 %v702
        %3450 = vmatpush1.msra.mxu0 %v701
        %3451 = vmatprep.subr.mxu0 %v698
        %3452 = vmatpush1.msra.mxu0 %v697
        %3453 = vmatprep.subr.mxu0 %v694
        %3454 = vmatpush1.msra.mxu0 %v693
        %3455 = vmatprep.subr.mxu0 %v690
        %3456 = vmatpush1.msra.mxu0 %v689
        %3457 = vmatprep.subr.mxu0 %v686
        %3458 = vmatpush1.msra.mxu0 %v685
        %3459 = vmatprep.subr.mxu0 %v682
        %3460 = vmatpush1.msra.mxu0 %v681
        %3461 = vmatprep.subr.mxu0 %v678
        %3462 = vmatpush1.msra.mxu0 %v677
        %3463 = vmatprep.subr.mxu0 %v674
        %3464 = vmatpush1.msra.mxu0 %v673
        %3465 = vmatprep.subr.mxu0 %v670
        %3466 = vmatpush1.msra.mxu0 %v669
        %3467 = vmatprep.subr.mxu0 %v666
        %3468 = vmatpush1.msra.mxu0 %v665
        %3469 = vmatprep.subr.mxu0 %v662
        %3470 = vmatpush1.msra.mxu0 %v661
        %3471 = vmatprep.subr.mxu0 %v658
        %3472 = vmatpush1.msra.mxu0 %v657
        %3473 = vmatprep.subr.mxu0 %v654
        %3474 = vmatpush1.msra.mxu0 %v653
        %3475 = vmatprep.subr.mxu0 %v650
        %3476 = vmatpush1.msra.mxu0 %v649
        %3477 = vmatprep.subr.mxu0 %v646
        %3478 = vmatpush1.msra.mxu0 %v645
        %3479 = vmatprep.subr.mxu0 %v770
        %3480 = vmatpush2.msra.mxu0 %v769
        %3481 = vmatprep.subr.mxu0 %v766
        %3482 = vmatpush2.msra.mxu0 %v765
        %3483 = vmatprep.subr.mxu0 %v762
        %3484 = vmatpush2.msra.mxu0 %v761
        %3485 = vmatprep.subr.mxu0 %v758
        %3486 = vmatpush2.msra.mxu0 %v757
        %3487 = vmatprep.subr.mxu0 %v754
        %3488 = vmatpush2.msra.mxu0 %v753
        %3489 = vmatprep.subr.mxu0 %v750
        %3490 = vmatpush2.msra.mxu0 %v749
        %3491 = vmatprep.subr.mxu0 %v746
        %3492 = vmatpush2.msra.mxu0 %v745
        %3493 = vmatprep.subr.mxu0 %v742
        %3494 = vmatpush2.msra.mxu0 %v741
        %3495 = vmatprep.subr.mxu0 %v738
        %3496 = vmatpush2.msra.mxu0 %v737
        %3497 = vmatprep.subr.mxu0 %v734
        %3498 = vmatpush2.msra.mxu0 %v733
        %3499 = vmatprep.subr.mxu0 %v730
        %3500 = vmatpush2.msra.mxu0 %v729
        %3501 = vmatprep.subr.mxu0 %v726
        %3502 = vmatpush2.msra.mxu0 %v725
        %3503 = vmatprep.subr.mxu0 %v722
        %3504 = vmatpush2.msra.mxu0 %v721
        %3505 = vmatprep.subr.mxu0 %v718
        %3506 = vmatpush2.msra.mxu0 %v717
        %3507 = vmatprep.subr.mxu0 %v714
        %3508 = vmatpush2.msra.mxu0 %v713
        %3509 = vmatprep.subr.mxu0 %v710
        %3510 = vmatpush2.msra.mxu0 %v709
        %3511 = vmatprep.mubr.f32.mxu0 %v3438
        %3512 = vmatmul.mubr.f32.gmra.mxu0 %v2727
        %v3513 = vpop.f32.mrf.mxu0
        %v3514 = vadd.f32 %v2735, %v3513
        %v3515 = vpop.f32.mrf.mxu0
        %v3516 = vadd.f32 %v2739, %v3515
        %3517 = vdwg.mxu0
        %3518 = vmatprep.subr.mxu0 %v708
        %3519 = vmatpush1.msra.mxu0 %v707
        %3520 = vmatprep.subr.mxu0 %v704
        %3521 = vmatpush1.msra.mxu0 %v703
        %3522 = vmatprep.subr.mxu0 %v700
        %3523 = vmatpush1.msra.mxu0 %v699
        %3524 = vmatprep.subr.mxu0 %v696
        %3525 = vmatpush1.msra.mxu0 %v695
        %3526 = vmatprep.subr.mxu0 %v692
        %3527 = vmatpush1.msra.mxu0 %v691
        %3528 = vmatprep.subr.mxu0 %v688
        %3529 = vmatpush1.msra.mxu0 %v687
        %3530 = vmatprep.subr.mxu0 %v684
        %3531 = vmatpush1.msra.mxu0 %v683
        %3532 = vmatprep.subr.mxu0 %v680
        %3533 = vmatpush1.msra.mxu0 %v679
        %3534 = vmatprep.subr.mxu0 %v676
        %3535 = vmatpush1.msra.mxu0 %v675
        %3536 = vmatprep.subr.mxu0 %v672
        %3537 = vmatpush1.msra.mxu0 %v671
        %3538 = vmatprep.subr.mxu0 %v668
        %3539 = vmatpush1.msra.mxu0 %v667
        %3540 = vmatprep.subr.mxu0 %v664
        %3541 = vmatpush1.msra.mxu0 %v663
        %3542 = vmatprep.subr.mxu0 %v660
        %3543 = vmatpush1.msra.mxu0 %v659
        %3544 = vmatprep.subr.mxu0 %v656
        %3545 = vmatpush1.msra.mxu0 %v655
        %3546 = vmatprep.subr.mxu0 %v652
        %3547 = vmatpush1.msra.mxu0 %v651
        %3548 = vmatprep.subr.mxu0 %v648
        %3549 = vmatpush1.msra.mxu0 %v647
        %3550 = vmatprep.subr.mxu0 %v772
        %3551 = vmatpush2.msra.mxu0 %v771
        %3552 = vmatprep.subr.mxu0 %v768
        %3553 = vmatpush2.msra.mxu0 %v767
        %3554 = vmatprep.subr.mxu0 %v764
        %3555 = vmatpush2.msra.mxu0 %v763
        %3556 = vmatprep.subr.mxu0 %v760
        %3557 = vmatpush2.msra.mxu0 %v759
        %3558 = vmatprep.subr.mxu0 %v756
        %3559 = vmatpush2.msra.mxu0 %v755
        %3560 = vmatprep.subr.mxu0 %v752
        %3561 = vmatpush2.msra.mxu0 %v751
        %3562 = vmatprep.subr.mxu0 %v748
        %3563 = vmatpush2.msra.mxu0 %v747
        %3564 = vmatprep.subr.mxu0 %v744
        %3565 = vmatpush2.msra.mxu0 %v743
        %3566 = vmatprep.subr.mxu0 %v740
        %3567 = vmatpush2.msra.mxu0 %v739
        %3568 = vmatprep.subr.mxu0 %v736
        %3569 = vmatpush2.msra.mxu0 %v735
        %3570 = vmatprep.subr.mxu0 %v732
        %3571 = vmatpush2.msra.mxu0 %v731
        %3572 = vmatprep.subr.mxu0 %v728
        %3573 = vmatpush2.msra.mxu0 %v727
        %3574 = vmatprep.subr.mxu0 %v724
        %3575 = vmatpush2.msra.mxu0 %v723
        %3576 = vmatprep.subr.mxu0 %v720
        %3577 = vmatpush2.msra.mxu0 %v719
        %3578 = vmatprep.subr.mxu0 %v716
        %3579 = vmatpush2.msra.mxu0 %v715
        %3580 = vmatprep.subr.mxu0 %v712
        %3581 = vmatpush2.msra.mxu0 %v711
        %3582 = vmatprep.mubr.f32.mxu0 %v3438
        %3583 = vmatmul.mubr.f32.gmra.mxu0 %v2727
        %v3584 = vpop.f32.mrf.mxu0
        %v3585 = vadd.f32 %v2743, %v3584
        %v3586 = vpop.f32.mrf.mxu0
        %v3587 = vadd.f32 %v2747, %v3586
        %3588 = vdwg.mxu0
        %v3589 = vxor.u32 %v3514, 2147483648
        %v3590 = vmul.f32 %v3589, 1.442695
        %v3591 = vpow.pop %v3590
        %v3592 = vadd.f32 %v3591, 1.0
        %v3593 = vrcp.pop %v3592
        %v3594 = vmul.f32 1.0, %v3593
        %v3595 = vxor.u32 %v3516, 2147483648
        %v3596 = vmul.f32 %v3595, 1.442695
        %v3597 = vpow.pop %v3596
        %v3598 = vadd.f32 %v3597, 1.0
        %v3599 = vrcp.pop %v3598
        %v3600 = vmul.f32 1.0, %v3599
        %v3601 = vtanh.pop %v3585
        %v3602 = vxor.u32 %v3587, 2147483648
        %v3603 = vmul.f32 %v3602, 1.442695
        %v3604 = vpow.pop %v3603
        %v3605 = vadd.f32 %v3604, 1.0
        %v3606 = vrcp.pop %v3605
        %v3607 = vmul.f32 1.0, %v3606
        %v3608 = vmul.f32 %v3600, %v3436
        %v3609 = vmul.f32 %v3594, %v3601
        %v3610 = vadd.f32 %v3608, %v3609
        %v3611 = vtanh.pop %v3610
        %v3612 = vmul.f32 %v3607, %v3611
        %v3613 = vxor.u32 %v3612, 2147483648
        %v3614 = vmul.f32 %v3613, 1.442695
        %v3615 = vpow.pop %v3614
        %v3616 = vadd.f32 %v3615, 1.0
        %v3617 = vrcp.pop %v3616
        %v3618 = vmul.f32 1.0, %v3617
        %s3619 = scalar_lea.vmem %s501, 32 [#allocation8]
        %3620 = vst [vmem:[%s3619] sm:$0xff] %v3618
        %3621 = vmatprep.subr.mxu0 %v706
        %3622 = vmatpush1.msra.mxu0 %v705
        %3623 = vmatprep.subr.mxu0 %v702
        %3624 = vmatpush1.msra.mxu0 %v701
        %3625 = vmatprep.subr.mxu0 %v698
        %3626 = vmatpush1.msra.mxu0 %v697
        %3627 = vmatprep.subr.mxu0 %v694
        %3628 = vmatpush1.msra.mxu0 %v693
        %3629 = vmatprep.subr.mxu0 %v690
        %3630 = vmatpush1.msra.mxu0 %v689
        %3631 = vmatprep.subr.mxu0 %v686
        %3632 = vmatpush1.msra.mxu0 %v685
        %3633 = vmatprep.subr.mxu0 %v682
        %3634 = vmatpush1.msra.mxu0 %v681
        %3635 = vmatprep.subr.mxu0 %v678
        %3636 = vmatpush1.msra.mxu0 %v677
        %3637 = vmatprep.subr.mxu0 %v674
        %3638 = vmatpush1.msra.mxu0 %v673
        %3639 = vmatprep.subr.mxu0 %v670
        %3640 = vmatpush1.msra.mxu0 %v669
        %3641 = vmatprep.subr.mxu0 %v666
        %3642 = vmatpush1.msra.mxu0 %v665
        %3643 = vmatprep.subr.mxu0 %v662
        %3644 = vmatpush1.msra.mxu0 %v661
        %3645 = vmatprep.subr.mxu0 %v658
        %3646 = vmatpush1.msra.mxu0 %v657
        %3647 = vmatprep.subr.mxu0 %v654
        %3648 = vmatpush1.msra.mxu0 %v653
        %3649 = vmatprep.subr.mxu0 %v650
        %3650 = vmatpush1.msra.mxu0 %v649
        %3651 = vmatprep.subr.mxu0 %v646
        %3652 = vmatpush1.msra.mxu0 %v645
        %3653 = vmatprep.subr.mxu0 %v770
        %3654 = vmatpush2.msra.mxu0 %v769
        %3655 = vmatprep.subr.mxu0 %v766
        %3656 = vmatpush2.msra.mxu0 %v765
        %3657 = vmatprep.subr.mxu0 %v762
        %3658 = vmatpush2.msra.mxu0 %v761
        %3659 = vmatprep.subr.mxu0 %v758
        %3660 = vmatpush2.msra.mxu0 %v757
        %3661 = vmatprep.subr.mxu0 %v754
        %3662 = vmatpush2.msra.mxu0 %v753
        %3663 = vmatprep.subr.mxu0 %v750
        %3664 = vmatpush2.msra.mxu0 %v749
        %3665 = vmatprep.subr.mxu0 %v746
        %3666 = vmatpush2.msra.mxu0 %v745
        %3667 = vmatprep.subr.mxu0 %v742
        %3668 = vmatpush2.msra.mxu0 %v741
        %3669 = vmatprep.subr.mxu0 %v738
        %3670 = vmatpush2.msra.mxu0 %v737
        %3671 = vmatprep.subr.mxu0 %v734
        %3672 = vmatpush2.msra.mxu0 %v733
        %3673 = vmatprep.subr.mxu0 %v730
        %3674 = vmatpush2.msra.mxu0 %v729
        %3675 = vmatprep.subr.mxu0 %v726
        %3676 = vmatpush2.msra.mxu0 %v725
        %3677 = vmatprep.subr.mxu0 %v722
        %3678 = vmatpush2.msra.mxu0 %v721
        %3679 = vmatprep.subr.mxu0 %v718
        %3680 = vmatpush2.msra.mxu0 %v717
        %3681 = vmatprep.subr.mxu0 %v714
        %3682 = vmatpush2.msra.mxu0 %v713
        %3683 = vmatprep.subr.mxu0 %v710
        %3684 = vmatpush2.msra.mxu0 %v709
        %3685 = vmatprep.mubr.f32.mxu0 %v3612
        %3686 = vmatmul.mubr.f32.gmra.mxu0 %v2728
        %v3687 = vpop.f32.mrf.mxu0
        %v3688 = vadd.f32 %v2735, %v3687
        %v3689 = vpop.f32.mrf.mxu0
        %v3690 = vadd.f32 %v2739, %v3689
        %3691 = vdwg.mxu0
        %3692 = vmatprep.subr.mxu0 %v708
        %3693 = vmatpush1.msra.mxu0 %v707
        %3694 = vmatprep.subr.mxu0 %v704
        %3695 = vmatpush1.msra.mxu0 %v703
        %3696 = vmatprep.subr.mxu0 %v700
        %3697 = vmatpush1.msra.mxu0 %v699
        %3698 = vmatprep.subr.mxu0 %v696
        %3699 = vmatpush1.msra.mxu0 %v695
        %3700 = vmatprep.subr.mxu0 %v692
        %3701 = vmatpush1.msra.mxu0 %v691
        %3702 = vmatprep.subr.mxu0 %v688
        %3703 = vmatpush1.msra.mxu0 %v687
        %3704 = vmatprep.subr.mxu0 %v684
        %3705 = vmatpush1.msra.mxu0 %v683
        %3706 = vmatprep.subr.mxu0 %v680
        %3707 = vmatpush1.msra.mxu0 %v679
        %3708 = vmatprep.subr.mxu0 %v676
        %3709 = vmatpush1.msra.mxu0 %v675
        %3710 = vmatprep.subr.mxu0 %v672
        %3711 = vmatpush1.msra.mxu0 %v671
        %3712 = vmatprep.subr.mxu0 %v668
        %3713 = vmatpush1.msra.mxu0 %v667
        %3714 = vmatprep.subr.mxu0 %v664
        %3715 = vmatpush1.msra.mxu0 %v663
        %3716 = vmatprep.subr.mxu0 %v660
        %3717 = vmatpush1.msra.mxu0 %v659
        %3718 = vmatprep.subr.mxu0 %v656
        %3719 = vmatpush1.msra.mxu0 %v655
        %3720 = vmatprep.subr.mxu0 %v652
        %3721 = vmatpush1.msra.mxu0 %v651
        %3722 = vmatprep.subr.mxu0 %v648
        %3723 = vmatpush1.msra.mxu0 %v647
        %3724 = vmatprep.subr.mxu0 %v772
        %3725 = vmatpush2.msra.mxu0 %v771
        %3726 = vmatprep.subr.mxu0 %v768
        %3727 = vmatpush2.msra.mxu0 %v767
        %3728 = vmatprep.subr.mxu0 %v764
        %3729 = vmatpush2.msra.mxu0 %v763
        %3730 = vmatprep.subr.mxu0 %v760
        %3731 = vmatpush2.msra.mxu0 %v759
        %3732 = vmatprep.subr.mxu0 %v756
        %3733 = vmatpush2.msra.mxu0 %v755
        %3734 = vmatprep.subr.mxu0 %v752
        %3735 = vmatpush2.msra.mxu0 %v751
        %3736 = vmatprep.subr.mxu0 %v748
        %3737 = vmatpush2.msra.mxu0 %v747
        %3738 = vmatprep.subr.mxu0 %v744
        %3739 = vmatpush2.msra.mxu0 %v743
        %3740 = vmatprep.subr.mxu0 %v740
        %3741 = vmatpush2.msra.mxu0 %v739
        %3742 = vmatprep.subr.mxu0 %v736
        %3743 = vmatpush2.msra.mxu0 %v735
        %3744 = vmatprep.subr.mxu0 %v732
        %3745 = vmatpush2.msra.mxu0 %v731
        %3746 = vmatprep.subr.mxu0 %v728
        %3747 = vmatpush2.msra.mxu0 %v727
        %3748 = vmatprep.subr.mxu0 %v724
        %3749 = vmatpush2.msra.mxu0 %v723
        %3750 = vmatprep.subr.mxu0 %v720
        %3751 = vmatpush2.msra.mxu0 %v719
        %3752 = vmatprep.subr.mxu0 %v716
        %3753 = vmatpush2.msra.mxu0 %v715
        %3754 = vmatprep.subr.mxu0 %v712
        %3755 = vmatpush2.msra.mxu0 %v711
        %3756 = vmatprep.mubr.f32.mxu0 %v3612
        %3757 = vmatmul.mubr.f32.gmra.mxu0 %v2728
        %v3758 = vpop.f32.mrf.mxu0
        %v3759 = vadd.f32 %v2743, %v3758
        %v3760 = vpop.f32.mrf.mxu0
        %v3761 = vadd.f32 %v2747, %v3760
        %3762 = vdwg.mxu0
        %v3763 = vxor.u32 %v3688, 2147483648
        %v3764 = vmul.f32 %v3763, 1.442695
        %v3765 = vpow.pop %v3764
        %v3766 = vadd.f32 %v3765, 1.0
        %v3767 = vrcp.pop %v3766
        %v3768 = vmul.f32 1.0, %v3767
        %v3769 = vxor.u32 %v3690, 2147483648
        %v3770 = vmul.f32 %v3769, 1.442695
        %v3771 = vpow.pop %v3770
        %v3772 = vadd.f32 %v3771, 1.0
        %v3773 = vrcp.pop %v3772
        %v3774 = vmul.f32 1.0, %v3773
        %v3775 = vtanh.pop %v3759
        %v3776 = vxor.u32 %v3761, 2147483648
        %v3777 = vmul.f32 %v3776, 1.442695
        %v3778 = vpow.pop %v3777
        %v3779 = vadd.f32 %v3778, 1.0
        %v3780 = vrcp.pop %v3779
        %v3781 = vmul.f32 1.0, %v3780
        %v3782 = vmul.f32 %v3774, %v3610
        %v3783 = vmul.f32 %v3768, %v3775
        %v3784 = vadd.f32 %v3782, %v3783
        %v3785 = vtanh.pop %v3784
        %v3786 = vmul.f32 %v3781, %v3785
        %v3787 = vxor.u32 %v3786, 2147483648
        %v3788 = vmul.f32 %v3787, 1.442695
        %v3789 = vpow.pop %v3788
        %v3790 = vadd.f32 %v3789, 1.0
        %v3791 = vrcp.pop %v3790
        %v3792 = vmul.f32 1.0, %v3791
        %s3793 = scalar_lea.vmem %s501, 40 [#allocation8]
        %3794 = vst [vmem:[%s3793] sm:$0xff] %v3792
        %3795 = vmatprep.subr.mxu0 %v706
        %3796 = vmatpush1.msra.mxu0 %v705
        %3797 = vmatprep.subr.mxu0 %v702
        %3798 = vmatpush1.msra.mxu0 %v701
        %3799 = vmatprep.subr.mxu0 %v698
        %3800 = vmatpush1.msra.mxu0 %v697
        %3801 = vmatprep.subr.mxu0 %v694
        %3802 = vmatpush1.msra.mxu0 %v693
        %3803 = vmatprep.subr.mxu0 %v690
        %3804 = vmatpush1.msra.mxu0 %v689
        %3805 = vmatprep.subr.mxu0 %v686
        %3806 = vmatpush1.msra.mxu0 %v685
        %3807 = vmatprep.subr.mxu0 %v682
        %3808 = vmatpush1.msra.mxu0 %v681
        %3809 = vmatprep.subr.mxu0 %v678
        %3810 = vmatpush1.msra.mxu0 %v677
        %3811 = vmatprep.subr.mxu0 %v674
        %3812 = vmatpush1.msra.mxu0 %v673
        %3813 = vmatprep.subr.mxu0 %v670
        %3814 = vmatpush1.msra.mxu0 %v669
        %3815 = vmatprep.subr.mxu0 %v666
        %3816 = vmatpush1.msra.mxu0 %v665
        %3817 = vmatprep.subr.mxu0 %v662
        %3818 = vmatpush1.msra.mxu0 %v661
        %3819 = vmatprep.subr.mxu0 %v658
        %3820 = vmatpush1.msra.mxu0 %v657
        %3821 = vmatprep.subr.mxu0 %v654
        %3822 = vmatpush1.msra.mxu0 %v653
        %3823 = vmatprep.subr.mxu0 %v650
        %3824 = vmatpush1.msra.mxu0 %v649
        %3825 = vmatprep.subr.mxu0 %v646
        %3826 = vmatpush1.msra.mxu0 %v645
        %3827 = vmatprep.subr.mxu0 %v770
        %3828 = vmatpush2.msra.mxu0 %v769
        %3829 = vmatprep.subr.mxu0 %v766
        %3830 = vmatpush2.msra.mxu0 %v765
        %3831 = vmatprep.subr.mxu0 %v762
        %3832 = vmatpush2.msra.mxu0 %v761
        %3833 = vmatprep.subr.mxu0 %v758
        %3834 = vmatpush2.msra.mxu0 %v757
        %3835 = vmatprep.subr.mxu0 %v754
        %3836 = vmatpush2.msra.mxu0 %v753
        %3837 = vmatprep.subr.mxu0 %v750
        %3838 = vmatpush2.msra.mxu0 %v749
        %3839 = vmatprep.subr.mxu0 %v746
        %3840 = vmatpush2.msra.mxu0 %v745
        %3841 = vmatprep.subr.mxu0 %v742
        %3842 = vmatpush2.msra.mxu0 %v741
        %3843 = vmatprep.subr.mxu0 %v738
        %3844 = vmatpush2.msra.mxu0 %v737
        %3845 = vmatprep.subr.mxu0 %v734
        %3846 = vmatpush2.msra.mxu0 %v733
        %3847 = vmatprep.subr.mxu0 %v730
        %3848 = vmatpush2.msra.mxu0 %v729
        %3849 = vmatprep.subr.mxu0 %v726
        %3850 = vmatpush2.msra.mxu0 %v725
        %3851 = vmatprep.subr.mxu0 %v722
        %3852 = vmatpush2.msra.mxu0 %v721
        %3853 = vmatprep.subr.mxu0 %v718
        %3854 = vmatpush2.msra.mxu0 %v717
        %3855 = vmatprep.subr.mxu0 %v714
        %3856 = vmatpush2.msra.mxu0 %v713
        %3857 = vmatprep.subr.mxu0 %v710
        %3858 = vmatpush2.msra.mxu0 %v709
        %3859 = vmatprep.mubr.f32.mxu0 %v3786
        %3860 = vmatmul.mubr.f32.gmra.mxu0 %v2729
        %v3861 = vpop.f32.mrf.mxu0
        %v3862 = vadd.f32 %v2735, %v3861
        %v3863 = vpop.f32.mrf.mxu0
        %v3864 = vadd.f32 %v2739, %v3863
        %3865 = vdwg.mxu0
        %3866 = vmatprep.subr.mxu0 %v708
        %3867 = vmatpush1.msra.mxu0 %v707
        %3868 = vmatprep.subr.mxu0 %v704
        %3869 = vmatpush1.msra.mxu0 %v703
        %3870 = vmatprep.subr.mxu0 %v700
        %3871 = vmatpush1.msra.mxu0 %v699
        %3872 = vmatprep.subr.mxu0 %v696
        %3873 = vmatpush1.msra.mxu0 %v695
        %3874 = vmatprep.subr.mxu0 %v692
        %3875 = vmatpush1.msra.mxu0 %v691
        %3876 = vmatprep.subr.mxu0 %v688
        %3877 = vmatpush1.msra.mxu0 %v687
        %3878 = vmatprep.subr.mxu0 %v684
        %3879 = vmatpush1.msra.mxu0 %v683
        %3880 = vmatprep.subr.mxu0 %v680
        %3881 = vmatpush1.msra.mxu0 %v679
        %3882 = vmatprep.subr.mxu0 %v676
        %3883 = vmatpush1.msra.mxu0 %v675
        %3884 = vmatprep.subr.mxu0 %v672
        %3885 = vmatpush1.msra.mxu0 %v671
        %3886 = vmatprep.subr.mxu0 %v668
        %3887 = vmatpush1.msra.mxu0 %v667
        %3888 = vmatprep.subr.mxu0 %v664
        %3889 = vmatpush1.msra.mxu0 %v663
        %3890 = vmatprep.subr.mxu0 %v660
        %3891 = vmatpush1.msra.mxu0 %v659
        %3892 = vmatprep.subr.mxu0 %v656
        %3893 = vmatpush1.msra.mxu0 %v655
        %3894 = vmatprep.subr.mxu0 %v652
        %3895 = vmatpush1.msra.mxu0 %v651
        %3896 = vmatprep.subr.mxu0 %v648
        %3897 = vmatpush1.msra.mxu0 %v647
        %3898 = vmatprep.subr.mxu0 %v772
        %3899 = vmatpush2.msra.mxu0 %v771
        %3900 = vmatprep.subr.mxu0 %v768
        %3901 = vmatpush2.msra.mxu0 %v767
        %3902 = vmatprep.subr.mxu0 %v764
        %3903 = vmatpush2.msra.mxu0 %v763
        %3904 = vmatprep.subr.mxu0 %v760
        %3905 = vmatpush2.msra.mxu0 %v759
        %3906 = vmatprep.subr.mxu0 %v756
        %3907 = vmatpush2.msra.mxu0 %v755
        %3908 = vmatprep.subr.mxu0 %v752
        %3909 = vmatpush2.msra.mxu0 %v751
        %3910 = vmatprep.subr.mxu0 %v748
        %3911 = vmatpush2.msra.mxu0 %v747
        %3912 = vmatprep.subr.mxu0 %v744
        %3913 = vmatpush2.msra.mxu0 %v743
        %3914 = vmatprep.subr.mxu0 %v740
        %3915 = vmatpush2.msra.mxu0 %v739
        %3916 = vmatprep.subr.mxu0 %v736
        %3917 = vmatpush2.msra.mxu0 %v735
        %3918 = vmatprep.subr.mxu0 %v732
        %3919 = vmatpush2.msra.mxu0 %v731
        %3920 = vmatprep.subr.mxu0 %v728
        %3921 = vmatpush2.msra.mxu0 %v727
        %3922 = vmatprep.subr.mxu0 %v724
        %3923 = vmatpush2.msra.mxu0 %v723
        %3924 = vmatprep.subr.mxu0 %v720
        %3925 = vmatpush2.msra.mxu0 %v719
        %3926 = vmatprep.subr.mxu0 %v716
        %3927 = vmatpush2.msra.mxu0 %v715
        %3928 = vmatprep.subr.mxu0 %v712
        %3929 = vmatpush2.msra.mxu0 %v711
        %3930 = vmatprep.mubr.f32.mxu0 %v3786
        %3931 = vmatmul.mubr.f32.gmra.mxu0 %v2729
        %v3932 = vpop.f32.mrf.mxu0
        %v3933 = vadd.f32 %v2743, %v3932
        %v3934 = vpop.f32.mrf.mxu0
        %v3935 = vadd.f32 %v2747, %v3934
        %3936 = vdwg.mxu0
        %v3937 = vxor.u32 %v3862, 2147483648
        %v3938 = vmul.f32 %v3937, 1.442695
        %v3939 = vpow.pop %v3938
        %v3940 = vadd.f32 %v3939, 1.0
        %v3941 = vrcp.pop %v3940
        %v3942 = vmul.f32 1.0, %v3941
        %v3943 = vxor.u32 %v3864, 2147483648
        %v3944 = vmul.f32 %v3943, 1.442695
        %v3945 = vpow.pop %v3944
        %v3946 = vadd.f32 %v3945, 1.0
        %v3947 = vrcp.pop %v3946
        %v3948 = vmul.f32 1.0, %v3947
        %v3949 = vtanh.pop %v3933
        %v3950 = vxor.u32 %v3935, 2147483648
        %v3951 = vmul.f32 %v3950, 1.442695
        %v3952 = vpow.pop %v3951
        %v3953 = vadd.f32 %v3952, 1.0
        %v3954 = vrcp.pop %v3953
        %v3955 = vmul.f32 1.0, %v3954
        %v3956 = vmul.f32 %v3948, %v3784
        %v3957 = vmul.f32 %v3942, %v3949
        %v3958 = vadd.f32 %v3956, %v3957
        %v3959 = vtanh.pop %v3958
        %v3960 = vmul.f32 %v3955, %v3959
        %v3961 = vxor.u32 %v3960, 2147483648
        %v3962 = vmul.f32 %v3961, 1.442695
        %v3963 = vpow.pop %v3962
        %v3964 = vadd.f32 %v3963, 1.0
        %v3965 = vrcp.pop %v3964
        %v3966 = vmul.f32 1.0, %v3965
        %s3967 = scalar_lea.vmem %s501, 48 [#allocation8]
        %3968 = vst [vmem:[%s3967] sm:$0xff] %v3966
        %3969 = vmatprep.subr.mxu0 %v706
        %3970 = vmatpush1.msra.mxu0 %v705
        %3971 = vmatprep.subr.mxu0 %v702
        %3972 = vmatpush1.msra.mxu0 %v701
        %3973 = vmatprep.subr.mxu0 %v698
        %3974 = vmatpush1.msra.mxu0 %v697
        %3975 = vmatprep.subr.mxu0 %v694
        %3976 = vmatpush1.msra.mxu0 %v693
        %3977 = vmatprep.subr.mxu0 %v690
        %3978 = vmatpush1.msra.mxu0 %v689
        %3979 = vmatprep.subr.mxu0 %v686
        %3980 = vmatpush1.msra.mxu0 %v685
        %3981 = vmatprep.subr.mxu0 %v682
        %3982 = vmatpush1.msra.mxu0 %v681
        %3983 = vmatprep.subr.mxu0 %v678
        %3984 = vmatpush1.msra.mxu0 %v677
        %3985 = vmatprep.subr.mxu0 %v674
        %3986 = vmatpush1.msra.mxu0 %v673
        %3987 = vmatprep.subr.mxu0 %v670
        %3988 = vmatpush1.msra.mxu0 %v669
        %3989 = vmatprep.subr.mxu0 %v666
        %3990 = vmatpush1.msra.mxu0 %v665
        %3991 = vmatprep.subr.mxu0 %v662
        %3992 = vmatpush1.msra.mxu0 %v661
        %3993 = vmatprep.subr.mxu0 %v658
        %3994 = vmatpush1.msra.mxu0 %v657
        %3995 = vmatprep.subr.mxu0 %v654
        %3996 = vmatpush1.msra.mxu0 %v653
        %3997 = vmatprep.subr.mxu0 %v650
        %3998 = vmatpush1.msra.mxu0 %v649
        %3999 = vmatprep.subr.mxu0 %v646
        %4000 = vmatpush1.msra.mxu0 %v645
        %4001 = vmatprep.subr.mxu0 %v770
        %4002 = vmatpush2.msra.mxu0 %v769
        %4003 = vmatprep.subr.mxu0 %v766
        %4004 = vmatpush2.msra.mxu0 %v765
        %4005 = vmatprep.subr.mxu0 %v762
        %4006 = vmatpush2.msra.mxu0 %v761
        %4007 = vmatprep.subr.mxu0 %v758
        %4008 = vmatpush2.msra.mxu0 %v757
        %4009 = vmatprep.subr.mxu0 %v754
        %4010 = vmatpush2.msra.mxu0 %v753
        %4011 = vmatprep.subr.mxu0 %v750
        %4012 = vmatpush2.msra.mxu0 %v749
        %4013 = vmatprep.subr.mxu0 %v746
        %4014 = vmatpush2.msra.mxu0 %v745
        %4015 = vmatprep.subr.mxu0 %v742
        %4016 = vmatpush2.msra.mxu0 %v741
        %4017 = vmatprep.subr.mxu0 %v738
        %4018 = vmatpush2.msra.mxu0 %v737
        %4019 = vmatprep.subr.mxu0 %v734
        %4020 = vmatpush2.msra.mxu0 %v733
        %4021 = vmatprep.subr.mxu0 %v730
        %4022 = vmatpush2.msra.mxu0 %v729
        %4023 = vmatprep.subr.mxu0 %v726
        %4024 = vmatpush2.msra.mxu0 %v725
        %4025 = vmatprep.subr.mxu0 %v722
        %4026 = vmatpush2.msra.mxu0 %v721
        %4027 = vmatprep.subr.mxu0 %v718
        %4028 = vmatpush2.msra.mxu0 %v717
        %4029 = vmatprep.subr.mxu0 %v714
        %4030 = vmatpush2.msra.mxu0 %v713
        %4031 = vmatprep.subr.mxu0 %v710
        %4032 = vmatpush2.msra.mxu0 %v709
        %4033 = vmatprep.mubr.f32.mxu0 %v3960
        %4034 = vmatmul.mubr.f32.gmra.mxu0 %v2730
        %v4035 = vpop.f32.mrf.mxu0
        %v4036 = vadd.f32 %v2735, %v4035
        %v4037 = vpop.f32.mrf.mxu0
        %v4038 = vadd.f32 %v2739, %v4037
        %4039 = vdwg.mxu0
        %4040 = vmatprep.subr.mxu0 %v708
        %4041 = vmatpush1.msra.mxu0 %v707
        %4042 = vmatprep.subr.mxu0 %v704
        %4043 = vmatpush1.msra.mxu0 %v703
        %4044 = vmatprep.subr.mxu0 %v700
        %4045 = vmatpush1.msra.mxu0 %v699
        %4046 = vmatprep.subr.mxu0 %v696
        %4047 = vmatpush1.msra.mxu0 %v695
        %4048 = vmatprep.subr.mxu0 %v692
        %4049 = vmatpush1.msra.mxu0 %v691
        %4050 = vmatprep.subr.mxu0 %v688
        %4051 = vmatpush1.msra.mxu0 %v687
        %4052 = vmatprep.subr.mxu0 %v684
        %4053 = vmatpush1.msra.mxu0 %v683
        %4054 = vmatprep.subr.mxu0 %v680
        %4055 = vmatpush1.msra.mxu0 %v679
        %4056 = vmatprep.subr.mxu0 %v676
        %4057 = vmatpush1.msra.mxu0 %v675
        %4058 = vmatprep.subr.mxu0 %v672
        %4059 = vmatpush1.msra.mxu0 %v671
        %4060 = vmatprep.subr.mxu0 %v668
        %4061 = vmatpush1.msra.mxu0 %v667
        %4062 = vmatprep.subr.mxu0 %v664
        %4063 = vmatpush1.msra.mxu0 %v663
        %4064 = vmatprep.subr.mxu0 %v660
        %4065 = vmatpush1.msra.mxu0 %v659
        %4066 = vmatprep.subr.mxu0 %v656
        %4067 = vmatpush1.msra.mxu0 %v655
        %4068 = vmatprep.subr.mxu0 %v652
        %4069 = vmatpush1.msra.mxu0 %v651
        %4070 = vmatprep.subr.mxu0 %v648
        %4071 = vmatpush1.msra.mxu0 %v647
        %4072 = vmatprep.subr.mxu0 %v772
        %4073 = vmatpush2.msra.mxu0 %v771
        %4074 = vmatprep.subr.mxu0 %v768
        %4075 = vmatpush2.msra.mxu0 %v767
        %4076 = vmatprep.subr.mxu0 %v764
        %4077 = vmatpush2.msra.mxu0 %v763
        %4078 = vmatprep.subr.mxu0 %v760
        %4079 = vmatpush2.msra.mxu0 %v759
        %4080 = vmatprep.subr.mxu0 %v756
        %4081 = vmatpush2.msra.mxu0 %v755
        %4082 = vmatprep.subr.mxu0 %v752
        %4083 = vmatpush2.msra.mxu0 %v751
        %4084 = vmatprep.subr.mxu0 %v748
        %4085 = vmatpush2.msra.mxu0 %v747
        %4086 = vmatprep.subr.mxu0 %v744
        %4087 = vmatpush2.msra.mxu0 %v743
        %4088 = vmatprep.subr.mxu0 %v740
        %4089 = vmatpush2.msra.mxu0 %v739
        %4090 = vmatprep.subr.mxu0 %v736
        %4091 = vmatpush2.msra.mxu0 %v735
        %4092 = vmatprep.subr.mxu0 %v732
        %4093 = vmatpush2.msra.mxu0 %v731
        %4094 = vmatprep.subr.mxu0 %v728
        %4095 = vmatpush2.msra.mxu0 %v727
        %4096 = vmatprep.subr.mxu0 %v724
        %4097 = vmatpush2.msra.mxu0 %v723
        %4098 = vmatprep.subr.mxu0 %v720
        %4099 = vmatpush2.msra.mxu0 %v719
        %4100 = vmatprep.subr.mxu0 %v716
        %4101 = vmatpush2.msra.mxu0 %v715
        %4102 = vmatprep.subr.mxu0 %v712
        %4103 = vmatpush2.msra.mxu0 %v711
        %4104 = vmatprep.mubr.f32.mxu0 %v3960
        %4105 = vmatmul.mubr.f32.gmra.mxu0 %v2730
        %v4106 = vpop.f32.mrf.mxu0
        %v4107 = vadd.f32 %v2743, %v4106
        %v4108 = vpop.f32.mrf.mxu0
        %v4109 = vadd.f32 %v2747, %v4108
        %4110 = vdwg.mxu0
        %v4111 = vxor.u32 %v4036, 2147483648
        %v4112 = vmul.f32 %v4111, 1.442695
        %v4113 = vpow.pop %v4112
        %v4114 = vadd.f32 %v4113, 1.0
        %v4115 = vrcp.pop %v4114
        %v4116 = vmul.f32 1.0, %v4115
        %v4117 = vxor.u32 %v4038, 2147483648
        %v4118 = vmul.f32 %v4117, 1.442695
        %v4119 = vpow.pop %v4118
        %v4120 = vadd.f32 %v4119, 1.0
        %v4121 = vrcp.pop %v4120
        %v4122 = vmul.f32 1.0, %v4121
        %v4123 = vtanh.pop %v4107
        %v4124 = vxor.u32 %v4109, 2147483648
        %v4125 = vmul.f32 %v4124, 1.442695
        %v4126 = vpow.pop %v4125
        %v4127 = vadd.f32 %v4126, 1.0
        %v4128 = vrcp.pop %v4127
        %v4129 = vmul.f32 1.0, %v4128
        %v4130 = vmul.f32 %v4122, %v3958
        %v4131 = vmul.f32 %v4116, %v4123
        %v4132 = vadd.f32 %v4130, %v4131
        %v4133 = vtanh.pop %v4132
        %v4134 = vmul.f32 %v4129, %v4133
        %v4135 = vxor.u32 %v4134, 2147483648
        %v4136 = vmul.f32 %v4135, 1.442695
        %v4137 = vpow.pop %v4136
        %v4138 = vadd.f32 %v4137, 1.0
        %v4139 = vrcp.pop %v4138
        %v4140 = vmul.f32 1.0, %v4139
        %s4141 = scalar_lea.vmem %s501, 56 [#allocation8]
        %4142 = vst [vmem:[%s4141] sm:$0xff] %v4140
        %s4143 = sand.u32 %s253, 1
        %s4144 = sand.u32 %s253, 1
        %s4145 = smul.addr %s4144, 64
        %s4146 = scalar_lea.vmem [#allocation8], %s4145
        %p4147 = scmp.lt.s32.totalorder %s25, 1
        %s4148 = scalar_select %p4147, %s25, 1
        %s4149 = smul.addr %s4148, 8
        %s4150 = scalar_lea.vmem %s11, %s4149
        // Predicated region
        $region111: #{recurrent_vae_forward.1} parent=93 // pred_check
          %p4151 = pneg %p263
        $region112: #{recurrent_vae_forward.1} parent=93 // pred_check_branch
          %4153 = sbr.rel (%p4151) target = $region114
        $region113: #{recurrent_vae_forward.1} parent=93 // pred_region
          %s4154 = smul.addr %s25, 8
          %s4155 = scalar_lea.vmem %s10, %s4154
          // Predicated region
          $region115: #{recurrent_vae_forward.1} parent=113 // pred_check
            _
          $region116: #{recurrent_vae_forward.1} parent=113 // pred_check_branch
            %4157 = sbr.rel (0) target = $region118
          $region117: #{recurrent_vae_forward.1} parent=113 // pred_region
            // Predicated region
            $region119: #{recurrent_vae_forward.1} parent=117 // pred_check
              _
            $region120: #{recurrent_vae_forward.1} parent=117 // pred_check_branch
              %4159 = sbr.rel (0) target = $region122
            $region121: #{recurrent_vae_forward.1} parent=117 // pred_region
              // Predicated region
              $region134: #{recurrent_vae_forward.1} parent=121 // pred_check
                _
              $region135: #{recurrent_vae_forward.1} parent=121 // pred_check_branch
                %4189 = sbr.rel (0) target = $region137
              $region136: #{recurrent_vae_forward.1} parent=121 // pred_region
                loop: start=0, step=1, limit=1
                $region138: #{recurrent_vae_forward.1} parent=136 // loop_pre_header
                  _
                $region139: #{recurrent_vae_forward.1} parent=136 // loop_header
                  %s4191 = sphi 0, %s4195
                  %p4192 = scmp.ge.s32.totalorder %s4191, 1
                  %s4196 = sphi %s4146, %s4146
                  %s4197 = sphi %s4155, %s4155
                $region140: #{recurrent_vae_forward.1} parent=136 // loop_header_branch
                  %4194 = sbr.rel (%p4192) target = $region144
                $region141: #{recurrent_vae_forward.1} parent=136 // loop_body
                  %v4198 = vld [vmem:[%s4196] sm:$0xff]
                  %4199 = vst [vmem:[%s4197] sm:$0xff] %v4198
                  %v4200 = vld [vmem:[%s4196 + $0x8] sm:$0xff]
                  %4201 = vst [vmem:[%s4197 + $0x10] sm:$0xff] %v4200
                  %v4202 = vld [vmem:[%s4196 + $0x10] sm:$0xff]
                  %4203 = vst [vmem:[%s4197 + $0x20] sm:$0xff] %v4202
                  %v4204 = vld [vmem:[%s4196 + $0x18] sm:$0xff]
                  %4205 = vst [vmem:[%s4197 + $0x30] sm:$0xff] %v4204
                  %v4206 = vld [vmem:[%s4196 + $0x20] sm:$0xff]
                  %4207 = vst [vmem:[%s4197 + $0x40] sm:$0xff] %v4206
                  %v4208 = vld [vmem:[%s4196 + $0x28] sm:$0xff]
                  %4209 = vst [vmem:[%s4197 + $0x50] sm:$0xff] %v4208
                  %v4210 = vld [vmem:[%s4196 + $0x30] sm:$0xff]
                  %4211 = vst [vmem:[%s4197 + $0x60] sm:$0xff] %v4210
                  %v4212 = vld [vmem:[%s4196 + $0x38] sm:$0xff]
                  %4213 = vst [vmem:[%s4197 + $0x70] sm:$0xff] %v4212
                $region142: #{recurrent_vae_forward.1} parent=136 // loop_footer
                  %s4195 = sadd.s32 1, %s4191
                $region143: #{recurrent_vae_forward.1} parent=136 // loop_footer_branch
                  %4190 = sbr.rel target = $region139
                $region144: #{recurrent_vae_forward.1} parent=136 // loop_exit
                  _
              $region137: #{recurrent_vae_forward.1} parent=121 // pred_fallthru
                _
              // Predicated region
              $region145: #{recurrent_vae_forward.1} parent=121 // pred_check
                _
              $region146: #{recurrent_vae_forward.1} parent=121 // pred_check_branch
                %4215 = sbr.rel target = $region148
              $region147: #{recurrent_vae_forward.1} parent=121 // pred_region
                _
              $region148: #{recurrent_vae_forward.1} parent=121 // pred_fallthru
                _
            $region122: #{recurrent_vae_forward.1} parent=117 // pred_fallthru
              _
            // Predicated region
            $region123: #{recurrent_vae_forward.1} parent=117 // pred_check
              _
            $region124: #{recurrent_vae_forward.1} parent=117 // pred_check_branch
              %4161 = sbr.rel target = $region126
            $region125: #{recurrent_vae_forward.1} parent=117 // pred_region
              %s4163 = ssub.s32 256, 1
              loop: start=0, step=1, limit=1
              $region127: #{recurrent_vae_forward.1} parent=125 // loop_pre_header
                _
              $region128: #{recurrent_vae_forward.1} parent=125 // loop_header
                %s4165 = sphi 0, %s4169
                %p4166 = scmp.ge.s32.totalorder %s4165, 1
                %s4170 = sphi %s4146, %s4146
                %s4171 = sphi %s4155, %s4155
              $region129: #{recurrent_vae_forward.1} parent=125 // loop_header_branch
                %4168 = sbr.rel (%p4166) target = $region133
              $region130: #{recurrent_vae_forward.1} parent=125 // loop_body
                %v4172 = vld [vmem:[%s4170] sm:%s4163]
                %4173 = vst [vmem:[%s4171] sm:%s4163] %v4172
                %v4174 = vld [vmem:[%s4170 + $0x8] sm:%s4163]
                %4175 = vst [vmem:[%s4171 + $0x10] sm:%s4163] %v4174
                %v4176 = vld [vmem:[%s4170 + $0x10] sm:%s4163]
                %4177 = vst [vmem:[%s4171 + $0x20] sm:%s4163] %v4176
                %v4178 = vld [vmem:[%s4170 + $0x18] sm:%s4163]
                %4179 = vst [vmem:[%s4171 + $0x30] sm:%s4163] %v4178
                %v4180 = vld [vmem:[%s4170 + $0x20] sm:%s4163]
                %4181 = vst [vmem:[%s4171 + $0x40] sm:%s4163] %v4180
                %v4182 = vld [vmem:[%s4170 + $0x28] sm:%s4163]
                %4183 = vst [vmem:[%s4171 + $0x50] sm:%s4163] %v4182
                %v4184 = vld [vmem:[%s4170 + $0x30] sm:%s4163]
                %4185 = vst [vmem:[%s4171 + $0x60] sm:%s4163] %v4184
                %v4186 = vld [vmem:[%s4170 + $0x38] sm:%s4163]
                %4187 = vst [vmem:[%s4171 + $0x70] sm:%s4163] %v4186
              $region131: #{recurrent_vae_forward.1} parent=125 // loop_footer
                %s4169 = sadd.s32 1, %s4165
              $region132: #{recurrent_vae_forward.1} parent=125 // loop_footer_branch
                %4164 = sbr.rel target = $region128
              $region133: #{recurrent_vae_forward.1} parent=125 // loop_exit
                _
            $region126: #{recurrent_vae_forward.1} parent=117 // pred_fallthru
              _
          $region118: #{recurrent_vae_forward.1} parent=113 // pred_fallthru
            _
          %4216 = vnop
        $region114: #{recurrent_vae_forward.1} parent=93 // pred_fallthru
          _
        // Predicated region
        $region149: #{recurrent_vae_forward.1} parent=93 // pred_check
          %p4217 = pneg %p289
        $region150: #{recurrent_vae_forward.1} parent=93 // pred_check_branch
          %4219 = sbr.rel (%p4217) target = $region152
        $region151: #{recurrent_vae_forward.1} parent=93 // pred_region
          _
        $region152: #{recurrent_vae_forward.1} parent=93 // pred_fallthru
          _
      $region94: #{recurrent_vae_forward.1} parent=5 // pred_fallthru
        _
      %p4220 = scmp.le.s32.totalorder 2, %s20
      // Predicated region
      $region153: #{recurrent_vae_forward.1} parent=5 // pred_check
        %p4221 = pneg %p4220
      $region154: #{recurrent_vae_forward.1} parent=5 // pred_check_branch
        %4223 = sbr.rel (%p4221) target = $region156
      $region155: #{recurrent_vae_forward.1} parent=5 // pred_region
        %s4224 = ssub.s32 %s20, 2
        // Predicated region
        $region157: #{recurrent_vae_forward.1} parent=155 // pred_check
          %p4225 = pneg %p269
        $region158: #{recurrent_vae_forward.1} parent=155 // pred_check_branch
          %4227 = sbr.rel (%p4225) target = $region160
        $region159: #{recurrent_vae_forward.1} parent=155 // pred_region
          %s4228 = sand.u32 %s254, 1
          %s4229 = sand.u32 %s254, 1
          %s4230 = smul.addr %s4229, 64
          %s4231 = scalar_lea.vmem [#allocation8], %s4230
        $region160: #{recurrent_vae_forward.1} parent=155 // pred_fallthru
          _
        // Predicated region
        $region161: #{recurrent_vae_forward.1} parent=155 // pred_check
          %p4232 = pneg %p295
        $region162: #{recurrent_vae_forward.1} parent=155 // pred_check_branch
          %4234 = sbr.rel (%p4232) target = $region164
        $region163: #{recurrent_vae_forward.1} parent=155 // pred_region
          %p4235 = scmp.lt.s32.totalorder %s26, 1
          %s4236 = scalar_select %p4235, %s26, 1
          %s4237 = smul.addr %s4236, 8
          %s4238 = scalar_lea.vmem %s11, %s4237
        $region164: #{recurrent_vae_forward.1} parent=155 // pred_fallthru
          _
      $region156: #{recurrent_vae_forward.1} parent=5 // pred_fallthru
        _
    $region6: #{recurrent_vae_forward.1} parent=1 // loop_footer
      %s24 = sadd.s32 1, %s20
    $region7: #{recurrent_vae_forward.1} parent=1 // loop_footer_branch
      %19 = sbr.rel target = $region3
    $region8: #{recurrent_vae_forward.1} parent=1 // loop_exit
      _
    %4239 = vsyncpa [#allocation4], 1
    %s4240 = scalar_lea.sflag [#allocation4], 1
    %4241 = vsyncpa %s4240, 1
    %4242 = vsyncpa [#allocation6], 1

</llo_original>
